<compile_context>
chip_gen: v7x
topology: tpu7x:2x2x1
jax: 0.10.0
libtpu: 0.0.40
codegen_flags: <defaults>
</compile_context>

<pallas_src>
import numpy as np
import jax
import jax.numpy as jnp
from jax.experimental import pallas as pl
from jax.experimental.pallas import tpu as pltpu

# ----------------------------- hyperparameters (PseTae defaults) --------------
INPUT_DIM = 10
MLP1 = [10, 32, 64]
MLP2 = [132, 128]
EXTRA_SIZE = 4
N_HEAD = 4
D_K = 32
D_MODEL = MLP2[-1]          # d_model=None -> in_channels = 128
MLP3 = [512, 128, 128]
MLP4 = [128, 64, 32, 20]
T_PERIOD = 1000
LEN_MAX_SEQ = 24
N_CLASSES = MLP4[-1]
LN_EPS = 1e-5
LANE = 128                  # every feature axis is zero-padded to 128 lanes

# ----------------------------- example shapes ---------------------------------
BATCH = 2       # batch size
SEQ = 8         # sequence length (<= LEN_MAX_SEQ)
N_PIX = 16      # number of pixels in the pixel set
N_FOLDS = 2     # number of "pretrained" fold instances to average

# --------------------- weight-slab slot / bias-slab row indices ----------------
W_MLP1_0, W_MLP1_1 = 0, 1
W_MLP2_MEAN, W_MLP2_STD, W_MLP2_EXTRA = 2, 3, 4
W_FC1Q, W_FC2, W_FC1K = 5, 6, 7
W_POOL = 8                      # per-head lane-pooling matrix (constant)
W_MLP3_0 = 9                    # 4 consecutive slots (row-split per head)
W_MLP3_1 = 13
W_MLP4_0, W_MLP4_1, W_MLP4_2 = 14, 15, 16
N_W_SLOTS = 17

B_MLP1_0, B_MLP1_1, B_MLP2 = 0, 1, 2
B_FC1Q, B_FC2, B_FC1K = 3, 4, 5
B_MLP3_0, B_MLP3_1 = 6, 7
B_LN_G, B_LN_B = 8, 9
B_MLP4_0, B_MLP4_1, B_MLP4_2 = 10, 11, 12
N_B_ROWS = 16


# ----------------------------- Pallas kernel ----------------------------------
def psetae_fold_kernel(xf_ref, extra_ref, pe_ref, pm_ref, exp_ref, inv_ref,
                       w_ref, b_ref, out_ref):
    """One grid step == full PseTae forward for one fold (eval mode).
    xf_ref  : (B*T*S, 128) bf16  pixel features, channel-last, zero-padded
    extra_ref: (B*T, 128)  bf16  extra features, zero-padded
    pe_ref  : (T, 128)     f32   sinusoid positional encodings
    pm_ref  : (B*T, B*T*S) bf16  mask-weighted pixel-pooling matrix
    exp_ref : (B*T*S, B*T) bf16  block indicator (mean broadcast) matrix
    inv_ref : (2, B*T, 128) f32  [0]=1/cnt, [1]=1/(n-1), lane-broadcast
    w_ref   : (17, 128, 128) bf16 packed weight slab of this fold
    b_ref   : (16, 128)    f32   packed bias / LN-affine slab of this fold
    out_ref : (B, 128)     f32   per-fold log_softmax (classes in lanes 0..19)
    """
    f32, bf16 = jnp.float32, jnp.bfloat16
    T = pe_ref.shape[0]
    BT = extra_ref.shape[0]
    B = BT // T

    def mm(a_bf, slot):
        return jnp.dot(a_bf, w_ref[slot], preferred_element_type=f32)

    # ---------------- PixelSetEncoder: mlp1 (Linear+BN+ReLU x2, BN folded) ----
    h = jnp.maximum(mm(xf_ref[...], W_MLP1_0) + b_ref[B_MLP1_0], 0.0)
    h = jnp.maximum(mm(h.astype(bf16), W_MLP1_1) + b_ref[B_MLP1_1], 0.0)  # (BTS,128)
    h_bf = h.astype(bf16)

    # ---------------- masked mean / std pooling as MXU matmuls ----------------
    sum_h = jnp.dot(pm_ref[...], h_bf, preferred_element_type=f32)        # (BT,128)
    mean = sum_h * inv_ref[0]                                             # masked mean
    mean_bf = mean.astype(bf16)
    mean_exp = jnp.dot(exp_ref[...], mean_bf, preferred_element_type=f32)  # (BTS,128)
    cen = (h - mean_exp).astype(bf16)
    var = jnp.dot(pm_ref[...], cen * cen, preferred_element_type=f32) * inv_ref[1]
    std = jnp.sqrt(var + 1e-31)                                           # torch: sqrt(.+10e-32)

    # ---------------- mlp2 (Linear + BN folded), concat -> row-split weights --
    e = (mm(mean_bf, W_MLP2_MEAN) + mm(std.astype(bf16), W_MLP2_STD)
         + mm(extra_ref[...], W_MLP2_EXTRA) + b_ref[B_MLP2])              # (BT,128)

    # ---------------- TemporalAttentionEncoder --------------------------------
    eb = e.reshape(B, T, LANE) + pe_ref[...]                              # (B,T,128) f32
    ef_bf = eb.reshape(BT, LANE).astype(bf16)
    eb_bf = eb.astype(bf16)

    # master query: mean over time first (mean o linear == linear o mean),
    # then fc1_q, then fc2 (its leading BN folded into the linear)
    e_mean = jnp.mean(eb, axis=1)                                         # (B,128)
    q1 = mm(e_mean.astype(bf16), W_FC1Q) + b_ref[B_FC1Q]
    q2 = mm(q1.astype(bf16), W_FC2) + b_ref[B_FC2]                        # (B,128)

    # keys (1/sqrt(d_k) already folded into W/b); all-head scores via the
    # constant per-head lane-pooling matrix stored in the weight slab
    k = mm(ef_bf, W_FC1K) + b_ref[B_FC1K]                                 # (BT,128)
    prod = (q2[:, None, :] * k.reshape(B, T, LANE)).reshape(BT, LANE)
    sc = mm(prod.astype(bf16), W_POOL).reshape(B, T, LANE)[:, :, :N_HEAD]  # (B,T,H)

    # softmax over time (all heads at once)
    sc = sc - jnp.max(sc, axis=1, keepdims=True)
    a = jnp.exp(sc)
    a = a * pl.reciprocal(jnp.sum(a, axis=1, keepdims=True), approx=True)  # (B,T,H)

    # value aggregation: one batched MXU contraction, heads kept separate
    at_bf = jnp.swapaxes(a, 1, 2).astype(bf16)                            # (B,H,T)
    o = jnp.einsum('bht,btd->bhd', at_bf, eb_bf,
                   preferred_element_type=f32)                            # (B,H,128)

    # mlp3 layer 0 row-split per head -> no (B,512) lane concat
    g = b_ref[B_MLP3_0]
    for hh in range(N_HEAD):
        g = g + mm(o[:, hh, :].astype(bf16), W_MLP3_0 + hh)
    g = jnp.maximum(g, 0.0)
    g = jnp.maximum(mm(g.astype(bf16), W_MLP3_1) + b_ref[B_MLP3_1], 0.0)

    # dropout(eval)=identity, then LayerNorm over the 128 real features
    mu = jnp.mean(g, axis=1, keepdims=True)
    vv = jnp.mean((g - mu) ** 2, axis=1, keepdims=True)
    g = (g - mu) * jax.lax.rsqrt(vv + LN_EPS) * b_ref[B_LN_G] + b_ref[B_LN_B]

    # ---------------- decoder (mlp4) -------------------------------------------
    z = jnp.maximum(mm(g.astype(bf16), W_MLP4_0) + b_ref[B_MLP4_0], 0.0)
    z = jnp.maximum(mm(z.astype(bf16), W_MLP4_1) + b_ref[B_MLP4_1], 0.0)
    logits = mm(z.astype(bf16), W_MLP4_2) + b_ref[B_MLP4_2]               # (B,128), pad lanes = -1e9

    # per-fold log_softmax; fold mean happens in the XLA wrapper
    mx = jnp.max(logits, axis=-1, keepdims=True)
    lse = jnp.log(jnp.sum(jnp.exp(logits - mx), axis=-1, keepdims=True)) + mx
    out_ref[...] = logits - lse


# ----------------------------- wrapper -----------------------------------------
def psetae_pretrained_forward(pixels, mask, extra, pe, w_slab, b_slab):
    """pixels (B,T,C,S), mask (B,T,S), extra (B,T,E), pe (T,128);
    w_slab (n_folds,17,128,128) bf16, b_slab (n_folds,16,128) f32.
    Returns (B, N_CLASSES) fold-averaged log-probabilities."""
    B, T, C, S = pixels.shape
    BT, BTS = B * T, B * T * S
    n_folds = w_slab.shape[0]

    # PyTorch channel-first -> flat channel-last, zero-padded to 128 lanes (bf16)
    x = jnp.transpose(pixels, (0, 1, 3, 2)).reshape(BTS, C)
    xf = jnp.pad(x, ((0, 0), (0, LANE - C))).astype(jnp.bfloat16)
    ex_flat = extra.reshape(BT, -1)
    ex = jnp.pad(ex_flat, ((0, 0), (0, LANE - ex_flat.shape[1]))).astype(jnp.bfloat16)

    # masked pixel pooling expressed as matrices (built once, fold-invariant)
    m = mask.reshape(BT, S).astype(jnp.float32)
    blk = jnp.repeat(jnp.eye(BT, dtype=jnp.float32), S, axis=0)     # (BTS,BT) block indicator
    expand = blk.astype(jnp.bfloat16)                               # mean-broadcast matrix
    pool_m = (blk * m.reshape(BTS, 1)).T.astype(jnp.bfloat16)       # (BT,BTS) masked pooling

    cnt = jnp.sum(m, axis=1)
    d = jnp.where(cnt <= 1.0, 2.0, cnt)                             # torch: d[d==1]=2 (+ cnt==0 guard)
    inv_cnt = 1.0 / jnp.maximum(cnt, 1.0)
    inv_nm1 = 1.0 / (d - 1.0)
    inv_pool = jnp.stack(
        [jnp.broadcast_to(inv_cnt[:, None], (BT, LANE)),
         jnp.broadcast_to(inv_nm1[:, None], (BT, LANE))], axis=0)   # (2,BT,128) f32

    def const_spec(a):        # same full block for every fold
        nd = a.ndim
        return pl.BlockSpec(tuple(a.shape), lambda f, nd=nd: (0,) * nd)

    def fold_spec(a):         # leading fold axis indexed by the grid, squeezed in-kernel
        nd = a.ndim
        return pl.BlockSpec((None,) + tuple(a.shape[1:]),
                            lambda f, nd=nd: (f,) + (0,) * (nd - 1))

    data = [xf, ex, pe, pool_m, expand, inv_pool]
    in_specs = [const_spec(a) for a in data] + [fold_spec(w_slab), fold_spec(b_slab)]
    out_spec = pl.BlockSpec((None, B, LANE), lambda f: (f, 0, 0))

    per_fold_logp = pl.pallas_call(
        psetae_fold_kernel,
        grid=(n_folds,),
        in_specs=in_specs,
        out_specs=out_spec,
        out_shape=jax.ShapeDtypeStruct((n_folds, B, LANE), jnp.float32),
        compiler_params=pltpu.CompilerParams(
            # folds are independent now (per-fold output slab) -> v7x 2nd TC
            dimension_semantics=("parallel",),
        ),
    )(*data, w_slab, b_slab)

    # tiny XLA epilogue: drop class padding, average log_softmax over folds
    return jnp.mean(per_fold_logp[:, :, :N_CLASSES], axis=0)


# ----------------------------- parameter / table construction ------------------
def sinusoid_table(n_pos, d_hid, T=1000):
    pos = np.arange(n_pos, dtype=np.float64)[:, None]
    idx = np.arange(d_hid)[None, :]
    tab = pos / np.power(float(T), 2.0 * (idx // 2) / d_hid)
    tab[:, 0::2] = np.sin(tab[:, 0::2])
    tab[:, 1::2] = np.cos(tab[:, 1::2])
    return jnp.asarray(tab, dtype=jnp.float32)


def _pad_w(w):
    out = jnp.zeros((LANE, LANE), jnp.float32)
    return out.at[:w.shape[0], :w.shape[1]].set(w)


def _pad_b(b, fill=0.0):
    out = jnp.full((LANE,), fill, jnp.float32)
    return out.at[:b.shape[0]].set(b)


def init_fold_slabs(key):
    """Synthetic weights for one fold (eval-mode BNs folded into the adjacent
    Linears), packed into one bf16 weight slab and one f32 bias/affine slab."""
    ks = iter(jax.random.split(key, 64))

    def lin(i, o):
        w = jax.random.normal(next(ks), (i, o), jnp.float32) * (1.0 / np.sqrt(i))
        b = 0.01 * jax.random.normal(next(ks), (o,), jnp.float32)
        return w, b

    def bn(o):
        s = 1.0 + 0.1 * jax.random.normal(next(ks), (o,), jnp.float32)
        sh = 0.01 * jax.random.normal(next(ks), (o,), jnp.float32)
        return s, sh

    def fold_post_bn(w, b, s, sh):
        # Linear then eval-mode BN: (x@w + b)*s + sh == x@(w*s) + (b*s + sh)
        return w * s[None, :], b * s + sh

    W = [None] * N_W_SLOTS
    Bv = [jnp.zeros((LANE,), jnp.float32)] * N_B_ROWS

    # PSE mlp1: (Linear + BN + ReLU) x2
    w, b = lin(MLP1[0], MLP1[1]); w, b = fold_post_bn(w, b, *bn(MLP1[1]))
    W[W_MLP1_0], Bv[B_MLP1_0] = _pad_w(w), _pad_b(b)
    w, b = lin(MLP1[1], MLP1[2]); w, b = fold_post_bn(w, b, *bn(MLP1[2]))
    W[W_MLP1_1], Bv[B_MLP1_1] = _pad_w(w), _pad_b(b)

    # PSE mlp2: Linear + BN; rows split over [mean | std | extra]
    w, b = lin(MLP2[0], MLP2[1]); w, b = fold_post_bn(w, b, *bn(MLP2[1]))
    h1 = MLP1[-1]
    W[W_MLP2_MEAN] = _pad_w(w[:h1])
    W[W_MLP2_STD] = _pad_w(w[h1:2 * h1])
    W[W_MLP2_EXTRA] = _pad_w(w[2 * h1:])
    Bv[B_MLP2] = _pad_b(b)

    # TAE fc1_q
    w, b = lin(D_MODEL, N_HEAD * D_K)
    W[W_FC1Q], Bv[B_FC1Q] = _pad_w(w), _pad_b(b)
    # TAE fc2 = Sequential(BN, Linear): BN folded into the Linear's input rows
    s, sh = bn(N_HEAD * D_K)
    w, b = lin(N_HEAD * D_K, N_HEAD * D_K)
    W[W_FC2], Bv[B_FC2] = _pad_w(w * s[:, None]), _pad_b(sh @ w + b)
    # TAE fc1_k with the 1/sqrt(d_k) attention scale folded in
    w, b = lin(D_MODEL, N_HEAD * D_K)
    scale = 1.0 / np.sqrt(D_K)
    W[W_FC1K], Bv[B_FC1K] = _pad_w(w * scale), _pad_b(b * scale)

    # constant per-head lane-pooling matrix (head h sums lanes h*D_K:(h+1)*D_K)
    d_id = np.arange(N_HEAD * D_K)[:, None]
    h_id = np.arange(N_HEAD)[None, :]
    W[W_POOL] = _pad_w(jnp.asarray((d_id // D_K == h_id).astype(np.float32)))

    # TAE mlp3: (Linear + BN + ReLU) x2; first weight row-split per head
    w, b = lin(MLP3[0], MLP3[1]); w, b = fold_post_bn(w, b, *bn(MLP3[1]))
    for hh in range(N_HEAD):
        W[W_MLP3_0 + hh] = _pad_w(w[hh * D_MODEL:(hh + 1) * D_MODEL])
    Bv[B_MLP3_0] = _pad_b(b)
    w, b = lin(MLP3[1], MLP3[2]); w, b = fold_post_bn(w, b, *bn(MLP3[2]))
    W[W_MLP3_1], Bv[B_MLP3_1] = _pad_w(w), _pad_b(b)

    # output LayerNorm affine
    Bv[B_LN_G] = _pad_b(1.0 + 0.1 * jax.random.normal(next(ks), (D_MODEL,), jnp.float32))
    Bv[B_LN_B] = _pad_b(0.01 * jax.random.normal(next(ks), (D_MODEL,), jnp.float32))

    # decoder mlp4: (Linear + BN + ReLU) x2 + final Linear
    w, b = lin(MLP4[0], MLP4[1]); w, b = fold_post_bn(w, b, *bn(MLP4[1]))
    W[W_MLP4_0], Bv[B_MLP4_0] = _pad_w(w), _pad_b(b)
    w, b = lin(MLP4[1], MLP4[2]); w, b = fold_post_bn(w, b, *bn(MLP4[2]))
    W[W_MLP4_1], Bv[B_MLP4_1] = _pad_w(w), _pad_b(b)
    w, b = lin(MLP4[2], MLP4[3])
    # pad lanes of the final bias with -1e9 so they never affect log_softmax
    W[W_MLP4_2], Bv[B_MLP4_2] = _pad_w(w), _pad_b(b, fill=-1e9)

    w_slab = jnp.stack(W, axis=0).astype(jnp.bfloat16)      # (17,128,128) bf16
    b_slab = jnp.stack(Bv, axis=0)                           # (16,128)     f32
    return w_slab, b_slab


# ----------------------------- main ---------------------------------------------
if __name__ == "__main__":
    key = jax.random.PRNGKey(0)
    kpix, kmask, kextra, kfold = jax.random.split(key, 4)

    # Pixel-Set: (B, T, C, S), Pixel-Mask: (B, T, S), Extra: (B, T, E)
    pixels = jax.random.normal(kpix, (BATCH, SEQ, INPUT_DIM, N_PIX), jnp.float32)
    mask = (jax.random.uniform(kmask, (BATCH, SEQ, N_PIX)) < 0.7).astype(jnp.float32)
    mask = mask.at[:, :, 0].set(1.0)   # ensure >= 1 valid pixel per (b, t)
    extra = jax.random.normal(kextra, (BATCH, SEQ, EXTRA_SIZE), jnp.float32)

    # positional encodings: positions=None -> indices 1..SEQ of the sinusoid table
    table = sinusoid_table(LEN_MAX_SEQ + 1, D_MODEL, T_PERIOD)
    pe = table[1:SEQ + 1]

    # one PseTae instance per "fold", packed slabs stacked on a leading fold axis
    fold_keys = jax.random.split(kfold, N_FOLDS)
    slabs = [init_fold_slabs(fk) for fk in fold_keys]
    w_slab = jnp.stack([s[0] for s in slabs], axis=0)        # (F,17,128,128) bf16
    b_slab = jnp.stack([s[1] for s in slabs], axis=0)        # (F,16,128)     f32

    out = psetae_pretrained_forward(pixels, mask, extra, pe, w_slab, b_slab)
    out = jax.block_until_ready(out)

    assert out.shape == (BATCH, N_CLASSES)
    assert bool(jnp.all(jnp.isfinite(out)))
    # TODO(synk): loading the real pretrained fold checkpoints (torch.load of
    # model.pth.tar) has no Pallas equivalent; weights here are synthetic but the
    # eval-mode forward math matches the PyTorch module.
    print("KERNEL_OK")
</pallas_src>

<mosaic_0001>
module attributes {stable_mosaic.version = 11 : i64} {
  func.func @psetae_fold_kernel(%arg0: i32, %arg1: memref<256x128xbf16, #tpu.memory_space<vmem>>, %arg2: memref<16x128xbf16, #tpu.memory_space<vmem>>, %arg3: memref<8x128xf32, #tpu.memory_space<vmem>>, %arg4: memref<16x256xbf16, #tpu.memory_space<vmem>>, %arg5: memref<256x16xbf16, #tpu.memory_space<vmem>>, %arg6: memref<2x16x128xf32, #tpu.memory_space<vmem>>, %arg7: memref<1x17x128x128xbf16, #tpu.memory_space<vmem>>, %arg8: memref<1x16x128xf32, #tpu.memory_space<vmem>>, %arg9: memref<1x2x128xf32, #tpu.memory_space<vmem>>) attributes {dimension_semantics = [#tpu.dimension_semantics<parallel>], iteration_bounds = array<i64: 2>, scalar_prefetch = 0 : i64, scratch_operands = 0 : i64, tpu.core_type = #tpu.core_type<tc>, window_params = [{pipeline_mode = #tpu.pipeline_mode<synchronous>, transform_indices = @transform_0, window_bounds = array<i64: 256, 128>}, {pipeline_mode = #tpu.pipeline_mode<synchronous>, transform_indices = @transform_1, window_bounds = array<i64: 16, 128>}, {pipeline_mode = #tpu.pipeline_mode<synchronous>, transform_indices = @transform_2, window_bounds = array<i64: 8, 128>}, {pipeline_mode = #tpu.pipeline_mode<synchronous>, transform_indices = @transform_3, window_bounds = array<i64: 16, 256>}, {pipeline_mode = #tpu.pipeline_mode<synchronous>, transform_indices = @transform_4, window_bounds = array<i64: 256, 16>}, {pipeline_mode = #tpu.pipeline_mode<synchronous>, transform_indices = @transform_5, window_bounds = array<i64: 2, 16, 128>}, {transform_indices = @transform_6, window_bounds = array<i64: 1, 17, 128, 128>}, {transform_indices = @transform_7, window_bounds = array<i64: 1, 16, 128>}, {transform_indices = @transform_8, window_bounds = array<i64: 1, 2, 128>}]} {
    %c0 = arith.constant 0 : index
    %c0_0 = arith.constant 0 : index
    %0 = vector.load %arg1[%c0, %c0_0] : memref<256x128xbf16, #tpu.memory_space<vmem>>, vector<256x128xbf16>
    %c0_1 = arith.constant 0 : index
    %c0_2 = arith.constant 0 : index
    %c0_3 = arith.constant 0 : index
    %c0_4 = arith.constant 0 : index
    %1 = vector.load %arg7[%c0_1, %c0_2, %c0_3, %c0_4] : memref<1x17x128x128xbf16, #tpu.memory_space<vmem>>, vector<1x1x128x128xbf16>
    %2 = vector.shape_cast %1 : vector<1x1x128x128xbf16> to vector<128x128xbf16>
    %cst = arith.constant dense<0.000000e+00> : vector<256x128xf32>
    %3 = tpu.matmul %0, %2, %cst {dimension_numbers = #tpu.dot_dimension_numbers<[1], [0], [0], [1], [0, 0, 1, 1], [], []>} : vector<256x128xbf16>, vector<128x128xbf16>, vector<256x128xf32> -> vector<256x128xf32>
    %c0_5 = arith.constant 0 : index
    %c0_6 = arith.constant 0 : index
    %c0_7 = arith.constant 0 : index
    %4 = vector.load %arg8[%c0_5, %c0_6, %c0_7] : memref<1x16x128xf32, #tpu.memory_space<vmem>>, vector<1x1x128xf32>
    %5 = vector.shape_cast %4 : vector<1x1x128xf32> to vector<128xf32>
    %6 = vector.shape_cast %5 : vector<128xf32> to vector<1x128xf32>
    %7 = vector.broadcast %6 : vector<1x128xf32> to vector<256x128xf32>
    %8 = arith.addf %3, %7 : vector<256x128xf32>
    %cst_8 = arith.constant 0.000000e+00 : f32
    %9 = vector.broadcast %cst_8 : f32 to vector<256x128xf32>
    %10 = arith.maximumf %8, %9 : vector<256x128xf32>
    %11 = arith.truncf %10 : vector<256x128xf32> to vector<256x128xbf16>
    %c0_9 = arith.constant 0 : index
    %c1 = arith.constant 1 : index
    %c0_10 = arith.constant 0 : index
    %c0_11 = arith.constant 0 : index
    %12 = vector.load %arg7[%c0_9, %c1, %c0_10, %c0_11] : memref<1x17x128x128xbf16, #tpu.memory_space<vmem>>, vector<1x1x128x128xbf16>
    %13 = vector.shape_cast %12 : vector<1x1x128x128xbf16> to vector<128x128xbf16>
    %cst_12 = arith.constant dense<0.000000e+00> : vector<256x128xf32>
    %14 = tpu.matmul %11, %13, %cst_12 {dimension_numbers = #tpu.dot_dimension_numbers<[1], [0], [0], [1], [0, 0, 1, 1], [], []>} : vector<256x128xbf16>, vector<128x128xbf16>, vector<256x128xf32> -> vector<256x128xf32>
    %c0_13 = arith.constant 0 : index
    %c1_14 = arith.constant 1 : index
    %c0_15 = arith.constant 0 : index
    %15 = vector.load %arg8[%c0_13, %c1_14, %c0_15] : memref<1x16x128xf32, #tpu.memory_space<vmem>>, vector<1x1x128xf32>
    %16 = vector.shape_cast %15 : vector<1x1x128xf32> to vector<128xf32>
    %17 = vector.shape_cast %16 : vector<128xf32> to vector<1x128xf32>
    %18 = vector.broadcast %17 : vector<1x128xf32> to vector<256x128xf32>
    %19 = arith.addf %14, %18 : vector<256x128xf32>
    %cst_16 = arith.constant 0.000000e+00 : f32
    %20 = vector.broadcast %cst_16 : f32 to vector<256x128xf32>
    %21 = arith.maximumf %19, %20 : vector<256x128xf32>
    %22 = arith.truncf %21 : vector<256x128xf32> to vector<256x128xbf16>
    %c0_17 = arith.constant 0 : index
    %c0_18 = arith.constant 0 : index
    %23 = vector.load %arg4[%c0_17, %c0_18] : memref<16x256xbf16, #tpu.memory_space<vmem>>, vector<16x256xbf16>
    %cst_19 = arith.constant dense<0.000000e+00> : vector<16x128xf32>
    %24 = tpu.matmul %23, %22, %cst_19 {dimension_numbers = #tpu.dot_dimension_numbers<[1], [0], [0], [1], [0, 0, 1, 1], [], []>} : vector<16x256xbf16>, vector<256x128xbf16>, vector<16x128xf32> -> vector<16x128xf32>
    %c0_20 = arith.constant 0 : index
    %c0_21 = arith.constant 0 : index
    %c0_22 = arith.constant 0 : index
    %25 = vector.load %arg6[%c0_20, %c0_21, %c0_22] : memref<2x16x128xf32, #tpu.memory_space<vmem>>, vector<1x16x128xf32>
    %26 = vector.shape_cast %25 : vector<1x16x128xf32> to vector<16x128xf32>
    %27 = arith.mulf %24, %26 : vector<16x128xf32>
    %28 = arith.truncf %27 : vector<16x128xf32> to vector<16x128xbf16>
    %c0_23 = arith.constant 0 : index
    %c0_24 = arith.constant 0 : index
    %29 = vector.load %arg5[%c0_23, %c0_24] : memref<256x16xbf16, #tpu.memory_space<vmem>>, vector<256x16xbf16>
    %cst_25 = arith.constant dense<0.000000e+00> : vector<256x128xf32>
    %30 = tpu.matmul %29, %28, %cst_25 {dimension_numbers = #tpu.dot_dimension_numbers<[1], [0], [0], [1], [0, 0, 1, 1], [], []>} : vector<256x16xbf16>, vector<16x128xbf16>, vector<256x128xf32> -> vector<256x128xf32>
    %31 = arith.subf %21, %30 : vector<256x128xf32>
    %32 = arith.truncf %31 : vector<256x128xf32> to vector<256x128xbf16>
    %c0_26 = arith.constant 0 : index
    %c0_27 = arith.constant 0 : index
    %33 = vector.load %arg4[%c0_26, %c0_27] : memref<16x256xbf16, #tpu.memory_space<vmem>>, vector<16x256xbf16>
    %34 = arith.mulf %32, %32 : vector<256x128xbf16>
    %cst_28 = arith.constant dense<0.000000e+00> : vector<16x128xf32>
    %35 = tpu.matmul %33, %34, %cst_28 {dimension_numbers = #tpu.dot_dimension_numbers<[1], [0], [0], [1], [0, 0, 1, 1], [], []>} : vector<16x256xbf16>, vector<256x128xbf16>, vector<16x128xf32> -> vector<16x128xf32>
    %c1_29 = arith.constant 1 : index
    %c0_30 = arith.constant 0 : index
    %c0_31 = arith.constant 0 : index
    %36 = vector.load %arg6[%c1_29, %c0_30, %c0_31] : memref<2x16x128xf32, #tpu.memory_space<vmem>>, vector<1x16x128xf32>
    %37 = vector.shape_cast %36 : vector<1x16x128xf32> to vector<16x128xf32>
    %38 = arith.mulf %35, %37 : vector<16x128xf32>
    %cst_32 = arith.constant 9.99999979E-32 : f32
    %39 = vector.broadcast %cst_32 : f32 to vector<16x128xf32>
    %40 = arith.addf %38, %39 : vector<16x128xf32>
    %41 = math.sqrt %40 : vector<16x128xf32>
    %c0_33 = arith.constant 0 : index
    %c2 = arith.constant 2 : index
    %c0_34 = arith.constant 0 : index
    %c0_35 = arith.constant 0 : index
    %42 = vector.load %arg7[%c0_33, %c2, %c0_34, %c0_35] : memref<1x17x128x128xbf16, #tpu.memory_space<vmem>>, vector<1x1x128x128xbf16>
    %43 = vector.shape_cast %42 : vector<1x1x128x128xbf16> to vector<128x128xbf16>
    %cst_36 = arith.constant dense<0.000000e+00> : vector<16x128xf32>
    %44 = tpu.matmul %28, %43, %cst_36 {dimension_numbers = #tpu.dot_dimension_numbers<[1], [0], [0], [1], [0, 0, 1, 1], [], []>} : vector<16x128xbf16>, vector<128x128xbf16>, vector<16x128xf32> -> vector<16x128xf32>
    %45 = arith.truncf %41 : vector<16x128xf32> to vector<16x128xbf16>
    %c0_37 = arith.constant 0 : index
    %c3 = arith.constant 3 : index
    %c0_38 = arith.constant 0 : index
    %c0_39 = arith.constant 0 : index
    %46 = vector.load %arg7[%c0_37, %c3, %c0_38, %c0_39] : memref<1x17x128x128xbf16, #tpu.memory_space<vmem>>, vector<1x1x128x128xbf16>
    %47 = vector.shape_cast %46 : vector<1x1x128x128xbf16> to vector<128x128xbf16>
    %cst_40 = arith.constant dense<0.000000e+00> : vector<16x128xf32>
    %48 = tpu.matmul %45, %47, %cst_40 {dimension_numbers = #tpu.dot_dimension_numbers<[1], [0], [0], [1], [0, 0, 1, 1], [], []>} : vector<16x128xbf16>, vector<128x128xbf16>, vector<16x128xf32> -> vector<16x128xf32>
    %49 = arith.addf %44, %48 : vector<16x128xf32>
    %c0_41 = arith.constant 0 : index
    %c0_42 = arith.constant 0 : index
    %50 = vector.load %arg2[%c0_41, %c0_42] : memref<16x128xbf16, #tpu.memory_space<vmem>>, vector<16x128xbf16>
    %c0_43 = arith.constant 0 : index
    %c4 = arith.constant 4 : index
    %c0_44 = arith.constant 0 : index
    %c0_45 = arith.constant 0 : index
    %51 = vector.load %arg7[%c0_43, %c4, %c0_44, %c0_45] : memref<1x17x128x128xbf16, #tpu.memory_space<vmem>>, vector<1x1x128x128xbf16>
    %52 = vector.shape_cast %51 : vector<1x1x128x128xbf16> to vector<128x128xbf16>
    %cst_46 = arith.constant dense<0.000000e+00> : vector<16x128xf32>
    %53 = tpu.matmul %50, %52, %cst_46 {dimension_numbers = #tpu.dot_dimension_numbers<[1], [0], [0], [1], [0, 0, 1, 1], [], []>} : vector<16x128xbf16>, vector<128x128xbf16>, vector<16x128xf32> -> vector<16x128xf32>
    %54 = arith.addf %49, %53 : vector<16x128xf32>
    %c0_47 = arith.constant 0 : index
    %c2_48 = arith.constant 2 : index
    %c0_49 = arith.constant 0 : index
    %55 = vector.load %arg8[%c0_47, %c2_48, %c0_49] : memref<1x16x128xf32, #tpu.memory_space<vmem>>, vector<1x1x128xf32>
    %56 = vector.shape_cast %55 : vector<1x1x128xf32> to vector<128xf32>
    %57 = vector.shape_cast %56 : vector<128xf32> to vector<1x128xf32>
    %58 = vector.broadcast %57 : vector<1x128xf32> to vector<16x128xf32>
    %59 = arith.addf %54, %58 : vector<16x128xf32>
    %60 = vector.shape_cast %59 : vector<16x128xf32> to vector<2x8x128xf32>
    %c0_50 = arith.constant 0 : index
    %c0_51 = arith.constant 0 : index
    %61 = vector.load %arg3[%c0_50, %c0_51] : memref<8x128xf32, #tpu.memory_space<vmem>>, vector<8x128xf32>
    %62 = vector.shape_cast %61 : vector<8x128xf32> to vector<1x8x128xf32>
    %63 = vector.broadcast %62 : vector<1x8x128xf32> to vector<2x8x128xf32>
    %64 = arith.addf %60, %63 : vector<2x8x128xf32>
    %65 = vector.shape_cast %64 : vector<2x8x128xf32> to vector<16x128xf32>
    %66 = arith.truncf %65 : vector<16x128xf32> to vector<16x128xbf16>
    %67 = arith.truncf %64 : vector<2x8x128xf32> to vector<2x8x128xbf16>
    %cst_52 = arith.constant dense<0.000000e+00> : vector<2x128xf32>
    %68 = vector.multi_reduction <add>, %64, %cst_52 [1] : vector<2x8x128xf32> to vector<2x128xf32>
    %cst_53 = arith.constant 8.000000e+00 : f32
    %69 = vector.broadcast %cst_53 : f32 to vector<2x128xf32>
    %70 = arith.divf %68, %69 : vector<2x128xf32>
    %71 = arith.truncf %70 : vector<2x128xf32> to vector<2x128xbf16>
    %c0_54 = arith.constant 0 : index
    %c5 = arith.constant 5 : index
    %c0_55 = arith.constant 0 : index
    %c0_56 = arith.constant 0 : index
    %72 = vector.load %arg7[%c0_54, %c5, %c0_55, %c0_56] : memref<1x17x128x128xbf16, #tpu.memory_space<vmem>>, vector<1x1x128x128xbf16>
    %73 = vector.shape_cast %72 : vector<1x1x128x128xbf16> to vector<128x128xbf16>
    %cst_57 = arith.constant dense<0.000000e+00> : vector<2x128xf32>
    %74 = tpu.matmul %71, %73, %cst_57 {dimension_numbers = #tpu.dot_dimension_numbers<[1], [0], [0], [1], [0, 0, 1, 1], [], []>} : vector<2x128xbf16>, vector<128x128xbf16>, vector<2x128xf32> -> vector<2x128xf32>
    %c0_58 = arith.constant 0 : index
    %c3_59 = arith.constant 3 : index
    %c0_60 = arith.constant 0 : index
    %75 = vector.load %arg8[%c0_58, %c3_59, %c0_60] : memref<1x16x128xf32, #tpu.memory_space<vmem>>, vector<1x1x128xf32>
    %76 = vector.shape_cast %75 : vector<1x1x128xf32> to vector<128xf32>
    %77 = vector.shape_cast %76 : vector<128xf32> to vector<1x128xf32>
    %78 = vector.broadcast %77 : vector<1x128xf32> to vector<2x128xf32>
    %79 = arith.addf %74, %78 : vector<2x128xf32>
    %80 = arith.truncf %79 : vector<2x128xf32> to vector<2x128xbf16>
    %c0_61 = arith.constant 0 : index
    %c6 = arith.constant 6 : index
    %c0_62 = arith.constant 0 : index
    %c0_63 = arith.constant 0 : index
    %81 = vector.load %arg7[%c0_61, %c6, %c0_62, %c0_63] : memref<1x17x128x128xbf16, #tpu.memory_space<vmem>>, vector<1x1x128x128xbf16>
    %82 = vector.shape_cast %81 : vector<1x1x128x128xbf16> to vector<128x128xbf16>
    %cst_64 = arith.constant dense<0.000000e+00> : vector<2x128xf32>
    %83 = tpu.matmul %80, %82, %cst_64 {dimension_numbers = #tpu.dot_dimension_numbers<[1], [0], [0], [1], [0, 0, 1, 1], [], []>} : vector<2x128xbf16>, vector<128x128xbf16>, vector<2x128xf32> -> vector<2x128xf32>
    %c0_65 = arith.constant 0 : index
    %c4_66 = arith.constant 4 : index
    %c0_67 = arith.constant 0 : index
    %84 = vector.load %arg8[%c0_65, %c4_66, %c0_67] : memref<1x16x128xf32, #tpu.memory_space<vmem>>, vector<1x1x128xf32>
    %85 = vector.shape_cast %84 : vector<1x1x128xf32> to vector<128xf32>
    %86 = vector.shape_cast %85 : vector<128xf32> to vector<1x128xf32>
    %87 = vector.broadcast %86 : vector<1x128xf32> to vector<2x128xf32>
    %88 = arith.addf %83, %87 : vector<2x128xf32>
    %c0_68 = arith.constant 0 : index
    %c7 = arith.constant 7 : index
    %c0_69 = arith.constant 0 : index
    %c0_70 = arith.constant 0 : index
    %89 = vector.load %arg7[%c0_68, %c7, %c0_69, %c0_70] : memref<1x17x128x128xbf16, #tpu.memory_space<vmem>>, vector<1x1x128x128xbf16>
    %90 = vector.shape_cast %89 : vector<1x1x128x128xbf16> to vector<128x128xbf16>
    %cst_71 = arith.constant dense<0.000000e+00> : vector<16x128xf32>
    %91 = tpu.matmul %66, %90, %cst_71 {dimension_numbers = #tpu.dot_dimension_numbers<[1], [0], [0], [1], [0, 0, 1, 1], [], []>} : vector<16x128xbf16>, vector<128x128xbf16>, vector<16x128xf32> -> vector<16x128xf32>
    %c0_72 = arith.constant 0 : index
    %c5_73 = arith.constant 5 : index
    %c0_74 = arith.constant 0 : index
    %92 = vector.load %arg8[%c0_72, %c5_73, %c0_74] : memref<1x16x128xf32, #tpu.memory_space<vmem>>, vector<1x1x128xf32>
    %93 = vector.shape_cast %92 : vector<1x1x128xf32> to vector<128xf32>
    %94 = vector.shape_cast %93 : vector<128xf32> to vector<1x128xf32>
    %95 = vector.broadcast %94 : vector<1x128xf32> to vector<16x128xf32>
    %96 = arith.addf %91, %95 : vector<16x128xf32>
    %97 = vector.shape_cast %88 : vector<2x128xf32> to vector<2x1x128xf32>
    %98 = vector.shape_cast %96 : vector<16x128xf32> to vector<2x8x128xf32>
    %99 = vector.broadcast %97 : vector<2x1x128xf32> to vector<2x8x128xf32>
    %100 = arith.mulf %99, %98 : vector<2x8x128xf32>
    %101 = vector.shape_cast %100 : vector<2x8x128xf32> to vector<16x128xf32>
    %102 = arith.truncf %101 : vector<16x128xf32> to vector<16x128xbf16>
    %c0_75 = arith.constant 0 : index
    %c8 = arith.constant 8 : index
    %c0_76 = arith.constant 0 : index
    %c0_77 = arith.constant 0 : index
    %103 = vector.load %arg7[%c0_75, %c8, %c0_76, %c0_77] : memref<1x17x128x128xbf16, #tpu.memory_space<vmem>>, vector<1x1x128x128xbf16>
    %104 = vector.shape_cast %103 : vector<1x1x128x128xbf16> to vector<128x128xbf16>
    %cst_78 = arith.constant dense<0.000000e+00> : vector<16x128xf32>
    %105 = tpu.matmul %102, %104, %cst_78 {dimension_numbers = #tpu.dot_dimension_numbers<[1], [0], [0], [1], [0, 0, 1, 1], [], []>} : vector<16x128xbf16>, vector<128x128xbf16>, vector<16x128xf32> -> vector<16x128xf32>
    %106 = vector.shape_cast %105 : vector<16x128xf32> to vector<2x8x128xf32>
    %107 = vector.extract_strided_slice %106 {offsets = [0, 0, 0], sizes = [2, 8, 4], strides = [1, 1, 1]} : vector<2x8x128xf32> to vector<2x8x4xf32>
    %cst_79 = arith.constant dense<0xFF800000> : vector<2x4xf32>
    %108 = vector.multi_reduction <maximumf>, %107, %cst_79 [1] : vector<2x8x4xf32> to vector<2x4xf32>
    %109 = vector.shape_cast %108 : vector<2x4xf32> to vector<2x1x4xf32>
    %110 = vector.broadcast %109 : vector<2x1x4xf32> to vector<2x8x4xf32>
    %111 = arith.subf %107, %110 : vector<2x8x4xf32>
    %112 = math.exp %111 : vector<2x8x4xf32>
    %cst_80 = arith.constant dense<0.000000e+00> : vector<2x4xf32>
    %113 = vector.multi_reduction <add>, %112, %cst_80 [1] : vector<2x8x4xf32> to vector<2x4xf32>
    %114 = vector.shape_cast %113 : vector<2x4xf32> to vector<2x1x4xf32>
    %115 = tpu.reciprocal %114 {approx = true} : vector<2x1x4xf32> -> vector<2x1x4xf32>
    %116 = vector.broadcast %115 : vector<2x1x4xf32> to vector<2x8x4xf32>
    %117 = arith.mulf %112, %116 : vector<2x8x4xf32>
    %118 = tpu.transpose %117, [0, 2, 1] : vector<2x8x4xf32> -> vector<2x4x8xf32>
    %119 = arith.truncf %118 : vector<2x4x8xf32> to vector<2x4x8xbf16>
    "tpu.trace_start"() <{level = 10 : i32, message = "bht,btd->bhd"}> : () -> ()
    %cst_81 = arith.constant dense<0.000000e+00> : vector<2x4x128xf32>
    %120 = tpu.matmul %119, %67, %cst_81 {dimension_numbers = #tpu.dot_dimension_numbers<[2], [1], [1], [2], [0, 0, 0, 1, 1, 2], [0], [0]>} : vector<2x4x8xbf16>, vector<2x8x128xbf16>, vector<2x4x128xf32> -> vector<2x4x128xf32>
    "tpu.trace_stop"() : () -> ()
    %c0_82 = arith.constant 0 : index
    %c6_83 = arith.constant 6 : index
    %c0_84 = arith.constant 0 : index
    %121 = vector.load %arg8[%c0_82, %c6_83, %c0_84] : memref<1x16x128xf32, #tpu.memory_space<vmem>>, vector<1x1x128xf32>
    %122 = vector.shape_cast %121 : vector<1x1x128xf32> to vector<128xf32>
    %123 = vector.extract_strided_slice %120 {offsets = [0, 0, 0], sizes = [2, 1, 128], strides = [1, 1, 1]} : vector<2x4x128xf32> to vector<2x1x128xf32>
    %124 = vector.shape_cast %123 : vector<2x1x128xf32> to vector<2x128xf32>
    %125 = arith.truncf %124 : vector<2x128xf32> to vector<2x128xbf16>
    %c0_85 = arith.constant 0 : index
    %c9 = arith.constant 9 : index
    %c0_86 = arith.constant 0 : index
    %c0_87 = arith.constant 0 : index
    %126 = vector.load %arg7[%c0_85, %c9, %c0_86, %c0_87] : memref<1x17x128x128xbf16, #tpu.memory_space<vmem>>, vector<1x1x128x128xbf16>
    %127 = vector.shape_cast %126 : vector<1x1x128x128xbf16> to vector<128x128xbf16>
    %cst_88 = arith.constant dense<0.000000e+00> : vector<2x128xf32>
    %128 = tpu.matmul %125, %127, %cst_88 {dimension_numbers = #tpu.dot_dimension_numbers<[1], [0], [0], [1], [0, 0, 1, 1], [], []>} : vector<2x128xbf16>, vector<128x128xbf16>, vector<2x128xf32> -> vector<2x128xf32>
    %129 = vector.shape_cast %122 : vector<128xf32> to vector<1x128xf32>
    %130 = vector.broadcast %129 : vector<1x128xf32> to vector<2x128xf32>
    %131 = arith.addf %130, %128 : vector<2x128xf32>
    %132 = vector.extract_strided_slice %120 {offsets = [0, 1, 0], sizes = [2, 1, 128], strides = [1, 1, 1]} : vector<2x4x128xf32> to vector<2x1x128xf32>
    %133 = vector.shape_cast %132 : vector<2x1x128xf32> to vector<2x128xf32>
    %134 = arith.truncf %133 : vector<2x128xf32> to vector<2x128xbf16>
    %c0_89 = arith.constant 0 : index
    %c10 = arith.constant 10 : index
    %c0_90 = arith.constant 0 : index
    %c0_91 = arith.constant 0 : index
    %135 = vector.load %arg7[%c0_89, %c10, %c0_90, %c0_91] : memref<1x17x128x128xbf16, #tpu.memory_space<vmem>>, vector<1x1x128x128xbf16>
    %136 = vector.shape_cast %135 : vector<1x1x128x128xbf16> to vector<128x128xbf16>
    %cst_92 = arith.constant dense<0.000000e+00> : vector<2x128xf32>
    %137 = tpu.matmul %134, %136, %cst_92 {dimension_numbers = #tpu.dot_dimension_numbers<[1], [0], [0], [1], [0, 0, 1, 1], [], []>} : vector<2x128xbf16>, vector<128x128xbf16>, vector<2x128xf32> -> vector<2x128xf32>
    %138 = arith.addf %131, %137 : vector<2x128xf32>
    %139 = vector.extract_strided_slice %120 {offsets = [0, 2, 0], sizes = [2, 1, 128], strides = [1, 1, 1]} : vector<2x4x128xf32> to vector<2x1x128xf32>
    %140 = vector.shape_cast %139 : vector<2x1x128xf32> to vector<2x128xf32>
    %141 = arith.truncf %140 : vector<2x128xf32> to vector<2x128xbf16>
    %c0_93 = arith.constant 0 : index
    %c11 = arith.constant 11 : index
    %c0_94 = arith.constant 0 : index
    %c0_95 = arith.constant 0 : index
    %142 = vector.load %arg7[%c0_93, %c11, %c0_94, %c0_95] : memref<1x17x128x128xbf16, #tpu.memory_space<vmem>>, vector<1x1x128x128xbf16>
    %143 = vector.shape_cast %142 : vector<1x1x128x128xbf16> to vector<128x128xbf16>
    %cst_96 = arith.constant dense<0.000000e+00> : vector<2x128xf32>
    %144 = tpu.matmul %141, %143, %cst_96 {dimension_numbers = #tpu.dot_dimension_numbers<[1], [0], [0], [1], [0, 0, 1, 1], [], []>} : vector<2x128xbf16>, vector<128x128xbf16>, vector<2x128xf32> -> vector<2x128xf32>
    %145 = arith.addf %138, %144 : vector<2x128xf32>
    %146 = vector.extract_strided_slice %120 {offsets = [0, 3, 0], sizes = [2, 1, 128], strides = [1, 1, 1]} : vector<2x4x128xf32> to vector<2x1x128xf32>
    %147 = vector.shape_cast %146 : vector<2x1x128xf32> to vector<2x128xf32>
    %148 = arith.truncf %147 : vector<2x128xf32> to vector<2x128xbf16>
    %c0_97 = arith.constant 0 : index
    %c12 = arith.constant 12 : index
    %c0_98 = arith.constant 0 : index
    %c0_99 = arith.constant 0 : index
    %149 = vector.load %arg7[%c0_97, %c12, %c0_98, %c0_99] : memref<1x17x128x128xbf16, #tpu.memory_space<vmem>>, vector<1x1x128x128xbf16>
    %150 = vector.shape_cast %149 : vector<1x1x128x128xbf16> to vector<128x128xbf16>
    %cst_100 = arith.constant dense<0.000000e+00> : vector<2x128xf32>
    %151 = tpu.matmul %148, %150, %cst_100 {dimension_numbers = #tpu.dot_dimension_numbers<[1], [0], [0], [1], [0, 0, 1, 1], [], []>} : vector<2x128xbf16>, vector<128x128xbf16>, vector<2x128xf32> -> vector<2x128xf32>
    %152 = arith.addf %145, %151 : vector<2x128xf32>
    %cst_101 = arith.constant 0.000000e+00 : f32
    %153 = vector.broadcast %cst_101 : f32 to vector<2x128xf32>
    %154 = arith.maximumf %152, %153 : vector<2x128xf32>
    %155 = arith.truncf %154 : vector<2x128xf32> to vector<2x128xbf16>
    %c0_102 = arith.constant 0 : index
    %c13 = arith.constant 13 : index
    %c0_103 = arith.constant 0 : index
    %c0_104 = arith.constant 0 : index
    %156 = vector.load %arg7[%c0_102, %c13, %c0_103, %c0_104] : memref<1x17x128x128xbf16, #tpu.memory_space<vmem>>, vector<1x1x128x128xbf16>
    %157 = vector.shape_cast %156 : vector<1x1x128x128xbf16> to vector<128x128xbf16>
    %cst_105 = arith.constant dense<0.000000e+00> : vector<2x128xf32>
    %158 = tpu.matmul %155, %157, %cst_105 {dimension_numbers = #tpu.dot_dimension_numbers<[1], [0], [0], [1], [0, 0, 1, 1], [], []>} : vector<2x128xbf16>, vector<128x128xbf16>, vector<2x128xf32> -> vector<2x128xf32>
    %c0_106 = arith.constant 0 : index
    %c7_107 = arith.constant 7 : index
    %c0_108 = arith.constant 0 : index
    %159 = vector.load %arg8[%c0_106, %c7_107, %c0_108] : memref<1x16x128xf32, #tpu.memory_space<vmem>>, vector<1x1x128xf32>
    %160 = vector.shape_cast %159 : vector<1x1x128xf32> to vector<128xf32>
    %161 = vector.shape_cast %160 : vector<128xf32> to vector<1x128xf32>
    %162 = vector.broadcast %161 : vector<1x128xf32> to vector<2x128xf32>
    %163 = arith.addf %158, %162 : vector<2x128xf32>
    %cst_109 = arith.constant 0.000000e+00 : f32
    %164 = vector.broadcast %cst_109 : f32 to vector<2x128xf32>
    %165 = arith.maximumf %163, %164 : vector<2x128xf32>
    %cst_110 = arith.constant dense<0.000000e+00> : vector<2xf32>
    %166 = vector.multi_reduction <add>, %165, %cst_110 [1] : vector<2x128xf32> to vector<2xf32>
    %167 = vector.shape_cast %166 : vector<2xf32> to vector<2x1xf32>
    %cst_111 = arith.constant 1.280000e+02 : f32
    %168 = vector.broadcast %cst_111 : f32 to vector<2x1xf32>
    %169 = arith.divf %167, %168 : vector<2x1xf32>
    %170 = vector.broadcast %169 : vector<2x1xf32> to vector<2x128xf32>
    %171 = arith.subf %165, %170 : vector<2x128xf32>
    %172 = arith.mulf %171, %171 : vector<2x128xf32>
    %cst_112 = arith.constant dense<0.000000e+00> : vector<2xf32>
    %173 = vector.multi_reduction <add>, %172, %cst_112 [1] : vector<2x128xf32> to vector<2xf32>
    %174 = vector.shape_cast %173 : vector<2xf32> to vector<2x1xf32>
    %cst_113 = arith.constant 1.280000e+02 : f32
    %175 = vector.broadcast %cst_113 : f32 to vector<2x1xf32>
    %176 = arith.divf %174, %175 : vector<2x1xf32>
    %177 = vector.broadcast %169 : vector<2x1xf32> to vector<2x128xf32>
    %178 = arith.subf %165, %177 : vector<2x128xf32>
    %cst_114 = arith.constant 9.99999974E-6 : f32
    %179 = vector.broadcast %cst_114 : f32 to vector<2x1xf32>
    %180 = arith.addf %176, %179 : vector<2x1xf32>
    %181 = math.rsqrt %180 : vector<2x1xf32>
    %182 = vector.broadcast %181 : vector<2x1xf32> to vector<2x128xf32>
    %183 = arith.mulf %178, %182 : vector<2x128xf32>
    %c0_115 = arith.constant 0 : index
    %c8_116 = arith.constant 8 : index
    %c0_117 = arith.constant 0 : index
    %184 = vector.load %arg8[%c0_115, %c8_116, %c0_117] : memref<1x16x128xf32, #tpu.memory_space<vmem>>, vector<1x1x128xf32>
    %185 = vector.shape_cast %184 : vector<1x1x128xf32> to vector<128xf32>
    %186 = vector.shape_cast %185 : vector<128xf32> to vector<1x128xf32>
    %187 = vector.broadcast %186 : vector<1x128xf32> to vector<2x128xf32>
    %188 = arith.mulf %183, %187 : vector<2x128xf32>
    %c0_118 = arith.constant 0 : index
    %c9_119 = arith.constant 9 : index
    %c0_120 = arith.constant 0 : index
    %189 = vector.load %arg8[%c0_118, %c9_119, %c0_120] : memref<1x16x128xf32, #tpu.memory_space<vmem>>, vector<1x1x128xf32>
    %190 = vector.shape_cast %189 : vector<1x1x128xf32> to vector<128xf32>
    %191 = vector.shape_cast %190 : vector<128xf32> to vector<1x128xf32>
    %192 = vector.broadcast %191 : vector<1x128xf32> to vector<2x128xf32>
    %193 = arith.addf %188, %192 : vector<2x128xf32>
    %194 = arith.truncf %193 : vector<2x128xf32> to vector<2x128xbf16>
    %c0_121 = arith.constant 0 : index
    %c14 = arith.constant 14 : index
    %c0_122 = arith.constant 0 : index
    %c0_123 = arith.constant 0 : index
    %195 = vector.load %arg7[%c0_121, %c14, %c0_122, %c0_123] : memref<1x17x128x128xbf16, #tpu.memory_space<vmem>>, vector<1x1x128x128xbf16>
    %196 = vector.shape_cast %195 : vector<1x1x128x128xbf16> to vector<128x128xbf16>
    %cst_124 = arith.constant dense<0.000000e+00> : vector<2x128xf32>
    %197 = tpu.matmul %194, %196, %cst_124 {dimension_numbers = #tpu.dot_dimension_numbers<[1], [0], [0], [1], [0, 0, 1, 1], [], []>} : vector<2x128xbf16>, vector<128x128xbf16>, vector<2x128xf32> -> vector<2x128xf32>
    %c0_125 = arith.constant 0 : index
    %c10_126 = arith.constant 10 : index
    %c0_127 = arith.constant 0 : index
    %198 = vector.load %arg8[%c0_125, %c10_126, %c0_127] : memref<1x16x128xf32, #tpu.memory_space<vmem>>, vector<1x1x128xf32>
    %199 = vector.shape_cast %198 : vector<1x1x128xf32> to vector<128xf32>
    %200 = vector.shape_cast %199 : vector<128xf32> to vector<1x128xf32>
    %201 = vector.broadcast %200 : vector<1x128xf32> to vector<2x128xf32>
    %202 = arith.addf %197, %201 : vector<2x128xf32>
    %cst_128 = arith.constant 0.000000e+00 : f32
    %203 = vector.broadcast %cst_128 : f32 to vector<2x128xf32>
    %204 = arith.maximumf %202, %203 : vector<2x128xf32>
    %205 = arith.truncf %204 : vector<2x128xf32> to vector<2x128xbf16>
    %c0_129 = arith.constant 0 : index
    %c15 = arith.constant 15 : index
    %c0_130 = arith.constant 0 : index
    %c0_131 = arith.constant 0 : index
    %206 = vector.load %arg7[%c0_129, %c15, %c0_130, %c0_131] : memref<1x17x128x128xbf16, #tpu.memory_space<vmem>>, vector<1x1x128x128xbf16>
    %207 = vector.shape_cast %206 : vector<1x1x128x128xbf16> to vector<128x128xbf16>
    %cst_132 = arith.constant dense<0.000000e+00> : vector<2x128xf32>
    %208 = tpu.matmul %205, %207, %cst_132 {dimension_numbers = #tpu.dot_dimension_numbers<[1], [0], [0], [1], [0, 0, 1, 1], [], []>} : vector<2x128xbf16>, vector<128x128xbf16>, vector<2x128xf32> -> vector<2x128xf32>
    %c0_133 = arith.constant 0 : index
    %c11_134 = arith.constant 11 : index
    %c0_135 = arith.constant 0 : index
    %209 = vector.load %arg8[%c0_133, %c11_134, %c0_135] : memref<1x16x128xf32, #tpu.memory_space<vmem>>, vector<1x1x128xf32>
    %210 = vector.shape_cast %209 : vector<1x1x128xf32> to vector<128xf32>
    %211 = vector.shape_cast %210 : vector<128xf32> to vector<1x128xf32>
    %212 = vector.broadcast %211 : vector<1x128xf32> to vector<2x128xf32>
    %213 = arith.addf %208, %212 : vector<2x128xf32>
    %cst_136 = arith.constant 0.000000e+00 : f32
    %214 = vector.broadcast %cst_136 : f32 to vector<2x128xf32>
    %215 = arith.maximumf %213, %214 : vector<2x128xf32>
    %216 = arith.truncf %215 : vector<2x128xf32> to vector<2x128xbf16>
    %c0_137 = arith.constant 0 : index
    %c16 = arith.constant 16 : index
    %c0_138 = arith.constant 0 : index
    %c0_139 = arith.constant 0 : index
    %217 = vector.load %arg7[%c0_137, %c16, %c0_138, %c0_139] : memref<1x17x128x128xbf16, #tpu.memory_space<vmem>>, vector<1x1x128x128xbf16>
    %218 = vector.shape_cast %217 : vector<1x1x128x128xbf16> to vector<128x128xbf16>
    %cst_140 = arith.constant dense<0.000000e+00> : vector<2x128xf32>
    %219 = tpu.matmul %216, %218, %cst_140 {dimension_numbers = #tpu.dot_dimension_numbers<[1], [0], [0], [1], [0, 0, 1, 1], [], []>} : vector<2x128xbf16>, vector<128x128xbf16>, vector<2x128xf32> -> vector<2x128xf32>
    %c0_141 = arith.constant 0 : index
    %c12_142 = arith.constant 12 : index
    %c0_143 = arith.constant 0 : index
    %220 = vector.load %arg8[%c0_141, %c12_142, %c0_143] : memref<1x16x128xf32, #tpu.memory_space<vmem>>, vector<1x1x128xf32>
    %221 = vector.shape_cast %220 : vector<1x1x128xf32> to vector<128xf32>
    %222 = vector.shape_cast %221 : vector<128xf32> to vector<1x128xf32>
    %223 = vector.broadcast %222 : vector<1x128xf32> to vector<2x128xf32>
    %224 = arith.addf %219, %223 : vector<2x128xf32>
    %cst_144 = arith.constant dense<0xFF800000> : vector<2xf32>
    %225 = vector.multi_reduction <maximumf>, %224, %cst_144 [1] : vector<2x128xf32> to vector<2xf32>
    %226 = vector.shape_cast %225 : vector<2xf32> to vector<2x1xf32>
    %227 = vector.broadcast %226 : vector<2x1xf32> to vector<2x128xf32>
    %228 = arith.subf %224, %227 : vector<2x128xf32>
    %229 = math.exp %228 : vector<2x128xf32>
    %cst_145 = arith.constant dense<0.000000e+00> : vector<2xf32>
    %230 = vector.multi_reduction <add>, %229, %cst_145 [1] : vector<2x128xf32> to vector<2xf32>
    %231 = vector.shape_cast %230 : vector<2xf32> to vector<2x1xf32>
    %232 = math.log %231 : vector<2x1xf32>
    %233 = arith.addf %232, %226 : vector<2x1xf32>
    %234 = vector.broadcast %233 : vector<2x1xf32> to vector<2x128xf32>
    %235 = arith.subf %224, %234 : vector<2x128xf32>
    %c0_146 = arith.constant 0 : index
    %c0_147 = arith.constant 0 : index
    %c0_148 = arith.constant 0 : index
    %236 = vector.load %arg9[%c0_146, %c0_147, %c0_148] : memref<1x2x128xf32, #tpu.memory_space<vmem>>, vector<1x2x128xf32>
    %237 = vector.shape_cast %236 : vector<1x2x128xf32> to vector<2x128xf32>
    %238 = vector.shape_cast %235 : vector<2x128xf32> to vector<1x2x128xf32>
    tpu.vector_store %arg9[%c0_146, %c0_147, %c0_148], %238 {strides = array<i32>} : memref<1x2x128xf32, #tpu.memory_space<vmem>>, vector<1x2x128xf32>,
    return
  }
  func.func @transform_0(%arg0: i32) -> (i32, i32) {
    %c0_i32 = arith.constant 0 : i32
    %c0_i32_0 = arith.constant 0 : i32
    %c0_i32_1 = arith.constant 0 : i32
    return %c0_i32, %c0_i32_0 : i32, i32
  }
  func.func @transform_1(%arg0: i32) -> (i32, i32) {
    %c0_i32 = arith.constant 0 : i32
    %c0_i32_0 = arith.constant 0 : i32
    %c0_i32_1 = arith.constant 0 : i32
    return %c0_i32, %c0_i32_0 : i32, i32
  }
  func.func @transform_2(%arg0: i32) -> (i32, i32) {
    %c0_i32 = arith.constant 0 : i32
    %c0_i32_0 = arith.constant 0 : i32
    %c0_i32_1 = arith.constant 0 : i32
    return %c0_i32, %c0_i32_0 : i32, i32
  }
  func.func @transform_3(%arg0: i32) -> (i32, i32) {
    %c0_i32 = arith.constant 0 : i32
    %c0_i32_0 = arith.constant 0 : i32
    %c0_i32_1 = arith.constant 0 : i32
    return %c0_i32, %c0_i32_0 : i32, i32
  }
  func.func @transform_4(%arg0: i32) -> (i32, i32) {
    %c0_i32 = arith.constant 0 : i32
    %c0_i32_0 = arith.constant 0 : i32
    %c0_i32_1 = arith.constant 0 : i32
    return %c0_i32, %c0_i32_0 : i32, i32
  }
  func.func @transform_5(%arg0: i32) -> (i32, i32, i32) {
    %c0_i32 = arith.constant 0 : i32
    %c0_i32_0 = arith.constant 0 : i32
    %c0_i32_1 = arith.constant 0 : i32
    %c0_i32_2 = arith.constant 0 : i32
    return %c0_i32, %c0_i32_0, %c0_i32_1 : i32, i32, i32
  }
  func.func @transform_6(%arg0: i32) -> (i32, i32, i32, i32) {
    %c0_i32 = arith.constant 0 : i32
    %c0_i32_0 = arith.constant 0 : i32
    %c0_i32_1 = arith.constant 0 : i32
    %c0_i32_2 = arith.constant 0 : i32
    return %arg0, %c0_i32, %c0_i32_0, %c0_i32_1 : i32, i32, i32, i32
  }
  func.func @transform_7(%arg0: i32) -> (i32, i32, i32) {
    %c0_i32 = arith.constant 0 : i32
    %c0_i32_0 = arith.constant 0 : i32
    %c0_i32_1 = arith.constant 0 : i32
    return %arg0, %c0_i32, %c0_i32_0 : i32, i32, i32
  }
  func.func @transform_8(%arg0: i32) -> (i32, i32, i32) {
    %c0_i32 = arith.constant 0 : i32
    %c0_i32_0 = arith.constant 0 : i32
    %c0_i32_1 = arith.constant 0 : i32
    return %arg0, %c0_i32, %c0_i32_0 : i32, i32, i32
  }
}

</mosaic_0001>

<llo_original>
// kernel: tpu_custom_call.1
$region0: #{tpu_custom_call.1}
  #allocation0 [shape = 'u32[]', space=smem, size = 0x4, offset = 0x4, fixed_abs, tag = 'smem constant byte address 0x4 - core index']
  #allocation1 [shape = 'u32[144,128]{1,0:T(1,128)}', space=vmem, size = 0x12000, scoped, tag = 'internal scratch']
  %s0 = inlined_call_operand.hbm [shape: bf16[256,128], index: 0, kind: input, shape index: {}]
  %s1 = inlined_call_operand.hbm [shape: bf16[16,128], index: 1, kind: input, shape index: {}]
  %s2 = inlined_call_operand.hbm [shape: f32[8,128], index: 2, kind: input, shape index: {}]
  %s3 = inlined_call_operand.hbm [shape: bf16[16,256], index: 3, kind: input, shape index: {}]
  %s4 = inlined_call_operand.vmem [shape: bf16[256,16], index: 4, kind: input, shape index: {}]
  %s5 = inlined_call_operand.hbm [shape: f32[2,16,128], index: 5, kind: input, shape index: {}]
  %s6 = inlined_call_operand.hbm [shape: bf16[2,17,128,128], index: 6, kind: input, shape index: {}]
  %s7 = inlined_call_operand.hbm [shape: f32[2,16,128], index: 7, kind: input, shape index: {}]
  %s8 = inlined_call_operand.hbm [shape: f32[2,2,128], index: 8, kind: output, shape index: {}]
  %s9 = sld [smem:[#allocation0]]
  $region93: #{tpu_custom_call.1} parent=0
    _
  %s11 = ssub.s32 1, %s9
  %s12 = scalar_select 0, %s11, %s9
  $region1: #{tpu_custom_call.1} parent=0
    #allocation2 [shape = 'u8[65536]{0}', space=vmem, size = 0x10000, scoped, tag = 'input window, operand 0, single buffered']
    #allocation3 [shape = 's32[2]{0}', space=sflag, size = 0x8, scoped, tag = 'scoped memory for tpu_custom_call.1']
    #allocation4 [shape = 's32[2]{0}', space=sflag, size = 0x8, scoped, tag = 'scoped memory for tpu_custom_call.1']
    #allocation5 [shape = 'u8[4096]{0}', space=vmem, size = 0x1000, scoped, tag = 'input window, operand 1, single buffered']
    #allocation6 [shape = 's32[1]{0}', space=sflag, size = 0x4, scoped, tag = 'scoped memory for tpu_custom_call.1']
    #allocation7 [shape = 'u8[4096]{0}', space=vmem, size = 0x1000, scoped, tag = 'input window, operand 2, single buffered']
    #allocation8 [shape = 'u8[8192]{0}', space=vmem, size = 0x2000, scoped, tag = 'input window, operand 3, single buffered']
    #allocation9 [shape = 's32[1]{0}', space=sflag, size = 0x4, scoped, tag = 'scoped memory for tpu_custom_call.1']
    #allocation10 [shape = 'u8[16384]{0}', space=vmem, size = 0x4000, scoped, tag = 'input window, operand 5, single buffered']
    #allocation11 [shape = 'u8[1114112]{0}', space=vmem, size = 0x110000, scoped, tag = 'input window, operand 6']
    #allocation12 [shape = 's32[2]{0}', space=sflag, size = 0x8, scoped, tag = 'scoped memory for tpu_custom_call.1']
    #allocation13 [shape = 'u8[16384]{0}', space=vmem, size = 0x4000, scoped, tag = 'input window, operand 7']
    #allocation14 [shape = 'u8[2048]{0}', space=vmem, size = 0x800, scoped, tag = 'output window, operand 0']
    %13 = vsyncpa [#allocation3], 0
    %14 = vsyncpa [#allocation6], 0
    %15 = vsyncpa [#allocation9], 0
    %16 = vsyncpa [#allocation12], 0
    %s17 = scalar_lea.sflag [#allocation12], 1
    %18 = vsyncpa %s17, 0
    %19 = vsyncpa [#allocation4], 0
    %s20 = scalar_lea.sflag [#allocation4], 1
    %21 = vsyncpa %s20, 0
    loop: start=0, step=1, limit=4
    $region2: #{tpu_custom_call.1} parent=1 // loop_pre_header
      _
    $region3: #{tpu_custom_call.1} parent=1 // loop_header
      %s23 = sphi 0, %s27
      %p24 = scmp.ge.s32.totalorder %s23, 4
      %s31 = sphi 0, %s31
      %s33 = sphi 0, %s31
      %s34 = sphi 0, %s33
      %s48 = sphi 0, %s34
      %s52 = sphi 0, %s52
      %s54 = sphi 0, %s52
      %s55 = sphi 0, %s54
      %s69 = sphi 0, %s55
      %s73 = sphi 0, %s73
      %s75 = sphi 0, %s73
      %s76 = sphi 0, %s75
      %s90 = sphi 0, %s76
      %s94 = sphi 0, %s94
      %s96 = sphi 0, %s94
      %s97 = sphi 0, %s96
      %s111 = sphi 0, %s97
      %s115 = sphi 0, %s115
      %s117 = sphi 0, %s115
      %s118 = sphi 0, %s117
      %s132 = sphi 0, %s118
      %s136 = sphi 0, %s136
      %s138 = sphi 0, %s136
      %s139 = sphi 0, %s138
      %s153 = sphi 0, %s139
      %s159 = sphi 0, %s161
      %s162 = sphi 0, %s159
      %s163 = sphi 0, %s162
      %s179 = sphi 0, %s163
      %s185 = sphi 0, %s187
      %s188 = sphi 0, %s185
      %s189 = sphi 0, %s188
      %s205 = sphi 0, %s189
      %s211 = sphi 0, %s213
      %s214 = sphi 0, %s211
      %s215 = sphi 0, %s214
      %s231 = sphi 0, %s215
    $region4: #{tpu_custom_call.1} parent=1 // loop_header_branch
      %26 = sbr.rel (%p24) target = $region8
    $region5: #{tpu_custom_call.1} parent=1 // loop_body
      %s28 = ssub.s32 %s23, 1
      %s29 = ssub.s32 %s23, 2
      %s30 = sadd.s32 %s23, 1
      %s32 = sadd.s32 %s31, 1
      %p35 = scmp.eq.s32.totalorder %s23, 1
      %p36 = scmp.ne.s32.totalorder %s31, %s33
      %p37 = scmp.eq.s32.totalorder %s23, 0
      %p38 = por %p36, %p37
      %p39 = scmp.ne.s32.totalorder %s31, %s33
      %p40 = scmp.eq.s32.totalorder %s28, 1
      %p41 = por %p39, %p40
      %p42 = scmp.ne.s32.totalorder %s33, %s34
      %p43 = scmp.eq.s32.totalorder %s28, 0
      %p44 = por %p42, %p43
      %p45 = scmp.ne.s32.totalorder %s33, %s34
      %p46 = scmp.eq.s32.totalorder %s29, 1
      %p47 = por %p45, %p46
      %p49 = scmp.ne.s32.totalorder %s34, %s48
      %p50 = scmp.eq.s32.totalorder %s29, 0
      %p51 = por %p49, %p50
      %s53 = sadd.s32 %s52, 1
      %p56 = scmp.eq.s32.totalorder %s23, 1
      %p57 = scmp.ne.s32.totalorder %s52, %s54
      %p58 = scmp.eq.s32.totalorder %s23, 0
      %p59 = por %p57, %p58
      %p60 = scmp.ne.s32.totalorder %s52, %s54
      %p61 = scmp.eq.s32.totalorder %s28, 1
      %p62 = por %p60, %p61
      %p63 = scmp.ne.s32.totalorder %s54, %s55
      %p64 = scmp.eq.s32.totalorder %s28, 0
      %p65 = por %p63, %p64
      %p66 = scmp.ne.s32.totalorder %s54, %s55
      %p67 = scmp.eq.s32.totalorder %s29, 1
      %p68 = por %p66, %p67
      %p70 = scmp.ne.s32.totalorder %s55, %s69
      %p71 = scmp.eq.s32.totalorder %s29, 0
      %p72 = por %p70, %p71
      %s74 = sadd.s32 %s73, 1
      %p77 = scmp.eq.s32.totalorder %s23, 1
      %p78 = scmp.ne.s32.totalorder %s73, %s75
      %p79 = scmp.eq.s32.totalorder %s23, 0
      %p80 = por %p78, %p79
      %p81 = scmp.ne.s32.totalorder %s73, %s75
      %p82 = scmp.eq.s32.totalorder %s28, 1
      %p83 = por %p81, %p82
      %p84 = scmp.ne.s32.totalorder %s75, %s76
      %p85 = scmp.eq.s32.totalorder %s28, 0
      %p86 = por %p84, %p85
      %p87 = scmp.ne.s32.totalorder %s75, %s76
      %p88 = scmp.eq.s32.totalorder %s29, 1
      %p89 = por %p87, %p88
      %p91 = scmp.ne.s32.totalorder %s76, %s90
      %p92 = scmp.eq.s32.totalorder %s29, 0
      %p93 = por %p91, %p92
      %s95 = sadd.s32 %s94, 1
      %p98 = scmp.eq.s32.totalorder %s23, 1
      %p99 = scmp.ne.s32.totalorder %s94, %s96
      %p100 = scmp.eq.s32.totalorder %s23, 0
      %p101 = por %p99, %p100
      %p102 = scmp.ne.s32.totalorder %s94, %s96
      %p103 = scmp.eq.s32.totalorder %s28, 1
      %p104 = por %p102, %p103
      %p105 = scmp.ne.s32.totalorder %s96, %s97
      %p106 = scmp.eq.s32.totalorder %s28, 0
      %p107 = por %p105, %p106
      %p108 = scmp.ne.s32.totalorder %s96, %s97
      %p109 = scmp.eq.s32.totalorder %s29, 1
      %p110 = por %p108, %p109
      %p112 = scmp.ne.s32.totalorder %s97, %s111
      %p113 = scmp.eq.s32.totalorder %s29, 0
      %p114 = por %p112, %p113
      %s116 = sadd.s32 %s115, 1
      %p119 = scmp.eq.s32.totalorder %s23, 1
      %p120 = scmp.ne.s32.totalorder %s115, %s117
      %p121 = scmp.eq.s32.totalorder %s23, 0
      %p122 = por %p120, %p121
      %p123 = scmp.ne.s32.totalorder %s115, %s117
      %p124 = scmp.eq.s32.totalorder %s28, 1
      %p125 = por %p123, %p124
      %p126 = scmp.ne.s32.totalorder %s117, %s118
      %p127 = scmp.eq.s32.totalorder %s28, 0
      %p128 = por %p126, %p127
      %p129 = scmp.ne.s32.totalorder %s117, %s118
      %p130 = scmp.eq.s32.totalorder %s29, 1
      %p131 = por %p129, %p130
      %p133 = scmp.ne.s32.totalorder %s118, %s132
      %p134 = scmp.eq.s32.totalorder %s29, 0
      %p135 = por %p133, %p134
      %s137 = sadd.s32 %s136, 1
      %p140 = scmp.eq.s32.totalorder %s23, 1
      %p141 = scmp.ne.s32.totalorder %s136, %s138
      %p142 = scmp.eq.s32.totalorder %s23, 0
      %p143 = por %p141, %p142
      %p144 = scmp.ne.s32.totalorder %s136, %s138
      %p145 = scmp.eq.s32.totalorder %s28, 1
      %p146 = por %p144, %p145
      %p147 = scmp.ne.s32.totalorder %s138, %s139
      %p148 = scmp.eq.s32.totalorder %s28, 0
      %p149 = por %p147, %p148
      %p150 = scmp.ne.s32.totalorder %s138, %s139
      %p151 = scmp.eq.s32.totalorder %s29, 1
      %p152 = por %p150, %p151
      %p154 = scmp.ne.s32.totalorder %s139, %s153
      %p155 = scmp.eq.s32.totalorder %s29, 0
      %p156 = por %p154, %p155
      %s157 = ssub.s32 %s23, %s30
      %p158 = scmp.eq.s32.totalorder %s157, 0
      %s160 = sadd.s32 %s159, 1
      %s161 = scalar_select %p158, %s159, %s160
      %p164 = pneg %p158
      %p165 = scmp.eq.s32.totalorder %s23, 1
      %p166 = por %p164, %p165
      %p167 = scmp.ne.s32.totalorder %s159, %s162
      %p168 = scmp.eq.s32.totalorder %s23, 0
      %p169 = por %p167, %p168
      %p170 = scmp.ne.s32.totalorder %s159, %s162
      %p171 = scmp.eq.s32.totalorder %s28, 1
      %p172 = por %p170, %p171
      %p173 = scmp.ne.s32.totalorder %s162, %s163
      %p174 = scmp.eq.s32.totalorder %s28, 0
      %p175 = por %p173, %p174
      %p176 = scmp.ne.s32.totalorder %s162, %s163
      %p177 = scmp.eq.s32.totalorder %s29, 1
      %p178 = por %p176, %p177
      %p180 = scmp.ne.s32.totalorder %s163, %s179
      %p181 = scmp.eq.s32.totalorder %s29, 0
      %p182 = por %p180, %p181
      %s183 = ssub.s32 %s23, %s30
      %p184 = scmp.eq.s32.totalorder %s183, 0
      %s186 = sadd.s32 %s185, 1
      %s187 = scalar_select %p184, %s185, %s186
      %p190 = pneg %p184
      %p191 = scmp.eq.s32.totalorder %s23, 1
      %p192 = por %p190, %p191
      %p193 = scmp.ne.s32.totalorder %s185, %s188
      %p194 = scmp.eq.s32.totalorder %s23, 0
      %p195 = por %p193, %p194
      %p196 = scmp.ne.s32.totalorder %s185, %s188
      %p197 = scmp.eq.s32.totalorder %s28, 1
      %p198 = por %p196, %p197
      %p199 = scmp.ne.s32.totalorder %s188, %s189
      %p200 = scmp.eq.s32.totalorder %s28, 0
      %p201 = por %p199, %p200
      %p202 = scmp.ne.s32.totalorder %s188, %s189
      %p203 = scmp.eq.s32.totalorder %s29, 1
      %p204 = por %p202, %p203
      %p206 = scmp.ne.s32.totalorder %s189, %s205
      %p207 = scmp.eq.s32.totalorder %s29, 0
      %p208 = por %p206, %p207
      %s209 = ssub.s32 %s23, %s30
      %p210 = scmp.eq.s32.totalorder %s209, 0
      %s212 = sadd.s32 %s211, 1
      %s213 = scalar_select %p210, %s211, %s212
      %p216 = pneg %p210
      %p217 = scmp.eq.s32.totalorder %s23, 1
      %p218 = por %p216, %p217
      %p219 = scmp.ne.s32.totalorder %s211, %s214
      %p220 = scmp.eq.s32.totalorder %s23, 0
      %p221 = por %p219, %p220
      %p222 = scmp.ne.s32.totalorder %s211, %s214
      %p223 = scmp.eq.s32.totalorder %s28, 1
      %p224 = por %p222, %p223
      %p225 = scmp.ne.s32.totalorder %s214, %s215
      %p226 = scmp.eq.s32.totalorder %s28, 0
      %p227 = por %p225, %p226
      %p228 = scmp.ne.s32.totalorder %s214, %s215
      %p229 = scmp.eq.s32.totalorder %s29, 1
      %p230 = por %p228, %p229
      %p232 = scmp.ne.s32.totalorder %s215, %s231
      %p233 = scmp.eq.s32.totalorder %s29, 0
      %p234 = por %p232, %p233
      %p235 = scmp.le.s32.totalorder 1, %s23
      %p236 = scmp.lt.s32.totalorder %s23, 3
      %p237 = pnand %p235, %p236
      %p238 = pneg %p237
      // Predicated region
      $region9: #{tpu_custom_call.1} parent=5 // pred_check
        _
      $region10: #{tpu_custom_call.1} parent=5 // pred_check_branch
        %240 = sbr.rel (%p237) target = $region12
      $region11: #{tpu_custom_call.1} parent=5 // pred_region
        %s241 = ssub.s32 %s23, 1
        // Predicated region
        $region13: #{tpu_custom_call.1} parent=11 // pred_check
          %p242 = pneg %p44
        $region14: #{tpu_custom_call.1} parent=11 // pred_check_branch
          %244 = sbr.rel (%p242) target = $region16
        $region15: #{tpu_custom_call.1} parent=11 // pred_region
          %s246 = ssub.s32 2048, 2048
          %247 = vsyncadd [#allocation3], %s246
          %s248 = sshll.u32 [#allocation2], 4
          %s249 = int_to_ptr.vmem [resolvable:$true] %s248
          %254 = dma.hbm_to_vmem [thread:$0]  %s0, 2048, %s249, [#allocation3], 64, 64, 4
        $region16: #{tpu_custom_call.1} parent=11 // pred_fallthru
          _
        // Predicated region
        $region17: #{tpu_custom_call.1} parent=11 // pred_check
          %p255 = pneg %p65
        $region18: #{tpu_custom_call.1} parent=11 // pred_check_branch
          %257 = sbr.rel (%p255) target = $region20
        $region19: #{tpu_custom_call.1} parent=11 // pred_region
          %s259 = ssub.s32 128, 128
          %260 = vsyncadd [#allocation6], %s259
          %s261 = sshll.u32 [#allocation5], 4
          %s262 = int_to_ptr.vmem [resolvable:$true] %s261
          %267 = dma.hbm_to_vmem [thread:$0]  %s1, 128, %s262, [#allocation6], 64, 64, 4
        $region20: #{tpu_custom_call.1} parent=11 // pred_fallthru
          _
        // Predicated region
        $region21: #{tpu_custom_call.1} parent=11 // pred_check
          %p268 = pneg %p86
        $region22: #{tpu_custom_call.1} parent=11 // pred_check_branch
          %270 = sbr.rel (%p268) target = $region24
        $region23: #{tpu_custom_call.1} parent=11 // pred_region
          %s272 = ssub.s32 128, 128
          %273 = vsyncadd [#allocation6], %s272
          %s275 = sshll.u32 [#allocation7], 4
          %s276 = int_to_ptr.vmem [resolvable:$true] %s275
          %278 = dma.hbm_to_vmem [thread:$0]  %s2, 128, %s276, [#allocation6]
        $region24: #{tpu_custom_call.1} parent=11 // pred_fallthru
          _
        // Predicated region
        $region25: #{tpu_custom_call.1} parent=11 // pred_check
          %p279 = pneg %p107
        $region26: #{tpu_custom_call.1} parent=11 // pred_check_branch
          %281 = sbr.rel (%p279) target = $region28
        $region27: #{tpu_custom_call.1} parent=11 // pred_region
          %s283 = ssub.s32 256, 256
          %284 = vsyncadd [#allocation9], %s283
          %s285 = sshll.u32 [#allocation8], 4
          %s286 = int_to_ptr.vmem [resolvable:$true] %s285
          %291 = dma.hbm_to_vmem [thread:$0]  %s3, 256, %s286, [#allocation9], 128, 128, 8
        $region28: #{tpu_custom_call.1} parent=11 // pred_fallthru
          _
        // Predicated region
        $region29: #{tpu_custom_call.1} parent=11 // pred_check
          %p292 = pneg %p128
        $region30: #{tpu_custom_call.1} parent=11 // pred_check_branch
          %294 = sbr.rel (%p292) target = $region32
        $region31: #{tpu_custom_call.1} parent=11 // pred_region
          _
        $region32: #{tpu_custom_call.1} parent=11 // pred_fallthru
          _
        // Predicated region
        $region33: #{tpu_custom_call.1} parent=11 // pred_check
          %p295 = pneg %p149
        $region34: #{tpu_custom_call.1} parent=11 // pred_check_branch
          %297 = sbr.rel (%p295) target = $region36
        $region35: #{tpu_custom_call.1} parent=11 // pred_region
          %s299 = ssub.s32 512, 512
          %300 = vsyncadd [#allocation9], %s299
          %s301 = sshll.u32 [#allocation10], 4
          %s302 = int_to_ptr.vmem [resolvable:$true] %s301
          %307 = dma.hbm_to_vmem [thread:$0]  %s5, 512, %s302, [#allocation9], 128, 128, 8
        $region36: #{tpu_custom_call.1} parent=11 // pred_fallthru
          _
      $region12: #{tpu_custom_call.1} parent=5 // pred_fallthru
        _
      %p308 = scmp.lt.s32.totalorder %s23, 2
      // Predicated region
      $region37: #{tpu_custom_call.1} parent=5 // pred_check
        %p309 = pneg %p308
      $region38: #{tpu_custom_call.1} parent=5 // pred_check_branch
        %311 = sbr.rel (%p309) target = $region40
      $region39: #{tpu_custom_call.1} parent=5 // pred_region
        // Predicated region
        $region41: #{tpu_custom_call.1} parent=39 // pred_check
          %p312 = pneg %p169
        $region42: #{tpu_custom_call.1} parent=39 // pred_check_branch
          %314 = sbr.rel (%p312) target = $region44
        $region43: #{tpu_custom_call.1} parent=39 // pred_region
          %s315 = sand.u32 %s23, 1
          %s316 = scalar_lea.sflag [#allocation12], %s315
          %s317 = sand.u32 %s159, 1
          %s318 = smul.addr %s317, 1088
          %s319 = scalar_lea.vmem [#allocation11], %s318
          %s321 = ssub.s32 17408, 17408
          %322 = vsyncadd %s316, %s321
          %s323 = smul.addr %s23, 272
          %s324 = smul.addr %s323, 64
          %s325 = scalar_lea.hbm %s6, %s324
          %s326 = sshll.u32 %s319, 4
          %s327 = int_to_ptr.vmem [resolvable:$true] %s326
          %332 = dma.hbm_to_vmem [thread:$0]  %s325, 17408, %s327, %s316, 64, 64, 4
        $region44: #{tpu_custom_call.1} parent=39 // pred_fallthru
          _
        // Predicated region
        $region45: #{tpu_custom_call.1} parent=39 // pred_check
          %p333 = pneg %p195
        $region46: #{tpu_custom_call.1} parent=39 // pred_check_branch
          %335 = sbr.rel (%p333) target = $region48
        $region47: #{tpu_custom_call.1} parent=39 // pred_region
          %s336 = sand.u32 %s23, 1
          %s337 = scalar_lea.sflag [#allocation12], %s336
          %s338 = sand.u32 %s185, 1
          %s339 = smul.addr %s338, 16
          %s340 = scalar_lea.vmem [#allocation13], %s339
          %s342 = ssub.s32 256, 256
          %343 = vsyncadd %s337, %s342
          %s344 = smul.addr %s23, 2
          %s345 = smul.addr %s344, 128
          %s346 = scalar_lea.hbm %s7, %s345
          %s347 = sshll.u32 %s340, 4
          %s348 = int_to_ptr.vmem [resolvable:$true] %s347
          %353 = dma.hbm_to_vmem [thread:$0]  %s346, 256, %s348, %s337, 128, 128, 8
        $region48: #{tpu_custom_call.1} parent=39 // pred_fallthru
          _
      $region40: #{tpu_custom_call.1} parent=5 // pred_fallthru
        _
      %p354 = scmp.le.s32.totalorder 1, %s23
      %p355 = scmp.lt.s32.totalorder %s23, 3
      %p356 = pnand %p354, %p355
      %p357 = pneg %p356
      // Predicated region
      $region49: #{tpu_custom_call.1} parent=5 // pred_check
        _
      $region50: #{tpu_custom_call.1} parent=5 // pred_check_branch
        %359 = sbr.rel (%p356) target = $region52
      $region51: #{tpu_custom_call.1} parent=5 // pred_region
        %s360 = ssub.s32 %s23, 1
        // Predicated region
        $region53: #{tpu_custom_call.1} parent=51 // pred_check
          %p361 = pneg %p44
        $region54: #{tpu_custom_call.1} parent=51 // pred_check_branch
          %363 = sbr.rel (%p361) target = $region56
        $region55: #{tpu_custom_call.1} parent=51 // pred_region
          %364 = dma.done [#allocation3], 2048
        $region56: #{tpu_custom_call.1} parent=51 // pred_fallthru
          _
        // Predicated region
        $region57: #{tpu_custom_call.1} parent=51 // pred_check
          %p365 = pneg %p65
        $region58: #{tpu_custom_call.1} parent=51 // pred_check_branch
          %367 = sbr.rel (%p365) target = $region60
        $region59: #{tpu_custom_call.1} parent=51 // pred_region
          %368 = dma.done [#allocation6], 128
        $region60: #{tpu_custom_call.1} parent=51 // pred_fallthru
          _
        // Predicated region
        $region61: #{tpu_custom_call.1} parent=51 // pred_check
          %p369 = pneg %p86
        $region62: #{tpu_custom_call.1} parent=51 // pred_check_branch
          %371 = sbr.rel (%p369) target = $region64
        $region63: #{tpu_custom_call.1} parent=51 // pred_region
          %372 = dma.done [#allocation6], 128
        $region64: #{tpu_custom_call.1} parent=51 // pred_fallthru
          _
        // Predicated region
        $region65: #{tpu_custom_call.1} parent=51 // pred_check
          %p373 = pneg %p107
        $region66: #{tpu_custom_call.1} parent=51 // pred_check_branch
          %375 = sbr.rel (%p373) target = $region68
        $region67: #{tpu_custom_call.1} parent=51 // pred_region
          %376 = dma.done [#allocation9], 256
        $region68: #{tpu_custom_call.1} parent=51 // pred_fallthru
          _
        // Predicated region
        $region69: #{tpu_custom_call.1} parent=51 // pred_check
          %p377 = pneg %p149
        $region70: #{tpu_custom_call.1} parent=51 // pred_check_branch
          %379 = sbr.rel (%p377) target = $region72
        $region71: #{tpu_custom_call.1} parent=51 // pred_region
          %380 = dma.done [#allocation9], 512
        $region72: #{tpu_custom_call.1} parent=51 // pred_fallthru
          _
        %s381 = sand.u32 %s28, 1
        %s382 = scalar_lea.sflag [#allocation12], %s381
        %s383 = sand.u32 %s162, 1
        %s384 = smul.addr %s383, 1088
        %s385 = scalar_lea.vmem [#allocation11], %s384
        // Predicated region
        $region73: #{tpu_custom_call.1} parent=51 // pred_check
          %p386 = pneg %p175
        $region74: #{tpu_custom_call.1} parent=51 // pred_check_branch
          %388 = sbr.rel (%p386) target = $region76
        $region75: #{tpu_custom_call.1} parent=51 // pred_region
          %389 = dma.done %s382, 17408
        $region76: #{tpu_custom_call.1} parent=51 // pred_fallthru
          _
        %s390 = sand.u32 %s28, 1
        %s391 = scalar_lea.sflag [#allocation12], %s390
        %s392 = sand.u32 %s188, 1
        %s393 = smul.addr %s392, 16
        %s394 = scalar_lea.vmem [#allocation13], %s393
        // Predicated region
        $region77: #{tpu_custom_call.1} parent=51 // pred_check
          %p395 = pneg %p201
        $region78: #{tpu_custom_call.1} parent=51 // pred_check_branch
          %397 = sbr.rel (%p395) target = $region80
        $region79: #{tpu_custom_call.1} parent=51 // pred_region
          %398 = dma.done %s391, 256
        $region80: #{tpu_custom_call.1} parent=51 // pred_fallthru
          _
        %p399 = pneg %p44
        %p400 = pneg %p41
        %p401 = pneg %p65
        %p402 = pneg %p62
        %p403 = pneg %p86
        %p404 = pneg %p83
        %p405 = pneg %p107
        %p406 = pneg %p104
        %p407 = pneg %p128
        %p408 = pneg %p125
        %p409 = pneg %p149
        %p410 = pneg %p146
        %s411 = sand.u32 %s28, 1
        %s412 = scalar_lea.sflag [#allocation12], %s411
        %s413 = sand.u32 %s162, 1
        %s414 = smul.addr %s413, 1088
        %s415 = scalar_lea.vmem [#allocation11], %s414
        %p416 = pneg %p175
        %p417 = pneg %p172
        %s418 = sand.u32 %s28, 1
        %s419 = scalar_lea.sflag [#allocation12], %s418
        %s420 = sand.u32 %s188, 1
        %s421 = smul.addr %s420, 16
        %s422 = scalar_lea.vmem [#allocation13], %s421
        %p423 = pneg %p201
        %p424 = pneg %p198
        %p425 = pneg %p227
        %p426 = pneg %p224
        %s427 = sand.u32 %s214, 1
        %s428 = scalar_lea.sflag [#allocation4], %s427
        %s429 = sand.u32 %s214, 1
        %s430 = smul.addr %s429, 2
        %s431 = scalar_lea.vmem [#allocation14], %s430
        %v433 = vld [vmem:[#allocation2] sm:$0xf]
        %v434 = vld [vmem:[#allocation2 + $0x4] sm:$0xf]
        %v435 = vld [vmem:[#allocation2 + $0x8] sm:$0xf]
        %v436 = vld [vmem:[#allocation2 + $0xc] sm:$0xf]
        %v437 = vld [vmem:[#allocation2 + $0x10] sm:$0xf]
        %v438 = vld [vmem:[#allocation2 + $0x14] sm:$0xf]
        %v439 = vld [vmem:[#allocation2 + $0x18] sm:$0xf]
        %v440 = vld [vmem:[#allocation2 + $0x1c] sm:$0xf]
        %v441 = vld [vmem:[#allocation2 + $0x20] sm:$0xf]
        %v442 = vld [vmem:[#allocation2 + $0x24] sm:$0xf]
        %v443 = vld [vmem:[#allocation2 + $0x28] sm:$0xf]
        %v444 = vld [vmem:[#allocation2 + $0x2c] sm:$0xf]
        %v445 = vld [vmem:[#allocation2 + $0x30] sm:$0xf]
        %v446 = vld [vmem:[#allocation2 + $0x34] sm:$0xf]
        %v447 = vld [vmem:[#allocation2 + $0x38] sm:$0xf]
        %v448 = vld [vmem:[#allocation2 + $0x3c] sm:$0xf]
        %v449 = vld [vmem:[#allocation2 + $0x40] sm:$0xf]
        %v450 = vld [vmem:[#allocation2 + $0x44] sm:$0xf]
        %v451 = vld [vmem:[#allocation2 + $0x48] sm:$0xf]
        %v452 = vld [vmem:[#allocation2 + $0x4c] sm:$0xf]
        %v453 = vld [vmem:[#allocation2 + $0x50] sm:$0xf]
        %v454 = vld [vmem:[#allocation2 + $0x54] sm:$0xf]
        %v455 = vld [vmem:[#allocation2 + $0x58] sm:$0xf]
        %v456 = vld [vmem:[#allocation2 + $0x5c] sm:$0xf]
        %v457 = vld [vmem:[#allocation2 + $0x60] sm:$0xf]
        %v458 = vld [vmem:[#allocation2 + $0x64] sm:$0xf]
        %v459 = vld [vmem:[#allocation2 + $0x68] sm:$0xf]
        %v460 = vld [vmem:[#allocation2 + $0x6c] sm:$0xf]
        %v461 = vld [vmem:[#allocation2 + $0x70] sm:$0xf]
        %v462 = vld [vmem:[#allocation2 + $0x74] sm:$0xf]
        %v463 = vld [vmem:[#allocation2 + $0x78] sm:$0xf]
        %v464 = vld [vmem:[#allocation2 + $0x7c] sm:$0xf]
        %v465 = vld [vmem:[%s385] sm:$0xf]
        %v466 = vld [vmem:[%s385 + $0x4] sm:$0xf]
        %v467 = vld [vmem:[%s385 + $0x8] sm:$0xf]
        %v468 = vld [vmem:[%s385 + $0xc] sm:$0xf]
        %v469 = vld [vmem:[%s385 + $0x10] sm:$0xf]
        %v470 = vld [vmem:[%s385 + $0x14] sm:$0xf]
        %v471 = vld [vmem:[%s385 + $0x18] sm:$0xf]
        %v472 = vld [vmem:[%s385 + $0x1c] sm:$0xf]
        %v473 = vld [vmem:[%s385 + $0x20] sm:$0xf]
        %v474 = vld [vmem:[%s385 + $0x24] sm:$0xf]
        %v475 = vld [vmem:[%s385 + $0x28] sm:$0xf]
        %v476 = vld [vmem:[%s385 + $0x2c] sm:$0xf]
        %v477 = vld [vmem:[%s385 + $0x30] sm:$0xf]
        %v478 = vld [vmem:[%s385 + $0x34] sm:$0xf]
        %v479 = vld [vmem:[%s385 + $0x38] sm:$0xf]
        %v480 = vld [vmem:[%s385 + $0x3c] sm:$0xf]
        %v481 = vld [vmem:[%s394] sm:$0x1]
        %v482 = vlaneseq
        %v483 = vshrl.u32 %v482, 7
        %v484 = vsub.s32 0, %v483
        %v485 = vrot.slane %v481, %v484
        %v518 = vunpack.c.l.b16 %v433
        %v519 = vunpack.c.l.b16 %v434
        %v520 = vunpack.c.l.b16 %v435
        %v521 = vunpack.c.l.b16 %v436
        %v522 = vunpack.c.l.b16 %v437
        %v523 = vunpack.c.l.b16 %v438
        %v524 = vunpack.c.l.b16 %v439
        %v525 = vunpack.c.l.b16 %v440
        %v526 = vunpack.c.l.b16 %v441
        %v527 = vunpack.c.l.b16 %v442
        %v528 = vunpack.c.l.b16 %v443
        %v529 = vunpack.c.l.b16 %v444
        %v530 = vunpack.c.l.b16 %v445
        %v531 = vunpack.c.l.b16 %v446
        %v532 = vunpack.c.l.b16 %v447
        %v533 = vunpack.c.l.b16 %v448
        %v534 = vunpack.c.l.b16 %v449
        %v535 = vunpack.c.l.b16 %v450
        %v536 = vunpack.c.l.b16 %v451
        %v537 = vunpack.c.l.b16 %v452
        %v538 = vunpack.c.l.b16 %v453
        %v539 = vunpack.c.l.b16 %v454
        %v540 = vunpack.c.l.b16 %v455
        %v541 = vunpack.c.l.b16 %v456
        %v542 = vunpack.c.l.b16 %v457
        %v543 = vunpack.c.l.b16 %v458
        %v544 = vunpack.c.l.b16 %v459
        %v545 = vunpack.c.l.b16 %v460
        %v546 = vunpack.c.l.b16 %v461
        %v547 = vunpack.c.l.b16 %v462
        %v548 = vunpack.c.l.b16 %v463
        %v549 = vunpack.c.l.b16 %v464
        %v550 = vpack.c.b16 %v519, %v518
        %v551 = vpack.c.b16 %v521, %v520
        %v552 = vpack.c.b16 %v523, %v522
        %v553 = vpack.c.b16 %v525, %v524
        %v554 = vpack.c.b16 %v527, %v526
        %v555 = vpack.c.b16 %v529, %v528
        %v556 = vpack.c.b16 %v531, %v530
        %v557 = vpack.c.b16 %v533, %v532
        %v558 = vpack.c.b16 %v535, %v534
        %v559 = vpack.c.b16 %v537, %v536
        %v560 = vpack.c.b16 %v539, %v538
        %v561 = vpack.c.b16 %v541, %v540
        %v562 = vpack.c.b16 %v543, %v542
        %v563 = vpack.c.b16 %v545, %v544
        %v564 = vpack.c.b16 %v547, %v546
        %v565 = vpack.c.b16 %v549, %v548
        %v598 = vunpack.c.l.b16 %v465
        %v599 = vunpack.c.l.b16 %v466
        %v600 = vunpack.c.l.b16 %v467
        %v601 = vunpack.c.l.b16 %v468
        %v602 = vunpack.c.l.b16 %v469
        %v603 = vunpack.c.l.b16 %v470
        %v604 = vunpack.c.l.b16 %v471
        %v605 = vunpack.c.l.b16 %v472
        %v606 = vunpack.c.l.b16 %v473
        %v607 = vunpack.c.l.b16 %v474
        %v608 = vunpack.c.l.b16 %v475
        %v609 = vunpack.c.l.b16 %v476
        %v610 = vunpack.c.l.b16 %v477
        %v611 = vunpack.c.l.b16 %v478
        %v612 = vunpack.c.l.b16 %v479
        %v613 = vunpack.c.l.b16 %v480
        %v614 = vpack.c.b16 %v599, %v598
        %v615 = vpack.c.b16 %v601, %v600
        %v616 = vpack.c.b16 %v603, %v602
        %v617 = vpack.c.b16 %v605, %v604
        %v618 = vpack.c.b16 %v607, %v606
        %v619 = vpack.c.b16 %v609, %v608
        %v620 = vpack.c.b16 %v611, %v610
        %v621 = vpack.c.b16 %v613, %v612
        %630 = vmatprep.subr.bf16.mxu0 0
        %631 = vmatpush1.bf16.msra.mxu0 %v614
        %632 = vmatprep.subr.bf16.mxu0 0
        %633 = vmatpush1.bf16.msra.mxu0 %v615
        %634 = vmatprep.subr.bf16.mxu0 0
        %635 = vmatpush1.bf16.msra.mxu0 %v616
        %636 = vmatprep.subr.bf16.mxu0 0
        %637 = vmatpush1.bf16.msra.mxu0 %v617
        %638 = vmatprep.subr.bf16.mxu0 0
        %639 = vmatpush1.bf16.msra.mxu0 %v618
        %640 = vmatprep.subr.bf16.mxu0 0
        %641 = vmatpush1.bf16.msra.mxu0 %v619
        %642 = vmatprep.subr.bf16.mxu0 0
        %643 = vmatpush1.bf16.msra.mxu0 %v620
        %644 = vmatprep.subr.bf16.mxu0 0
        %645 = vmatpush1.bf16.msra.mxu0 %v621
        %646 = vmatprep.subr.bf16.mxu0 0
        %647 = vmatpush1.bf16.msra.mxu0 0
        %648 = vmatprep.subr.bf16.mxu0 0
        %649 = vmatpush1.bf16.msra.mxu0 0
        %650 = vmatprep.subr.bf16.mxu0 0
        %651 = vmatpush1.bf16.msra.mxu0 0
        %652 = vmatprep.subr.bf16.mxu0 0
        %653 = vmatpush1.bf16.msra.mxu0 0
        %654 = vmatprep.subr.bf16.mxu0 0
        %655 = vmatpush1.bf16.msra.mxu0 0
        %656 = vmatprep.subr.bf16.mxu0 0
        %657 = vmatpush1.bf16.msra.mxu0 0
        %658 = vmatprep.subr.bf16.mxu0 0
        %659 = vmatpush1.bf16.msra.mxu0 0
        %660 = vmatprep.subr.bf16.mxu0 0
        %661 = vmatpush1.bf16.msra.mxu0 0
        %662 = vmatprep.mubr.bf16.mxu0 0
        %663 = vmatmul.mubr.bf16.gmra.mrb[0].mxu0 %v550
        %v664 = vpop.f32.mrb[0].mxu0
        %v665 = vadd.f32 %v485, %v664
        %v666 = vpop.f32.mrb[0].mxu0
        %v667 = vpop.f32.mrb[0].mxu0
        %v668 = vadd.f32 %v485, %v667
        %v669 = vpop.f32.mrb[0].mxu0
        %670 = vmatprep.mubr.bf16.mxu0 0
        %671 = vmatmul.mubr.bf16.gmra.mrb[0].mxu0 %v551
        %v672 = vpop.f32.mrb[0].mxu0
        %v673 = vadd.f32 %v485, %v672
        %v674 = vpop.f32.mrb[0].mxu0
        %v675 = vpop.f32.mrb[0].mxu0
        %v676 = vadd.f32 %v485, %v675
        %v677 = vpop.f32.mrb[0].mxu0
        %678 = vmatprep.mubr.bf16.mxu0 0
        %679 = vmatmul.mubr.bf16.gmra.mrb[0].mxu0 %v552
        %v680 = vpop.f32.mrb[0].mxu0
        %v681 = vadd.f32 %v485, %v680
        %v682 = vpop.f32.mrb[0].mxu0
        %v683 = vpop.f32.mrb[0].mxu0
        %v684 = vadd.f32 %v485, %v683
        %v685 = vpop.f32.mrb[0].mxu0
        %686 = vmatprep.mubr.bf16.mxu0 0
        %687 = vmatmul.mubr.bf16.gmra.mrb[0].mxu0 %v553
        %v688 = vpop.f32.mrb[0].mxu0
        %v689 = vadd.f32 %v485, %v688
        %v690 = vpop.f32.mrb[0].mxu0
        %v691 = vpop.f32.mrb[0].mxu0
        %v692 = vadd.f32 %v485, %v691
        %v693 = vpop.f32.mrb[0].mxu0
        %694 = vmatprep.mubr.bf16.mxu0 0
        %695 = vmatmul.mubr.bf16.gmra.mrb[0].mxu0 %v554
        %v696 = vpop.f32.mrb[0].mxu0
        %v697 = vadd.f32 %v485, %v696
        %v698 = vpop.f32.mrb[0].mxu0
        %v699 = vpop.f32.mrb[0].mxu0
        %v700 = vadd.f32 %v485, %v699
        %v701 = vpop.f32.mrb[0].mxu0
        %702 = vmatprep.mubr.bf16.mxu0 0
        %703 = vmatmul.mubr.bf16.gmra.mrb[0].mxu0 %v555
        %v704 = vpop.f32.mrb[0].mxu0
        %v705 = vadd.f32 %v485, %v704
        %v706 = vpop.f32.mrb[0].mxu0
        %v707 = vpop.f32.mrb[0].mxu0
        %v708 = vadd.f32 %v485, %v707
        %v709 = vpop.f32.mrb[0].mxu0
        %710 = vmatprep.mubr.bf16.mxu0 0
        %711 = vmatmul.mubr.bf16.gmra.mrb[0].mxu0 %v556
        %v712 = vpop.f32.mrb[0].mxu0
        %v713 = vadd.f32 %v485, %v712
        %v714 = vpop.f32.mrb[0].mxu0
        %v715 = vpop.f32.mrb[0].mxu0
        %v716 = vadd.f32 %v485, %v715
        %v717 = vpop.f32.mrb[0].mxu0
        %718 = vmatprep.mubr.bf16.mxu0 0
        %719 = vmatmul.mubr.bf16.gmra.mrb[0].mxu0 %v557
        %v720 = vpop.f32.mrb[0].mxu0
        %v721 = vadd.f32 %v485, %v720
        %v722 = vpop.f32.mrb[0].mxu0
        %v723 = vpop.f32.mrb[0].mxu0
        %v724 = vadd.f32 %v485, %v723
        %v725 = vpop.f32.mrb[0].mxu0
        %726 = vmatprep.mubr.bf16.mxu0 0
        %727 = vmatmul.mubr.bf16.gmra.mrb[0].mxu0 %v558
        %v728 = vpop.f32.mrb[0].mxu0
        %v729 = vadd.f32 %v485, %v728
        %v730 = vpop.f32.mrb[0].mxu0
        %v731 = vpop.f32.mrb[0].mxu0
        %v732 = vadd.f32 %v485, %v731
        %v733 = vpop.f32.mrb[0].mxu0
        %734 = vmatprep.mubr.bf16.mxu0 0
        %735 = vmatmul.mubr.bf16.gmra.mrb[0].mxu0 %v559
        %v736 = vpop.f32.mrb[0].mxu0
        %v737 = vadd.f32 %v485, %v736
        %v738 = vpop.f32.mrb[0].mxu0
        %v739 = vpop.f32.mrb[0].mxu0
        %v740 = vadd.f32 %v485, %v739
        %v741 = vpop.f32.mrb[0].mxu0
        %742 = vmatprep.mubr.bf16.mxu0 0
        %743 = vmatmul.mubr.bf16.gmra.mrb[0].mxu0 %v560
        %v744 = vpop.f32.mrb[0].mxu0
        %v745 = vadd.f32 %v485, %v744
        %v746 = vpop.f32.mrb[0].mxu0
        %v747 = vpop.f32.mrb[0].mxu0
        %v748 = vadd.f32 %v485, %v747
        %v749 = vpop.f32.mrb[0].mxu0
        %750 = vmatprep.mubr.bf16.mxu0 0
        %751 = vmatmul.mubr.bf16.gmra.mrb[0].mxu0 %v561
        %v752 = vpop.f32.mrb[0].mxu0
        %v753 = vadd.f32 %v485, %v752
        %v754 = vpop.f32.mrb[0].mxu0
        %v755 = vpop.f32.mrb[0].mxu0
        %v756 = vadd.f32 %v485, %v755
        %v757 = vpop.f32.mrb[0].mxu0
        %758 = vmatprep.mubr.bf16.mxu0 0
        %759 = vmatmul.mubr.bf16.gmra.mrb[0].mxu0 %v562
        %v760 = vpop.f32.mrb[0].mxu0
        %v761 = vadd.f32 %v485, %v760
        %v762 = vpop.f32.mrb[0].mxu0
        %v763 = vpop.f32.mrb[0].mxu0
        %v764 = vadd.f32 %v485, %v763
        %v765 = vpop.f32.mrb[0].mxu0
        %766 = vmatprep.mubr.bf16.mxu0 0
        %767 = vmatmul.mubr.bf16.gmra.mrb[0].mxu0 %v563
        %v768 = vpop.f32.mrb[0].mxu0
        %v769 = vadd.f32 %v485, %v768
        %v770 = vpop.f32.mrb[0].mxu0
        %v771 = vpop.f32.mrb[0].mxu0
        %v772 = vadd.f32 %v485, %v771
        %v773 = vpop.f32.mrb[0].mxu0
        %774 = vmatprep.mubr.bf16.mxu0 0
        %775 = vmatmul.mubr.bf16.gmra.mrb[0].mxu0 %v564
        %v776 = vpop.f32.mrb[0].mxu0
        %v777 = vadd.f32 %v485, %v776
        %v778 = vpop.f32.mrb[0].mxu0
        %v779 = vpop.f32.mrb[0].mxu0
        %v780 = vadd.f32 %v485, %v779
        %v781 = vpop.f32.mrb[0].mxu0
        %782 = vmatprep.mubr.bf16.mxu0 0
        %783 = vmatmul.mubr.bf16.gmra.mrb[0].mxu0 %v565
        %v784 = vpop.f32.mrb[0].mxu0
        %v785 = vadd.f32 %v485, %v784
        %v786 = vpop.f32.mrb[0].mxu0
        %v787 = vpop.f32.mrb[0].mxu0
        %v788 = vadd.f32 %v485, %v787
        %v789 = vpop.f32.mrb[0].mxu0
        %790 = vdwg.mxu0
        %v791 = vmax.f32 %v665, 0.0
        %v792 = vmax.f32 %v668, 0.0
        %v793 = vmax.f32 %v673, 0.0
        %v794 = vmax.f32 %v676, 0.0
        %v795 = vmax.f32 %v681, 0.0
        %v796 = vmax.f32 %v684, 0.0
        %v797 = vmax.f32 %v689, 0.0
        %v798 = vmax.f32 %v692, 0.0
        %v799 = vmax.f32 %v697, 0.0
        %v800 = vmax.f32 %v700, 0.0
        %v801 = vmax.f32 %v705, 0.0
        %v802 = vmax.f32 %v708, 0.0
        %v803 = vmax.f32 %v713, 0.0
        %v804 = vmax.f32 %v716, 0.0
        %v805 = vmax.f32 %v721, 0.0
        %v806 = vmax.f32 %v724, 0.0
        %v807 = vmax.f32 %v729, 0.0
        %v808 = vmax.f32 %v732, 0.0
        %v809 = vmax.f32 %v737, 0.0
        %v810 = vmax.f32 %v740, 0.0
        %v811 = vmax.f32 %v745, 0.0
        %v812 = vmax.f32 %v748, 0.0
        %v813 = vmax.f32 %v753, 0.0
        %v814 = vmax.f32 %v756, 0.0
        %v815 = vmax.f32 %v761, 0.0
        %v816 = vmax.f32 %v764, 0.0
        %v817 = vmax.f32 %v769, 0.0
        %v818 = vmax.f32 %v772, 0.0
        %v819 = vmax.f32 %v777, 0.0
        %v820 = vmax.f32 %v780, 0.0
        %v821 = vmax.f32 %v785, 0.0
        %v822 = vmax.f32 %v788, 0.0
        %v823 = vpack.c.bf16 %v792, %v791
        %v824 = vpack.c.bf16 %v794, %v793
        %v825 = vpack.c.bf16 %v796, %v795
        %v826 = vpack.c.bf16 %v798, %v797
        %v827 = vpack.c.bf16 %v800, %v799
        %v828 = vpack.c.bf16 %v802, %v801
        %v829 = vpack.c.bf16 %v804, %v803
        %v830 = vpack.c.bf16 %v806, %v805
        %v831 = vpack.c.bf16 %v808, %v807
        %v832 = vpack.c.bf16 %v810, %v809
        %v833 = vpack.c.bf16 %v812, %v811
        %v834 = vpack.c.bf16 %v814, %v813
        %v835 = vpack.c.bf16 %v816, %v815
        %v836 = vpack.c.bf16 %v818, %v817
        %v837 = vpack.c.bf16 %v820, %v819
        %v838 = vpack.c.bf16 %v822, %v821
        %s839 = scalar_lea.vmem %s385, 64 [#allocation11]
        %v840 = vld [vmem:[%s839] sm:$0xf]
        %v841 = vld [vmem:[%s839 + $0x4] sm:$0xf]
        %v842 = vld [vmem:[%s839 + $0x8] sm:$0xf]
        %v843 = vld [vmem:[%s839 + $0xc] sm:$0xf]
        %v844 = vld [vmem:[%s839 + $0x10] sm:$0xf]
        %v845 = vld [vmem:[%s839 + $0x14] sm:$0xf]
        %v846 = vld [vmem:[%s839 + $0x18] sm:$0xf]
        %v847 = vld [vmem:[%s839 + $0x1c] sm:$0xf]
        %v848 = vld [vmem:[%s839 + $0x20] sm:$0xf]
        %v849 = vld [vmem:[%s839 + $0x24] sm:$0xf]
        %v850 = vld [vmem:[%s839 + $0x28] sm:$0xf]
        %v851 = vld [vmem:[%s839 + $0x2c] sm:$0xf]
        %v852 = vld [vmem:[%s839 + $0x30] sm:$0xf]
        %v853 = vld [vmem:[%s839 + $0x34] sm:$0xf]
        %v854 = vld [vmem:[%s839 + $0x38] sm:$0xf]
        %v855 = vld [vmem:[%s839 + $0x3c] sm:$0xf]
        %v856 = vld [vmem:[%s394 + $0x1] sm:$0x1]
        %v857 = vlaneseq
        %v858 = vshrl.u32 %v857, 7
        %v859 = vsub.s32 0, %v858
        %v860 = vrot.slane %v856, %v859
        %v877 = vunpack.c.l.b16 %v840
        %v878 = vunpack.c.l.b16 %v841
        %v879 = vunpack.c.l.b16 %v842
        %v880 = vunpack.c.l.b16 %v843
        %v881 = vunpack.c.l.b16 %v844
        %v882 = vunpack.c.l.b16 %v845
        %v883 = vunpack.c.l.b16 %v846
        %v884 = vunpack.c.l.b16 %v847
        %v885 = vunpack.c.l.b16 %v848
        %v886 = vunpack.c.l.b16 %v849
        %v887 = vunpack.c.l.b16 %v850
        %v888 = vunpack.c.l.b16 %v851
        %v889 = vunpack.c.l.b16 %v852
        %v890 = vunpack.c.l.b16 %v853
        %v891 = vunpack.c.l.b16 %v854
        %v892 = vunpack.c.l.b16 %v855
        %v893 = vpack.c.b16 %v878, %v877
        %v894 = vpack.c.b16 %v880, %v879
        %v895 = vpack.c.b16 %v882, %v881
        %v896 = vpack.c.b16 %v884, %v883
        %v897 = vpack.c.b16 %v886, %v885
        %v898 = vpack.c.b16 %v888, %v887
        %v899 = vpack.c.b16 %v890, %v889
        %v900 = vpack.c.b16 %v892, %v891
        %909 = vmatprep.subr.bf16.mxu0 0
        %910 = vmatpush1.bf16.msra.mxu0 %v893
        %911 = vmatprep.subr.bf16.mxu0 0
        %912 = vmatpush1.bf16.msra.mxu0 %v894
        %913 = vmatprep.subr.bf16.mxu0 0
        %914 = vmatpush1.bf16.msra.mxu0 %v895
        %915 = vmatprep.subr.bf16.mxu0 0
        %916 = vmatpush1.bf16.msra.mxu0 %v896
        %917 = vmatprep.subr.bf16.mxu0 0
        %918 = vmatpush1.bf16.msra.mxu0 %v897
        %919 = vmatprep.subr.bf16.mxu0 0
        %920 = vmatpush1.bf16.msra.mxu0 %v898
        %921 = vmatprep.subr.bf16.mxu0 0
        %922 = vmatpush1.bf16.msra.mxu0 %v899
        %923 = vmatprep.subr.bf16.mxu0 0
        %924 = vmatpush1.bf16.msra.mxu0 %v900
        %925 = vmatprep.subr.bf16.mxu0 0
        %926 = vmatpush1.bf16.msra.mxu0 0
        %927 = vmatprep.subr.bf16.mxu0 0
        %928 = vmatpush1.bf16.msra.mxu0 0
        %929 = vmatprep.subr.bf16.mxu0 0
        %930 = vmatpush1.bf16.msra.mxu0 0
        %931 = vmatprep.subr.bf16.mxu0 0
        %932 = vmatpush1.bf16.msra.mxu0 0
        %933 = vmatprep.subr.bf16.mxu0 0
        %934 = vmatpush1.bf16.msra.mxu0 0
        %935 = vmatprep.subr.bf16.mxu0 0
        %936 = vmatpush1.bf16.msra.mxu0 0
        %937 = vmatprep.subr.bf16.mxu0 0
        %938 = vmatpush1.bf16.msra.mxu0 0
        %939 = vmatprep.subr.bf16.mxu0 0
        %940 = vmatpush1.bf16.msra.mxu0 0
        %941 = vmatprep.mubr.bf16.mxu0 0
        %942 = vmatmul.mubr.bf16.gmra.mrb[0].mxu0 %v823
        %v943 = vpop.f32.mrb[0].mxu0
        %v944 = vadd.f32 %v860, %v943
        %v945 = vpop.f32.mrb[0].mxu0
        %v946 = vpop.f32.mrb[0].mxu0
        %v947 = vadd.f32 %v860, %v946
        %v948 = vpop.f32.mrb[0].mxu0
        %949 = vmatprep.mubr.bf16.mxu0 0
        %950 = vmatmul.mubr.bf16.gmra.mrb[0].mxu0 %v824
        %v951 = vpop.f32.mrb[0].mxu0
        %v952 = vadd.f32 %v860, %v951
        %v953 = vpop.f32.mrb[0].mxu0
        %v954 = vpop.f32.mrb[0].mxu0
        %v955 = vadd.f32 %v860, %v954
        %v956 = vpop.f32.mrb[0].mxu0
        %957 = vmatprep.mubr.bf16.mxu0 0
        %958 = vmatmul.mubr.bf16.gmra.mrb[0].mxu0 %v825
        %v959 = vpop.f32.mrb[0].mxu0
        %v960 = vadd.f32 %v860, %v959
        %v961 = vpop.f32.mrb[0].mxu0
        %v962 = vpop.f32.mrb[0].mxu0
        %v963 = vadd.f32 %v860, %v962
        %v964 = vpop.f32.mrb[0].mxu0
        %965 = vmatprep.mubr.bf16.mxu0 0
        %966 = vmatmul.mubr.bf16.gmra.mrb[0].mxu0 %v826
        %v967 = vpop.f32.mrb[0].mxu0
        %v968 = vadd.f32 %v860, %v967
        %v969 = vpop.f32.mrb[0].mxu0
        %v970 = vpop.f32.mrb[0].mxu0
        %v971 = vadd.f32 %v860, %v970
        %v972 = vpop.f32.mrb[0].mxu0
        %973 = vmatprep.mubr.bf16.mxu0 0
        %974 = vmatmul.mubr.bf16.gmra.mrb[0].mxu0 %v827
        %v975 = vpop.f32.mrb[0].mxu0
        %v976 = vadd.f32 %v860, %v975
        %v977 = vpop.f32.mrb[0].mxu0
        %v978 = vpop.f32.mrb[0].mxu0
        %v979 = vadd.f32 %v860, %v978
        %v980 = vpop.f32.mrb[0].mxu0
        %981 = vmatprep.mubr.bf16.mxu0 0
        %982 = vmatmul.mubr.bf16.gmra.mrb[0].mxu0 %v828
        %v983 = vpop.f32.mrb[0].mxu0
        %v984 = vadd.f32 %v860, %v983
        %v985 = vpop.f32.mrb[0].mxu0
        %v986 = vpop.f32.mrb[0].mxu0
        %v987 = vadd.f32 %v860, %v986
        %v988 = vpop.f32.mrb[0].mxu0
        %989 = vmatprep.mubr.bf16.mxu0 0
        %990 = vmatmul.mubr.bf16.gmra.mrb[0].mxu0 %v829
        %v991 = vpop.f32.mrb[0].mxu0
        %v992 = vadd.f32 %v860, %v991
        %v993 = vpop.f32.mrb[0].mxu0
        %v994 = vpop.f32.mrb[0].mxu0
        %v995 = vadd.f32 %v860, %v994
        %v996 = vpop.f32.mrb[0].mxu0
        %997 = vmatprep.mubr.bf16.mxu0 0
        %998 = vmatmul.mubr.bf16.gmra.mrb[0].mxu0 %v830
        %v999 = vpop.f32.mrb[0].mxu0
        %v1000 = vadd.f32 %v860, %v999
        %v1001 = vpop.f32.mrb[0].mxu0
        %v1002 = vpop.f32.mrb[0].mxu0
        %v1003 = vadd.f32 %v860, %v1002
        %v1004 = vpop.f32.mrb[0].mxu0
        %1005 = vmatprep.mubr.bf16.mxu0 0
        %1006 = vmatmul.mubr.bf16.gmra.mrb[0].mxu0 %v831
        %v1007 = vpop.f32.mrb[0].mxu0
        %v1008 = vadd.f32 %v860, %v1007
        %v1009 = vpop.f32.mrb[0].mxu0
        %v1010 = vpop.f32.mrb[0].mxu0
        %v1011 = vadd.f32 %v860, %v1010
        %v1012 = vpop.f32.mrb[0].mxu0
        %1013 = vmatprep.mubr.bf16.mxu0 0
        %1014 = vmatmul.mubr.bf16.gmra.mrb[0].mxu0 %v832
        %v1015 = vpop.f32.mrb[0].mxu0
        %v1016 = vadd.f32 %v860, %v1015
        %v1017 = vpop.f32.mrb[0].mxu0
        %v1018 = vpop.f32.mrb[0].mxu0
        %v1019 = vadd.f32 %v860, %v1018
        %v1020 = vpop.f32.mrb[0].mxu0
        %1021 = vmatprep.mubr.bf16.mxu0 0
        %1022 = vmatmul.mubr.bf16.gmra.mrb[0].mxu0 %v833
        %v1023 = vpop.f32.mrb[0].mxu0
        %v1024 = vadd.f32 %v860, %v1023
        %v1025 = vpop.f32.mrb[0].mxu0
        %v1026 = vpop.f32.mrb[0].mxu0
        %v1027 = vadd.f32 %v860, %v1026
        %v1028 = vpop.f32.mrb[0].mxu0
        %1029 = vmatprep.mubr.bf16.mxu0 0
        %1030 = vmatmul.mubr.bf16.gmra.mrb[0].mxu0 %v834
        %v1031 = vpop.f32.mrb[0].mxu0
        %v1032 = vadd.f32 %v860, %v1031
        %v1033 = vpop.f32.mrb[0].mxu0
        %v1034 = vpop.f32.mrb[0].mxu0
        %v1035 = vadd.f32 %v860, %v1034
        %v1036 = vpop.f32.mrb[0].mxu0
        %1037 = vmatprep.mubr.bf16.mxu0 0
        %1038 = vmatmul.mubr.bf16.gmra.mrb[0].mxu0 %v835
        %v1039 = vpop.f32.mrb[0].mxu0
        %v1040 = vadd.f32 %v860, %v1039
        %v1041 = vpop.f32.mrb[0].mxu0
        %v1042 = vpop.f32.mrb[0].mxu0
        %v1043 = vadd.f32 %v860, %v1042
        %v1044 = vpop.f32.mrb[0].mxu0
        %1045 = vmatprep.mubr.bf16.mxu0 0
        %1046 = vmatmul.mubr.bf16.gmra.mrb[0].mxu0 %v836
        %v1047 = vpop.f32.mrb[0].mxu0
        %v1048 = vadd.f32 %v860, %v1047
        %v1049 = vpop.f32.mrb[0].mxu0
        %v1050 = vpop.f32.mrb[0].mxu0
        %v1051 = vadd.f32 %v860, %v1050
        %v1052 = vpop.f32.mrb[0].mxu0
        %1053 = vmatprep.mubr.bf16.mxu0 0
        %1054 = vmatmul.mubr.bf16.gmra.mrb[0].mxu0 %v837
        %v1055 = vpop.f32.mrb[0].mxu0
        %v1056 = vadd.f32 %v860, %v1055
        %v1057 = vpop.f32.mrb[0].mxu0
        %v1058 = vpop.f32.mrb[0].mxu0
        %v1059 = vadd.f32 %v860, %v1058
        %v1060 = vpop.f32.mrb[0].mxu0
        %1061 = vmatprep.mubr.bf16.mxu0 0
        %1062 = vmatmul.mubr.bf16.gmra.mrb[0].mxu0 %v838
        %v1063 = vpop.f32.mrb[0].mxu0
        %v1064 = vadd.f32 %v860, %v1063
        %v1065 = vpop.f32.mrb[0].mxu0
        %v1066 = vpop.f32.mrb[0].mxu0
        %v1067 = vadd.f32 %v860, %v1066
        %v1068 = vpop.f32.mrb[0].mxu0
        %1069 = vdwg.mxu0
        %v1070 = vmax.f32 %v944, 0.0
        %v1071 = vmax.f32 %v947, 0.0
        %v1072 = vmax.f32 %v952, 0.0
        %v1073 = vmax.f32 %v955, 0.0
        %v1074 = vmax.f32 %v960, 0.0
        %v1075 = vmax.f32 %v963, 0.0
        %v1076 = vmax.f32 %v968, 0.0
        %v1077 = vmax.f32 %v971, 0.0
        %v1078 = vmax.f32 %v976, 0.0
        %v1079 = vmax.f32 %v979, 0.0
        %v1080 = vmax.f32 %v984, 0.0
        %v1081 = vmax.f32 %v987, 0.0
        %v1082 = vmax.f32 %v992, 0.0
        %v1083 = vmax.f32 %v995, 0.0
        %v1084 = vmax.f32 %v1000, 0.0
        %v1085 = vmax.f32 %v1003, 0.0
        %v1086 = vmax.f32 %v1008, 0.0
        %v1087 = vmax.f32 %v1011, 0.0
        %v1088 = vmax.f32 %v1016, 0.0
        %v1089 = vmax.f32 %v1019, 0.0
        %v1090 = vmax.f32 %v1024, 0.0
        %v1091 = vmax.f32 %v1027, 0.0
        %v1092 = vmax.f32 %v1032, 0.0
        %v1093 = vmax.f32 %v1035, 0.0
        %v1094 = vmax.f32 %v1040, 0.0
        %v1095 = vmax.f32 %v1043, 0.0
        %v1096 = vmax.f32 %v1048, 0.0
        %v1097 = vmax.f32 %v1051, 0.0
        %v1098 = vmax.f32 %v1056, 0.0
        %v1099 = vmax.f32 %v1059, 0.0
        %v1100 = vmax.f32 %v1064, 0.0
        %v1101 = vmax.f32 %v1067, 0.0
        %v1102 = vpack.c.bf16 %v1071, %v1070
        %v1103 = vpack.c.bf16 %v1073, %v1072
        %v1104 = vpack.c.bf16 %v1075, %v1074
        %v1105 = vpack.c.bf16 %v1077, %v1076
        %v1106 = vpack.c.bf16 %v1079, %v1078
        %v1107 = vpack.c.bf16 %v1081, %v1080
        %v1108 = vpack.c.bf16 %v1083, %v1082
        %v1109 = vpack.c.bf16 %v1085, %v1084
        %v1110 = vpack.c.bf16 %v1087, %v1086
        %v1111 = vpack.c.bf16 %v1089, %v1088
        %v1112 = vpack.c.bf16 %v1091, %v1090
        %v1113 = vpack.c.bf16 %v1093, %v1092
        %v1114 = vpack.c.bf16 %v1095, %v1094
        %v1115 = vpack.c.bf16 %v1097, %v1096
        %v1116 = vpack.c.bf16 %v1099, %v1098
        %v1117 = vpack.c.bf16 %v1101, %v1100
        %v1118 = vld [vmem:[#allocation8] sm:$0xff]
        %v1119 = vld [vmem:[#allocation8 + $0x8] sm:$0xff]
        %v1122 = vunpack.c.l.b16 %v1118
        %v1123 = vunpack.c.h.b16 %v1118
        %v1124 = vunpack.c.l.b16 %v1119
        %v1125 = vunpack.c.h.b16 %v1119
        %v1126 = vpack.c.b16 %v1124, %v1122
        %v1127 = vpack.c.b16 %v1125, %v1123
        %1130 = vmatprep.subr.bf16.mxu0 0
        %1131 = vmatpush1.bf16.msra.mxu0 %v1102
        %1132 = vmatprep.subr.bf16.mxu0 0
        %1133 = vmatpush1.bf16.msra.mxu0 %v1103
        %1134 = vmatprep.subr.bf16.mxu0 0
        %1135 = vmatpush1.bf16.msra.mxu0 %v1104
        %1136 = vmatprep.subr.bf16.mxu0 0
        %1137 = vmatpush1.bf16.msra.mxu0 %v1105
        %1138 = vmatprep.subr.bf16.mxu0 0
        %1139 = vmatpush1.bf16.msra.mxu0 %v1106
        %1140 = vmatprep.subr.bf16.mxu0 0
        %1141 = vmatpush1.bf16.msra.mxu0 %v1107
        %1142 = vmatprep.subr.bf16.mxu0 0
        %1143 = vmatpush1.bf16.msra.mxu0 %v1108
        %1144 = vmatprep.subr.bf16.mxu0 0
        %1145 = vmatpush1.bf16.msra.mxu0 %v1109
        %1146 = vmatprep.subr.bf16.mxu0 0
        %1147 = vmatpush1.bf16.msra.mxu0 %v1110
        %1148 = vmatprep.subr.bf16.mxu0 0
        %1149 = vmatpush1.bf16.msra.mxu0 %v1111
        %1150 = vmatprep.subr.bf16.mxu0 0
        %1151 = vmatpush1.bf16.msra.mxu0 %v1112
        %1152 = vmatprep.subr.bf16.mxu0 0
        %1153 = vmatpush1.bf16.msra.mxu0 %v1113
        %1154 = vmatprep.subr.bf16.mxu0 0
        %1155 = vmatpush1.bf16.msra.mxu0 %v1114
        %1156 = vmatprep.subr.bf16.mxu0 0
        %1157 = vmatpush1.bf16.msra.mxu0 %v1115
        %1158 = vmatprep.subr.bf16.mxu0 0
        %1159 = vmatpush1.bf16.msra.mxu0 %v1116
        %1160 = vmatprep.subr.bf16.mxu0 0
        %1161 = vmatpush1.bf16.msra.mxu0 %v1117
        %1162 = vmatprep.mubr.bf16.mxu0 %v1127
        %1163 = vmatmul.mubr.bf16.gmra.mrb[0].mxu0 %v1126
        %v1164 = vpop.f32.mrb[0].mxu0
        %v1165 = vadd.f32 0.0, %v1164
        %v1166 = vpop.f32.mrb[0].mxu0
        %v1167 = vpop.f32.mrb[0].mxu0
        %v1168 = vadd.f32 0.0, %v1167
        %v1169 = vpop.f32.mrb[0].mxu0
        %1170 = vdwg.mxu0
        %v1171 = vld [vmem:[#allocation10] sm:$0xff]
        %v1172 = vld [vmem:[#allocation10 + $0x8] sm:$0xff]
        %v1173 = vmul.f32 %v1165, %v1171
        %v1174 = vmul.f32 %v1168, %v1172
        %v1175 = vpack.c.bf16 %v1174, %v1173
        %v1176 = vld [vmem:[%s4] sm:$0xf]
        %v1177 = vld [vmem:[%s4 + $0x4] sm:$0xf]
        %v1178 = vld [vmem:[%s4 + $0x8] sm:$0xf]
        %v1179 = vld [vmem:[%s4 + $0xc] sm:$0xf]
        %v1180 = vld [vmem:[%s4 + $0x10] sm:$0xf]
        %v1181 = vld [vmem:[%s4 + $0x14] sm:$0xf]
        %v1182 = vld [vmem:[%s4 + $0x18] sm:$0xf]
        %v1183 = vld [vmem:[%s4 + $0x1c] sm:$0xf]
        %v1184 = vld [vmem:[%s4 + $0x20] sm:$0xf]
        %v1185 = vld [vmem:[%s4 + $0x24] sm:$0xf]
        %v1186 = vld [vmem:[%s4 + $0x28] sm:$0xf]
        %v1187 = vld [vmem:[%s4 + $0x2c] sm:$0xf]
        %v1188 = vld [vmem:[%s4 + $0x30] sm:$0xf]
        %v1189 = vld [vmem:[%s4 + $0x34] sm:$0xf]
        %v1190 = vld [vmem:[%s4 + $0x38] sm:$0xf]
        %v1191 = vld [vmem:[%s4 + $0x3c] sm:$0xf]
        %v1192 = vld [vmem:[%s4 + $0x40] sm:$0xf]
        %v1193 = vld [vmem:[%s4 + $0x44] sm:$0xf]
        %v1194 = vld [vmem:[%s4 + $0x48] sm:$0xf]
        %v1195 = vld [vmem:[%s4 + $0x4c] sm:$0xf]
        %v1196 = vld [vmem:[%s4 + $0x50] sm:$0xf]
        %v1197 = vld [vmem:[%s4 + $0x54] sm:$0xf]
        %v1198 = vld [vmem:[%s4 + $0x58] sm:$0xf]
        %v1199 = vld [vmem:[%s4 + $0x5c] sm:$0xf]
        %v1200 = vld [vmem:[%s4 + $0x60] sm:$0xf]
        %v1201 = vld [vmem:[%s4 + $0x64] sm:$0xf]
        %v1202 = vld [vmem:[%s4 + $0x68] sm:$0xf]
        %v1203 = vld [vmem:[%s4 + $0x6c] sm:$0xf]
        %v1204 = vld [vmem:[%s4 + $0x70] sm:$0xf]
        %v1205 = vld [vmem:[%s4 + $0x74] sm:$0xf]
        %v1206 = vld [vmem:[%s4 + $0x78] sm:$0xf]
        %v1207 = vld [vmem:[%s4 + $0x7c] sm:$0xf]
        %v1240 = vunpack.c.l.b16 %v1176
        %v1241 = vunpack.c.l.b16 %v1177
        %v1242 = vunpack.c.l.b16 %v1178
        %v1243 = vunpack.c.l.b16 %v1179
        %v1244 = vunpack.c.l.b16 %v1180
        %v1245 = vunpack.c.l.b16 %v1181
        %v1246 = vunpack.c.l.b16 %v1182
        %v1247 = vunpack.c.l.b16 %v1183
        %v1248 = vunpack.c.l.b16 %v1184
        %v1249 = vunpack.c.l.b16 %v1185
        %v1250 = vunpack.c.l.b16 %v1186
        %v1251 = vunpack.c.l.b16 %v1187
        %v1252 = vunpack.c.l.b16 %v1188
        %v1253 = vunpack.c.l.b16 %v1189
        %v1254 = vunpack.c.l.b16 %v1190
        %v1255 = vunpack.c.l.b16 %v1191
        %v1256 = vunpack.c.l.b16 %v1192
        %v1257 = vunpack.c.l.b16 %v1193
        %v1258 = vunpack.c.l.b16 %v1194
        %v1259 = vunpack.c.l.b16 %v1195
        %v1260 = vunpack.c.l.b16 %v1196
        %v1261 = vunpack.c.l.b16 %v1197
        %v1262 = vunpack.c.l.b16 %v1198
        %v1263 = vunpack.c.l.b16 %v1199
        %v1264 = vunpack.c.l.b16 %v1200
        %v1265 = vunpack.c.l.b16 %v1201
        %v1266 = vunpack.c.l.b16 %v1202
        %v1267 = vunpack.c.l.b16 %v1203
        %v1268 = vunpack.c.l.b16 %v1204
        %v1269 = vunpack.c.l.b16 %v1205
        %v1270 = vunpack.c.l.b16 %v1206
        %v1271 = vunpack.c.l.b16 %v1207
        %v1272 = vpack.c.b16 %v1241, %v1240
        %v1273 = vpack.c.b16 %v1243, %v1242
        %v1274 = vpack.c.b16 %v1245, %v1244
        %v1275 = vpack.c.b16 %v1247, %v1246
        %v1276 = vpack.c.b16 %v1249, %v1248
        %v1277 = vpack.c.b16 %v1251, %v1250
        %v1278 = vpack.c.b16 %v1253, %v1252
        %v1279 = vpack.c.b16 %v1255, %v1254
        %v1280 = vpack.c.b16 %v1257, %v1256
        %v1281 = vpack.c.b16 %v1259, %v1258
        %v1282 = vpack.c.b16 %v1261, %v1260
        %v1283 = vpack.c.b16 %v1263, %v1262
        %v1284 = vpack.c.b16 %v1265, %v1264
        %v1285 = vpack.c.b16 %v1267, %v1266
        %v1286 = vpack.c.b16 %v1269, %v1268
        %v1287 = vpack.c.b16 %v1271, %v1270
        %vm1288 = vcmask 130048
        %v1290 = vsel %vm1288, %v1272, 0
        %v1293 = vsel %vm1288, %v1273, 0
        %v1296 = vsel %vm1288, %v1274, 0
        %v1299 = vsel %vm1288, %v1275, 0
        %v1302 = vsel %vm1288, %v1276, 0
        %v1305 = vsel %vm1288, %v1277, 0
        %v1308 = vsel %vm1288, %v1278, 0
        %v1311 = vsel %vm1288, %v1279, 0
        %v1314 = vsel %vm1288, %v1280, 0
        %v1317 = vsel %vm1288, %v1281, 0
        %v1320 = vsel %vm1288, %v1282, 0
        %v1323 = vsel %vm1288, %v1283, 0
        %v1326 = vsel %vm1288, %v1284, 0
        %v1329 = vsel %vm1288, %v1285, 0
        %v1332 = vsel %vm1288, %v1286, 0
        %v1335 = vsel %vm1288, %v1287, 0
        %1337 = vmatprep.subr.bf16.mxu0 0
        %1338 = vmatpush1.bf16.msra.mxu0 %v1175
        %1339 = vmatprep.subr.bf16.mxu0 0
        %1340 = vmatpush1.bf16.msra.mxu0 0
        %1341 = vmatprep.subr.bf16.mxu0 0
        %1342 = vmatpush1.bf16.msra.mxu0 0
        %1343 = vmatprep.subr.bf16.mxu0 0
        %1344 = vmatpush1.bf16.msra.mxu0 0
        %1345 = vmatprep.subr.bf16.mxu0 0
        %1346 = vmatpush1.bf16.msra.mxu0 0
        %1347 = vmatprep.subr.bf16.mxu0 0
        %1348 = vmatpush1.bf16.msra.mxu0 0
        %1349 = vmatprep.subr.bf16.mxu0 0
        %1350 = vmatpush1.bf16.msra.mxu0 0
        %1351 = vmatprep.subr.bf16.mxu0 0
        %1352 = vmatpush1.bf16.msra.mxu0 0
        %1353 = vmatprep.subr.bf16.mxu0 0
        %1354 = vmatpush1.bf16.msra.mxu0 0
        %1355 = vmatprep.subr.bf16.mxu0 0
        %1356 = vmatpush1.bf16.msra.mxu0 0
        %1357 = vmatprep.subr.bf16.mxu0 0
        %1358 = vmatpush1.bf16.msra.mxu0 0
        %1359 = vmatprep.subr.bf16.mxu0 0
        %1360 = vmatpush1.bf16.msra.mxu0 0
        %1361 = vmatprep.subr.bf16.mxu0 0
        %1362 = vmatpush1.bf16.msra.mxu0 0
        %1363 = vmatprep.subr.bf16.mxu0 0
        %1364 = vmatpush1.bf16.msra.mxu0 0
        %1365 = vmatprep.subr.bf16.mxu0 0
        %1366 = vmatpush1.bf16.msra.mxu0 0
        %1367 = vmatprep.subr.bf16.mxu0 0
        %1368 = vmatpush1.bf16.msra.mxu0 0
        %1369 = vmatprep.mubr.bf16.mxu0 0
        %1370 = vmatmul.mubr.bf16.gmra.mrb[0].mxu0 %v1290
        %v1371 = vpop.f32.mrb[0].mxu0
        %v1372 = vadd.f32 0.0, %v1371
        %v1373 = vpop.f32.mrb[0].mxu0
        %v1374 = vpop.f32.mrb[0].mxu0
        %v1375 = vadd.f32 0.0, %v1374
        %v1376 = vpop.f32.mrb[0].mxu0
        %1377 = vmatprep.mubr.bf16.mxu0 0
        %1378 = vmatmul.mubr.bf16.gmra.mrb[0].mxu0 %v1293
        %v1379 = vpop.f32.mrb[0].mxu0
        %v1380 = vadd.f32 0.0, %v1379
        %v1381 = vpop.f32.mrb[0].mxu0
        %v1382 = vpop.f32.mrb[0].mxu0
        %v1383 = vadd.f32 0.0, %v1382
        %v1384 = vpop.f32.mrb[0].mxu0
        %1385 = vmatprep.mubr.bf16.mxu0 0
        %1386 = vmatmul.mubr.bf16.gmra.mrb[0].mxu0 %v1296
        %v1387 = vpop.f32.mrb[0].mxu0
        %v1388 = vadd.f32 0.0, %v1387
        %v1389 = vpop.f32.mrb[0].mxu0
        %v1390 = vpop.f32.mrb[0].mxu0
        %v1391 = vadd.f32 0.0, %v1390
        %v1392 = vpop.f32.mrb[0].mxu0
        %1393 = vmatprep.mubr.bf16.mxu0 0
        %1394 = vmatmul.mubr.bf16.gmra.mrb[0].mxu0 %v1299
        %v1395 = vpop.f32.mrb[0].mxu0
        %v1396 = vadd.f32 0.0, %v1395
        %v1397 = vpop.f32.mrb[0].mxu0
        %v1398 = vpop.f32.mrb[0].mxu0
        %v1399 = vadd.f32 0.0, %v1398
        %v1400 = vpop.f32.mrb[0].mxu0
        %1401 = vmatprep.mubr.bf16.mxu0 0
        %1402 = vmatmul.mubr.bf16.gmra.mrb[0].mxu0 %v1302
        %v1403 = vpop.f32.mrb[0].mxu0
        %v1404 = vadd.f32 0.0, %v1403
        %v1405 = vpop.f32.mrb[0].mxu0
        %v1406 = vpop.f32.mrb[0].mxu0
        %v1407 = vadd.f32 0.0, %v1406
        %v1408 = vpop.f32.mrb[0].mxu0
        %1409 = vmatprep.mubr.bf16.mxu0 0
        %1410 = vmatmul.mubr.bf16.gmra.mrb[0].mxu0 %v1305
        %v1411 = vpop.f32.mrb[0].mxu0
        %v1412 = vadd.f32 0.0, %v1411
        %v1413 = vpop.f32.mrb[0].mxu0
        %v1414 = vpop.f32.mrb[0].mxu0
        %v1415 = vadd.f32 0.0, %v1414
        %v1416 = vpop.f32.mrb[0].mxu0
        %1417 = vmatprep.mubr.bf16.mxu0 0
        %1418 = vmatmul.mubr.bf16.gmra.mrb[0].mxu0 %v1308
        %v1419 = vpop.f32.mrb[0].mxu0
        %v1420 = vadd.f32 0.0, %v1419
        %v1421 = vpop.f32.mrb[0].mxu0
        %v1422 = vpop.f32.mrb[0].mxu0
        %v1423 = vadd.f32 0.0, %v1422
        %v1424 = vpop.f32.mrb[0].mxu0
        %1425 = vmatprep.mubr.bf16.mxu0 0
        %1426 = vmatmul.mubr.bf16.gmra.mrb[0].mxu0 %v1311
        %v1427 = vpop.f32.mrb[0].mxu0
        %v1428 = vadd.f32 0.0, %v1427
        %v1429 = vpop.f32.mrb[0].mxu0
        %v1430 = vpop.f32.mrb[0].mxu0
        %v1431 = vadd.f32 0.0, %v1430
        %v1432 = vpop.f32.mrb[0].mxu0
        %1433 = vmatprep.mubr.bf16.mxu0 0
        %1434 = vmatmul.mubr.bf16.gmra.mrb[0].mxu0 %v1314
        %v1435 = vpop.f32.mrb[0].mxu0
        %v1436 = vadd.f32 0.0, %v1435
        %v1437 = vpop.f32.mrb[0].mxu0
        %v1438 = vpop.f32.mrb[0].mxu0
        %v1439 = vadd.f32 0.0, %v1438
        %v1440 = vpop.f32.mrb[0].mxu0
        %1441 = vmatprep.mubr.bf16.mxu0 0
        %1442 = vmatmul.mubr.bf16.gmra.mrb[0].mxu0 %v1317
        %v1443 = vpop.f32.mrb[0].mxu0
        %v1444 = vadd.f32 0.0, %v1443
        %v1445 = vpop.f32.mrb[0].mxu0
        %v1446 = vpop.f32.mrb[0].mxu0
        %v1447 = vadd.f32 0.0, %v1446
        %v1448 = vpop.f32.mrb[0].mxu0
        %1449 = vmatprep.mubr.bf16.mxu0 0
        %1450 = vmatmul.mubr.bf16.gmra.mrb[0].mxu0 %v1320
        %v1451 = vpop.f32.mrb[0].mxu0
        %v1452 = vadd.f32 0.0, %v1451
        %v1453 = vpop.f32.mrb[0].mxu0
        %v1454 = vpop.f32.mrb[0].mxu0
        %v1455 = vadd.f32 0.0, %v1454
        %v1456 = vpop.f32.mrb[0].mxu0
        %1457 = vmatprep.mubr.bf16.mxu0 0
        %1458 = vmatmul.mubr.bf16.gmra.mrb[0].mxu0 %v1323
        %v1459 = vpop.f32.mrb[0].mxu0
        %v1460 = vadd.f32 0.0, %v1459
        %v1461 = vpop.f32.mrb[0].mxu0
        %v1462 = vpop.f32.mrb[0].mxu0
        %v1463 = vadd.f32 0.0, %v1462
        %v1464 = vpop.f32.mrb[0].mxu0
        %1465 = vmatprep.mubr.bf16.mxu0 0
        %1466 = vmatmul.mubr.bf16.gmra.mrb[0].mxu0 %v1326
        %v1467 = vpop.f32.mrb[0].mxu0
        %v1468 = vadd.f32 0.0, %v1467
        %v1469 = vpop.f32.mrb[0].mxu0
        %v1470 = vpop.f32.mrb[0].mxu0
        %v1471 = vadd.f32 0.0, %v1470
        %v1472 = vpop.f32.mrb[0].mxu0
        %1473 = vmatprep.mubr.bf16.mxu0 0
        %1474 = vmatmul.mubr.bf16.gmra.mrb[0].mxu0 %v1329
        %v1475 = vpop.f32.mrb[0].mxu0
        %v1476 = vadd.f32 0.0, %v1475
        %v1477 = vpop.f32.mrb[0].mxu0
        %v1478 = vpop.f32.mrb[0].mxu0
        %v1479 = vadd.f32 0.0, %v1478
        %v1480 = vpop.f32.mrb[0].mxu0
        %1481 = vmatprep.mubr.bf16.mxu0 0
        %1482 = vmatmul.mubr.bf16.gmra.mrb[0].mxu0 %v1332
        %v1483 = vpop.f32.mrb[0].mxu0
        %v1484 = vadd.f32 0.0, %v1483
        %v1485 = vpop.f32.mrb[0].mxu0
        %v1486 = vpop.f32.mrb[0].mxu0
        %v1487 = vadd.f32 0.0, %v1486
        %v1488 = vpop.f32.mrb[0].mxu0
        %1489 = vmatprep.mubr.bf16.mxu0 0
        %1490 = vmatmul.mubr.bf16.gmra.mrb[0].mxu0 %v1335
        %v1491 = vpop.f32.mrb[0].mxu0
        %v1492 = vadd.f32 0.0, %v1491
        %v1493 = vpop.f32.mrb[0].mxu0
        %v1494 = vpop.f32.mrb[0].mxu0
        %v1495 = vadd.f32 0.0, %v1494
        %v1496 = vpop.f32.mrb[0].mxu0
        %1497 = vdwg.mxu0
        %v1498 = vsub.f32 %v1070, %v1372
        %v1499 = vsub.f32 %v1071, %v1375
        %v1500 = vsub.f32 %v1072, %v1380
        %v1501 = vsub.f32 %v1073, %v1383
        %v1502 = vsub.f32 %v1074, %v1388
        %v1503 = vsub.f32 %v1075, %v1391
        %v1504 = vsub.f32 %v1076, %v1396
        %v1505 = vsub.f32 %v1077, %v1399
        %v1506 = vsub.f32 %v1078, %v1404
        %v1507 = vsub.f32 %v1079, %v1407
        %v1508 = vsub.f32 %v1080, %v1412
        %v1509 = vsub.f32 %v1081, %v1415
        %v1510 = vsub.f32 %v1082, %v1420
        %v1511 = vsub.f32 %v1083, %v1423
        %v1512 = vsub.f32 %v1084, %v1428
        %v1513 = vsub.f32 %v1085, %v1431
        %v1514 = vsub.f32 %v1086, %v1436
        %v1515 = vsub.f32 %v1087, %v1439
        %v1516 = vsub.f32 %v1088, %v1444
        %v1517 = vsub.f32 %v1089, %v1447
        %v1518 = vsub.f32 %v1090, %v1452
        %v1519 = vsub.f32 %v1091, %v1455
        %v1520 = vsub.f32 %v1092, %v1460
        %v1521 = vsub.f32 %v1093, %v1463
        %v1522 = vsub.f32 %v1094, %v1468
        %v1523 = vsub.f32 %v1095, %v1471
        %v1524 = vsub.f32 %v1096, %v1476
        %v1525 = vsub.f32 %v1097, %v1479
        %v1526 = vsub.f32 %v1098, %v1484
        %v1527 = vsub.f32 %v1099, %v1487
        %v1528 = vsub.f32 %v1100, %v1492
        %v1529 = vsub.f32 %v1101, %v1495
        %v1530 = vpack.c.bf16 %v1499, %v1498
        %v1531 = vpack.c.bf16 %v1501, %v1500
        %v1532 = vpack.c.bf16 %v1503, %v1502
        %v1533 = vpack.c.bf16 %v1505, %v1504
        %v1534 = vpack.c.bf16 %v1507, %v1506
        %v1535 = vpack.c.bf16 %v1509, %v1508
        %v1536 = vpack.c.bf16 %v1511, %v1510
        %v1537 = vpack.c.bf16 %v1513, %v1512
        %v1538 = vpack.c.bf16 %v1515, %v1514
        %v1539 = vpack.c.bf16 %v1517, %v1516
        %v1540 = vpack.c.bf16 %v1519, %v1518
        %v1541 = vpack.c.bf16 %v1521, %v1520
        %v1542 = vpack.c.bf16 %v1523, %v1522
        %v1543 = vpack.c.bf16 %v1525, %v1524
        %v1544 = vpack.c.bf16 %v1527, %v1526
        %v1545 = vpack.c.bf16 %v1529, %v1528
        %v1546 = vmul.bf16 %v1530, %v1530
        %v1547 = vmul.bf16 %v1531, %v1531
        %v1548 = vmul.bf16 %v1532, %v1532
        %v1549 = vmul.bf16 %v1533, %v1533
        %v1550 = vmul.bf16 %v1534, %v1534
        %v1551 = vmul.bf16 %v1535, %v1535
        %v1552 = vmul.bf16 %v1536, %v1536
        %v1553 = vmul.bf16 %v1537, %v1537
        %v1554 = vmul.bf16 %v1538, %v1538
        %v1555 = vmul.bf16 %v1539, %v1539
        %v1556 = vmul.bf16 %v1540, %v1540
        %v1557 = vmul.bf16 %v1541, %v1541
        %v1558 = vmul.bf16 %v1542, %v1542
        %v1559 = vmul.bf16 %v1543, %v1543
        %v1560 = vmul.bf16 %v1544, %v1544
        %v1561 = vmul.bf16 %v1545, %v1545
        %1562 = vmatprep.subr.bf16.mxu0 0
        %1563 = vmatpush1.bf16.msra.mxu0 %v1546
        %1564 = vmatprep.subr.bf16.mxu0 0
        %1565 = vmatpush1.bf16.msra.mxu0 %v1547
        %1566 = vmatprep.subr.bf16.mxu0 0
        %1567 = vmatpush1.bf16.msra.mxu0 %v1548
        %1568 = vmatprep.subr.bf16.mxu0 0
        %1569 = vmatpush1.bf16.msra.mxu0 %v1549
        %1570 = vmatprep.subr.bf16.mxu0 0
        %1571 = vmatpush1.bf16.msra.mxu0 %v1550
        %1572 = vmatprep.subr.bf16.mxu0 0
        %1573 = vmatpush1.bf16.msra.mxu0 %v1551
        %1574 = vmatprep.subr.bf16.mxu0 0
        %1575 = vmatpush1.bf16.msra.mxu0 %v1552
        %1576 = vmatprep.subr.bf16.mxu0 0
        %1577 = vmatpush1.bf16.msra.mxu0 %v1553
        %1578 = vmatprep.subr.bf16.mxu0 0
        %1579 = vmatpush1.bf16.msra.mxu0 %v1554
        %1580 = vmatprep.subr.bf16.mxu0 0
        %1581 = vmatpush1.bf16.msra.mxu0 %v1555
        %1582 = vmatprep.subr.bf16.mxu0 0
        %1583 = vmatpush1.bf16.msra.mxu0 %v1556
        %1584 = vmatprep.subr.bf16.mxu0 0
        %1585 = vmatpush1.bf16.msra.mxu0 %v1557
        %1586 = vmatprep.subr.bf16.mxu0 0
        %1587 = vmatpush1.bf16.msra.mxu0 %v1558
        %1588 = vmatprep.subr.bf16.mxu0 0
        %1589 = vmatpush1.bf16.msra.mxu0 %v1559
        %1590 = vmatprep.subr.bf16.mxu0 0
        %1591 = vmatpush1.bf16.msra.mxu0 %v1560
        %1592 = vmatprep.subr.bf16.mxu0 0
        %1593 = vmatpush1.bf16.msra.mxu0 %v1561
        %1594 = vmatprep.mubr.bf16.mxu0 %v1127
        %1595 = vmatmul.mubr.bf16.gmra.mrb[0].mxu0 %v1126
        %v1596 = vpop.f32.mrb[0].mxu0
        %v1597 = vadd.f32 0.0, %v1596
        %v1598 = vpop.f32.mrb[0].mxu0
        %v1599 = vpop.f32.mrb[0].mxu0
        %v1600 = vadd.f32 0.0, %v1599
        %v1601 = vpop.f32.mrb[0].mxu0
        %1602 = vdwg.mxu0
        %s1603 = scalar_lea.vmem [#allocation10], 16
        %v1604 = vld [vmem:[%s1603] sm:$0xff]
        %v1605 = vld [vmem:[%s1603 + $0x8] sm:$0xff]
        %v1606 = vmul.f32 %v1597, %v1604
        %v1607 = vmul.f32 %v1600, %v1605
        %v1608 = vadd.f32 %v1606, 1e-31
        %v1609 = vadd.f32 %v1607, 1e-31
        %v1610 = vrsqrt.pop %v1608
        %v1611 = vmul.f32 %v1608, %v1610
        %vm1612 = vcmp.eq.f32.partialorder %v1608, inf
        %v1613 = vsel %vm1612, %v1608, %v1611
        %vm1614 = vcmp.eq.f32.partialorder %v1608, 0.0
        %v1615 = vand.u32 %v1608, 2147483648
        %v1616 = vsel %vm1614, %v1615, %v1613
        %v1617 = vrsqrt.pop %v1609
        %v1618 = vmul.f32 %v1609, %v1617
        %vm1619 = vcmp.eq.f32.partialorder %v1609, inf
        %v1620 = vsel %vm1619, %v1609, %v1618
        %vm1621 = vcmp.eq.f32.partialorder %v1609, 0.0
        %v1622 = vand.u32 %v1609, 2147483648
        %v1623 = vsel %vm1621, %v1622, %v1620
        %s1624 = scalar_lea.vmem %s385, 128 [#allocation11]
        %v1625 = vld [vmem:[%s1624] sm:$0xf]
        %v1626 = vld [vmem:[%s1624 + $0x4] sm:$0xf]
        %v1627 = vld [vmem:[%s1624 + $0x8] sm:$0xf]
        %v1628 = vld [vmem:[%s1624 + $0xc] sm:$0xf]
        %v1629 = vld [vmem:[%s1624 + $0x10] sm:$0xf]
        %v1630 = vld [vmem:[%s1624 + $0x14] sm:$0xf]
        %v1631 = vld [vmem:[%s1624 + $0x18] sm:$0xf]
        %v1632 = vld [vmem:[%s1624 + $0x1c] sm:$0xf]
        %v1633 = vld [vmem:[%s1624 + $0x20] sm:$0xf]
        %v1634 = vld [vmem:[%s1624 + $0x24] sm:$0xf]
        %v1635 = vld [vmem:[%s1624 + $0x28] sm:$0xf]
        %v1636 = vld [vmem:[%s1624 + $0x2c] sm:$0xf]
        %v1637 = vld [vmem:[%s1624 + $0x30] sm:$0xf]
        %v1638 = vld [vmem:[%s1624 + $0x34] sm:$0xf]
        %v1639 = vld [vmem:[%s1624 + $0x38] sm:$0xf]
        %v1640 = vld [vmem:[%s1624 + $0x3c] sm:$0xf]
        %v1641 = vpack.c.bf16 %v1623, %v1616
        %s1642 = scalar_lea.vmem %s385, 192 [#allocation11]
        %v1643 = vld [vmem:[%s1642] sm:$0xf]
        %v1644 = vld [vmem:[%s1642 + $0x4] sm:$0xf]
        %v1645 = vld [vmem:[%s1642 + $0x8] sm:$0xf]
        %v1646 = vld [vmem:[%s1642 + $0xc] sm:$0xf]
        %v1647 = vld [vmem:[%s1642 + $0x10] sm:$0xf]
        %v1648 = vld [vmem:[%s1642 + $0x14] sm:$0xf]
        %v1649 = vld [vmem:[%s1642 + $0x18] sm:$0xf]
        %v1650 = vld [vmem:[%s1642 + $0x1c] sm:$0xf]
        %v1651 = vld [vmem:[%s1642 + $0x20] sm:$0xf]
        %v1652 = vld [vmem:[%s1642 + $0x24] sm:$0xf]
        %v1653 = vld [vmem:[%s1642 + $0x28] sm:$0xf]
        %v1654 = vld [vmem:[%s1642 + $0x2c] sm:$0xf]
        %v1655 = vld [vmem:[%s1642 + $0x30] sm:$0xf]
        %v1656 = vld [vmem:[%s1642 + $0x34] sm:$0xf]
        %v1657 = vld [vmem:[%s1642 + $0x38] sm:$0xf]
        %v1658 = vld [vmem:[%s1642 + $0x3c] sm:$0xf]
        %v1675 = vunpack.c.l.b16 %v1643
        %v1676 = vunpack.c.l.b16 %v1644
        %v1677 = vunpack.c.l.b16 %v1645
        %v1678 = vunpack.c.l.b16 %v1646
        %v1679 = vunpack.c.l.b16 %v1647
        %v1680 = vunpack.c.l.b16 %v1648
        %v1681 = vunpack.c.l.b16 %v1649
        %v1682 = vunpack.c.l.b16 %v1650
        %v1683 = vunpack.c.l.b16 %v1651
        %v1684 = vunpack.c.l.b16 %v1652
        %v1685 = vunpack.c.l.b16 %v1653
        %v1686 = vunpack.c.l.b16 %v1654
        %v1687 = vunpack.c.l.b16 %v1655
        %v1688 = vunpack.c.l.b16 %v1656
        %v1689 = vunpack.c.l.b16 %v1657
        %v1690 = vunpack.c.l.b16 %v1658
        %v1691 = vpack.c.b16 %v1676, %v1675
        %v1692 = vpack.c.b16 %v1678, %v1677
        %v1693 = vpack.c.b16 %v1680, %v1679
        %v1694 = vpack.c.b16 %v1682, %v1681
        %v1695 = vpack.c.b16 %v1684, %v1683
        %v1696 = vpack.c.b16 %v1686, %v1685
        %v1697 = vpack.c.b16 %v1688, %v1687
        %v1698 = vpack.c.b16 %v1690, %v1689
        %1707 = vmatprep.subr.bf16.mxu0 0
        %1708 = vmatpush1.bf16.msra.mxu0 %v1691
        %1709 = vmatprep.subr.bf16.mxu0 0
        %1710 = vmatpush1.bf16.msra.mxu0 %v1692
        %1711 = vmatprep.subr.bf16.mxu0 0
        %1712 = vmatpush1.bf16.msra.mxu0 %v1693
        %1713 = vmatprep.subr.bf16.mxu0 0
        %1714 = vmatpush1.bf16.msra.mxu0 %v1694
        %1715 = vmatprep.subr.bf16.mxu0 0
        %1716 = vmatpush1.bf16.msra.mxu0 %v1695
        %1717 = vmatprep.subr.bf16.mxu0 0
        %1718 = vmatpush1.bf16.msra.mxu0 %v1696
        %1719 = vmatprep.subr.bf16.mxu0 0
        %1720 = vmatpush1.bf16.msra.mxu0 %v1697
        %1721 = vmatprep.subr.bf16.mxu0 0
        %1722 = vmatpush1.bf16.msra.mxu0 %v1698
        %1723 = vmatprep.subr.bf16.mxu0 0
        %1724 = vmatpush1.bf16.msra.mxu0 0
        %1725 = vmatprep.subr.bf16.mxu0 0
        %1726 = vmatpush1.bf16.msra.mxu0 0
        %1727 = vmatprep.subr.bf16.mxu0 0
        %1728 = vmatpush1.bf16.msra.mxu0 0
        %1729 = vmatprep.subr.bf16.mxu0 0
        %1730 = vmatpush1.bf16.msra.mxu0 0
        %1731 = vmatprep.subr.bf16.mxu0 0
        %1732 = vmatpush1.bf16.msra.mxu0 0
        %1733 = vmatprep.subr.bf16.mxu0 0
        %1734 = vmatpush1.bf16.msra.mxu0 0
        %1735 = vmatprep.subr.bf16.mxu0 0
        %1736 = vmatpush1.bf16.msra.mxu0 0
        %1737 = vmatprep.subr.bf16.mxu0 0
        %1738 = vmatpush1.bf16.msra.mxu0 0
        %1739 = vmatprep.mubr.bf16.mxu0 0
        %1740 = vmatmul.mubr.bf16.gmra.mrb[0].mxu0 %v1641
        %v1741 = vpop.f32.mrb[0].mxu0
        %v1742 = vadd.f32 0.0, %v1741
        %v1743 = vpop.f32.mrb[0].mxu0
        %v1744 = vpop.f32.mrb[0].mxu0
        %v1745 = vadd.f32 0.0, %v1744
        %v1746 = vpop.f32.mrb[0].mxu0
        %1747 = vdwg.mxu0
        %v1764 = vunpack.c.l.b16 %v1625
        %v1765 = vunpack.c.l.b16 %v1626
        %v1766 = vunpack.c.l.b16 %v1627
        %v1767 = vunpack.c.l.b16 %v1628
        %v1768 = vunpack.c.l.b16 %v1629
        %v1769 = vunpack.c.l.b16 %v1630
        %v1770 = vunpack.c.l.b16 %v1631
        %v1771 = vunpack.c.l.b16 %v1632
        %v1772 = vunpack.c.l.b16 %v1633
        %v1773 = vunpack.c.l.b16 %v1634
        %v1774 = vunpack.c.l.b16 %v1635
        %v1775 = vunpack.c.l.b16 %v1636
        %v1776 = vunpack.c.l.b16 %v1637
        %v1777 = vunpack.c.l.b16 %v1638
        %v1778 = vunpack.c.l.b16 %v1639
        %v1779 = vunpack.c.l.b16 %v1640
        %v1780 = vpack.c.b16 %v1765, %v1764
        %v1781 = vpack.c.b16 %v1767, %v1766
        %v1782 = vpack.c.b16 %v1769, %v1768
        %v1783 = vpack.c.b16 %v1771, %v1770
        %v1784 = vpack.c.b16 %v1773, %v1772
        %v1785 = vpack.c.b16 %v1775, %v1774
        %v1786 = vpack.c.b16 %v1777, %v1776
        %v1787 = vpack.c.b16 %v1779, %v1778
        %1796 = vmatprep.subr.bf16.mxu0 0
        %1797 = vmatpush1.bf16.msra.mxu0 %v1780
        %1798 = vmatprep.subr.bf16.mxu0 0
        %1799 = vmatpush1.bf16.msra.mxu0 %v1781
        %1800 = vmatprep.subr.bf16.mxu0 0
        %1801 = vmatpush1.bf16.msra.mxu0 %v1782
        %1802 = vmatprep.subr.bf16.mxu0 0
        %1803 = vmatpush1.bf16.msra.mxu0 %v1783
        %1804 = vmatprep.subr.bf16.mxu0 0
        %1805 = vmatpush1.bf16.msra.mxu0 %v1784
        %1806 = vmatprep.subr.bf16.mxu0 0
        %1807 = vmatpush1.bf16.msra.mxu0 %v1785
        %1808 = vmatprep.subr.bf16.mxu0 0
        %1809 = vmatpush1.bf16.msra.mxu0 %v1786
        %1810 = vmatprep.subr.bf16.mxu0 0
        %1811 = vmatpush1.bf16.msra.mxu0 %v1787
        %1812 = vmatprep.subr.bf16.mxu0 0
        %1813 = vmatpush1.bf16.msra.mxu0 0
        %1814 = vmatprep.subr.bf16.mxu0 0
        %1815 = vmatpush1.bf16.msra.mxu0 0
        %1816 = vmatprep.subr.bf16.mxu0 0
        %1817 = vmatpush1.bf16.msra.mxu0 0
        %1818 = vmatprep.subr.bf16.mxu0 0
        %1819 = vmatpush1.bf16.msra.mxu0 0
        %1820 = vmatprep.subr.bf16.mxu0 0
        %1821 = vmatpush1.bf16.msra.mxu0 0
        %1822 = vmatprep.subr.bf16.mxu0 0
        %1823 = vmatpush1.bf16.msra.mxu0 0
        %1824 = vmatprep.subr.bf16.mxu0 0
        %1825 = vmatpush1.bf16.msra.mxu0 0
        %1826 = vmatprep.subr.bf16.mxu0 0
        %1827 = vmatpush1.bf16.msra.mxu0 0
        %1828 = vmatprep.mubr.bf16.mxu0 0
        %1829 = vmatmul.mubr.bf16.gmra.mrb[0].mxu0 %v1175
        %v1830 = vpop.f32.mrb[0].mxu0
        %v1831 = vadd.f32 %v1742, %v1830
        %v1832 = vpop.f32.mrb[0].mxu0
        %v1833 = vpop.f32.mrb[0].mxu0
        %v1834 = vadd.f32 %v1745, %v1833
        %v1835 = vpop.f32.mrb[0].mxu0
        %1836 = vdwg.mxu0
        %v1837 = vld [vmem:[#allocation5] sm:$0xf]
        %v1838 = vld [vmem:[#allocation5 + $0x4] sm:$0xf]
        %s1839 = scalar_lea.vmem %s385, 256 [#allocation11]
        %v1840 = vld [vmem:[%s1839] sm:$0xf]
        %v1841 = vld [vmem:[%s1839 + $0x4] sm:$0xf]
        %v1842 = vld [vmem:[%s1839 + $0x8] sm:$0xf]
        %v1843 = vld [vmem:[%s1839 + $0xc] sm:$0xf]
        %v1844 = vld [vmem:[%s1839 + $0x10] sm:$0xf]
        %v1845 = vld [vmem:[%s1839 + $0x14] sm:$0xf]
        %v1846 = vld [vmem:[%s1839 + $0x18] sm:$0xf]
        %v1847 = vld [vmem:[%s1839 + $0x1c] sm:$0xf]
        %v1848 = vld [vmem:[%s1839 + $0x20] sm:$0xf]
        %v1849 = vld [vmem:[%s1839 + $0x24] sm:$0xf]
        %v1850 = vld [vmem:[%s1839 + $0x28] sm:$0xf]
        %v1851 = vld [vmem:[%s1839 + $0x2c] sm:$0xf]
        %v1852 = vld [vmem:[%s1839 + $0x30] sm:$0xf]
        %v1853 = vld [vmem:[%s1839 + $0x34] sm:$0xf]
        %v1854 = vld [vmem:[%s1839 + $0x38] sm:$0xf]
        %v1855 = vld [vmem:[%s1839 + $0x3c] sm:$0xf]
        %v1858 = vunpack.c.l.b16 %v1837
        %v1859 = vunpack.c.l.b16 %v1838
        %v1860 = vpack.c.b16 %v1859, %v1858
        %v1878 = vunpack.c.l.b16 %v1840
        %v1879 = vunpack.c.l.b16 %v1841
        %v1880 = vunpack.c.l.b16 %v1842
        %v1881 = vunpack.c.l.b16 %v1843
        %v1882 = vunpack.c.l.b16 %v1844
        %v1883 = vunpack.c.l.b16 %v1845
        %v1884 = vunpack.c.l.b16 %v1846
        %v1885 = vunpack.c.l.b16 %v1847
        %v1886 = vunpack.c.l.b16 %v1848
        %v1887 = vunpack.c.l.b16 %v1849
        %v1888 = vunpack.c.l.b16 %v1850
        %v1889 = vunpack.c.l.b16 %v1851
        %v1890 = vunpack.c.l.b16 %v1852
        %v1891 = vunpack.c.l.b16 %v1853
        %v1892 = vunpack.c.l.b16 %v1854
        %v1893 = vunpack.c.l.b16 %v1855
        %v1894 = vpack.c.b16 %v1879, %v1878
        %v1895 = vpack.c.b16 %v1881, %v1880
        %v1896 = vpack.c.b16 %v1883, %v1882
        %v1897 = vpack.c.b16 %v1885, %v1884
        %v1898 = vpack.c.b16 %v1887, %v1886
        %v1899 = vpack.c.b16 %v1889, %v1888
        %v1900 = vpack.c.b16 %v1891, %v1890
        %v1901 = vpack.c.b16 %v1893, %v1892
        %1910 = vmatprep.subr.bf16.mxu0 0
        %1911 = vmatpush1.bf16.msra.mxu0 %v1894
        %1912 = vmatprep.subr.bf16.mxu0 0
        %1913 = vmatpush1.bf16.msra.mxu0 %v1895
        %1914 = vmatprep.subr.bf16.mxu0 0
        %1915 = vmatpush1.bf16.msra.mxu0 %v1896
        %1916 = vmatprep.subr.bf16.mxu0 0
        %1917 = vmatpush1.bf16.msra.mxu0 %v1897
        %1918 = vmatprep.subr.bf16.mxu0 0
        %1919 = vmatpush1.bf16.msra.mxu0 %v1898
        %1920 = vmatprep.subr.bf16.mxu0 0
        %1921 = vmatpush1.bf16.msra.mxu0 %v1899
        %1922 = vmatprep.subr.bf16.mxu0 0
        %1923 = vmatpush1.bf16.msra.mxu0 %v1900
        %1924 = vmatprep.subr.bf16.mxu0 0
        %1925 = vmatpush1.bf16.msra.mxu0 %v1901
        %1926 = vmatprep.subr.bf16.mxu0 0
        %1927 = vmatpush1.bf16.msra.mxu0 0
        %1928 = vmatprep.subr.bf16.mxu0 0
        %1929 = vmatpush1.bf16.msra.mxu0 0
        %1930 = vmatprep.subr.bf16.mxu0 0
        %1931 = vmatpush1.bf16.msra.mxu0 0
        %1932 = vmatprep.subr.bf16.mxu0 0
        %1933 = vmatpush1.bf16.msra.mxu0 0
        %1934 = vmatprep.subr.bf16.mxu0 0
        %1935 = vmatpush1.bf16.msra.mxu0 0
        %1936 = vmatprep.subr.bf16.mxu0 0
        %1937 = vmatpush1.bf16.msra.mxu0 0
        %1938 = vmatprep.subr.bf16.mxu0 0
        %1939 = vmatpush1.bf16.msra.mxu0 0
        %1940 = vmatprep.subr.bf16.mxu0 0
        %1941 = vmatpush1.bf16.msra.mxu0 0
        %1942 = vmatprep.mubr.bf16.mxu0 0
        %1943 = vmatmul.mubr.bf16.gmra.mrb[0].mxu0 %v1860
        %v1944 = vpop.f32.mrb[0].mxu0
        %v1945 = vadd.f32 0.0, %v1944
        %v1946 = vpop.f32.mrb[0].mxu0
        %v1947 = vpop.f32.mrb[0].mxu0
        %v1948 = vadd.f32 0.0, %v1947
        %v1949 = vpop.f32.mrb[0].mxu0
        %1950 = vdwg.mxu0
        %v1951 = vadd.f32 %v1831, %v1945
        %v1952 = vadd.f32 %v1834, %v1948
        %v1953 = vld [vmem:[%s394 + $0x2] sm:$0x1]
        %v1954 = vlaneseq
        %v1955 = vshrl.u32 %v1954, 7
        %v1956 = vsub.s32 0, %v1955
        %v1957 = vrot.slane %v1953, %v1956
        %v1958 = vadd.f32 %v1951, %v1957
        %v1959 = vadd.f32 %v1952, %v1957
        %v1960 = vld [vmem:[#allocation7] sm:$0xff]
        %v1961 = vadd.f32 %v1958, %v1960
        %v1962 = vadd.f32 %v1959, %v1960
        %v1963 = vpack.c.bf16 %v1962, %v1961
        %v1964 = vpack.c.bf16 %v1961, %v1961
        %v1965 = vpack.c.bf16 %v1962, %v1962
        %v1966 = vrot.slane %v1961, 4
        %v1967 = vadd.f32 %v1961, %v1966
        %v1968 = vrot.slane %v1967, 2
        %v1969 = vadd.f32 %v1967, %v1968
        %v1970 = vrot.slane %v1969, 1
        %v1971 = vadd.f32 %v1969, %v1970
        %v1972 = vrot.slane %v1962, 4
        %v1973 = vadd.f32 %v1962, %v1972
        %v1974 = vrot.slane %v1973, 2
        %v1975 = vadd.f32 %v1973, %v1974
        %v1976 = vrot.slane %v1975, 1
        %v1977 = vadd.f32 %v1975, %v1976
        %v1978 = vrcp.pop 8.0
        %v1979 = vmul.f32 %v1971, %v1978
        %v1980 = vmul.f32 %v1977, %v1978
        %v1981 = vpack.c.bf16 %v1979, %v1979
        %v1982 = vpack.c.bf16 %v1980, %v1980
        %s1983 = scalar_lea.vmem %s385, 320 [#allocation11]
        %v1984 = vld [vmem:[%s1983] sm:$0xf]
        %v1985 = vld [vmem:[%s1983 + $0x4] sm:$0xf]
        %v1986 = vld [vmem:[%s1983 + $0x8] sm:$0xf]
        %v1987 = vld [vmem:[%s1983 + $0xc] sm:$0xf]
        %v1988 = vld [vmem:[%s1983 + $0x10] sm:$0xf]
        %v1989 = vld [vmem:[%s1983 + $0x14] sm:$0xf]
        %v1990 = vld [vmem:[%s1983 + $0x18] sm:$0xf]
        %v1991 = vld [vmem:[%s1983 + $0x1c] sm:$0xf]
        %v1992 = vld [vmem:[%s1983 + $0x20] sm:$0xf]
        %v1993 = vld [vmem:[%s1983 + $0x24] sm:$0xf]
        %v1994 = vld [vmem:[%s1983 + $0x28] sm:$0xf]
        %v1995 = vld [vmem:[%s1983 + $0x2c] sm:$0xf]
        %v1996 = vld [vmem:[%s1983 + $0x30] sm:$0xf]
        %v1997 = vld [vmem:[%s1983 + $0x34] sm:$0xf]
        %v1998 = vld [vmem:[%s1983 + $0x38] sm:$0xf]
        %v1999 = vld [vmem:[%s1983 + $0x3c] sm:$0xf]
        %v2000 = vld [vmem:[%s394 + $0x3] sm:$0x1]
        %v2001 = vlaneseq
        %v2002 = vshrl.u32 %v2001, 7
        %v2003 = vsub.s32 0, %v2002
        %v2004 = vrot.slane %v2000, %v2003
        %v2007 = vunpack.c.l.b16 %v1981
        %v2008 = vunpack.c.l.b16 %v1982
        %vm2009 = vcmask 1041409
        %v2010 = vsel %vm2009, %v2008, %v2007
        %v2011 = vpack.c.b16 %v2010, %v2010
        %v2029 = vunpack.c.l.b16 %v1984
        %v2030 = vunpack.c.l.b16 %v1985
        %v2031 = vunpack.c.l.b16 %v1986
        %v2032 = vunpack.c.l.b16 %v1987
        %v2033 = vunpack.c.l.b16 %v1988
        %v2034 = vunpack.c.l.b16 %v1989
        %v2035 = vunpack.c.l.b16 %v1990
        %v2036 = vunpack.c.l.b16 %v1991
        %v2037 = vunpack.c.l.b16 %v1992
        %v2038 = vunpack.c.l.b16 %v1993
        %v2039 = vunpack.c.l.b16 %v1994
        %v2040 = vunpack.c.l.b16 %v1995
        %v2041 = vunpack.c.l.b16 %v1996
        %v2042 = vunpack.c.l.b16 %v1997
        %v2043 = vunpack.c.l.b16 %v1998
        %v2044 = vunpack.c.l.b16 %v1999
        %v2045 = vpack.c.b16 %v2030, %v2029
        %v2046 = vpack.c.b16 %v2032, %v2031
        %v2047 = vpack.c.b16 %v2034, %v2033
        %v2048 = vpack.c.b16 %v2036, %v2035
        %v2049 = vpack.c.b16 %v2038, %v2037
        %v2050 = vpack.c.b16 %v2040, %v2039
        %v2051 = vpack.c.b16 %v2042, %v2041
        %v2052 = vpack.c.b16 %v2044, %v2043
        %2061 = vmatprep.subr.bf16.mxu0 0
        %2062 = vmatpush1.bf16.msra.mxu0 %v2045
        %2063 = vmatprep.subr.bf16.mxu0 0
        %2064 = vmatpush1.bf16.msra.mxu0 %v2046
        %2065 = vmatprep.subr.bf16.mxu0 0
        %2066 = vmatpush1.bf16.msra.mxu0 %v2047
        %2067 = vmatprep.subr.bf16.mxu0 0
        %2068 = vmatpush1.bf16.msra.mxu0 %v2048
        %2069 = vmatprep.subr.bf16.mxu0 0
        %2070 = vmatpush1.bf16.msra.mxu0 %v2049
        %2071 = vmatprep.subr.bf16.mxu0 0
        %2072 = vmatpush1.bf16.msra.mxu0 %v2050
        %2073 = vmatprep.subr.bf16.mxu0 0
        %2074 = vmatpush1.bf16.msra.mxu0 %v2051
        %2075 = vmatprep.subr.bf16.mxu0 0
        %2076 = vmatpush1.bf16.msra.mxu0 %v2052
        %2077 = vmatprep.subr.bf16.mxu0 0
        %2078 = vmatpush1.bf16.msra.mxu0 0
        %2079 = vmatprep.subr.bf16.mxu0 0
        %2080 = vmatpush1.bf16.msra.mxu0 0
        %2081 = vmatprep.subr.bf16.mxu0 0
        %2082 = vmatpush1.bf16.msra.mxu0 0
        %2083 = vmatprep.subr.bf16.mxu0 0
        %2084 = vmatpush1.bf16.msra.mxu0 0
        %2085 = vmatprep.subr.bf16.mxu0 0
        %2086 = vmatpush1.bf16.msra.mxu0 0
        %2087 = vmatprep.subr.bf16.mxu0 0
        %2088 = vmatpush1.bf16.msra.mxu0 0
        %2089 = vmatprep.subr.bf16.mxu0 0
        %2090 = vmatpush1.bf16.msra.mxu0 0
        %2091 = vmatprep.subr.bf16.mxu0 0
        %2092 = vmatpush1.bf16.msra.mxu0 0
        %2093 = vmatprep.mubr.bf16.mxu0 0
        %2094 = vmatmul.mubr.bf16.gmra.mrb[0].mxu0 %v2011
        %v2095 = vpop.f32.mrb[0].mxu0
        %v2096 = vadd.f32 %v2004, %v2095
        %v2097 = vpop.f32.mrb[0].mxu0
        %v2098 = vpop.f32.mrb[0].mxu0
        %v2099 = vpop.f32.mrb[0].mxu0
        %2100 = vdwg.mxu0
        %v2101 = vpack.c.bf16 %v2096, %v2096
        %s2102 = scalar_lea.vmem %s385, 384 [#allocation11]
        %v2103 = vld [vmem:[%s2102] sm:$0xf]
        %v2104 = vld [vmem:[%s2102 + $0x4] sm:$0xf]
        %v2105 = vld [vmem:[%s2102 + $0x8] sm:$0xf]
        %v2106 = vld [vmem:[%s2102 + $0xc] sm:$0xf]
        %v2107 = vld [vmem:[%s2102 + $0x10] sm:$0xf]
        %v2108 = vld [vmem:[%s2102 + $0x14] sm:$0xf]
        %v2109 = vld [vmem:[%s2102 + $0x18] sm:$0xf]
        %v2110 = vld [vmem:[%s2102 + $0x1c] sm:$0xf]
        %v2111 = vld [vmem:[%s2102 + $0x20] sm:$0xf]
        %v2112 = vld [vmem:[%s2102 + $0x24] sm:$0xf]
        %v2113 = vld [vmem:[%s2102 + $0x28] sm:$0xf]
        %v2114 = vld [vmem:[%s2102 + $0x2c] sm:$0xf]
        %v2115 = vld [vmem:[%s2102 + $0x30] sm:$0xf]
        %v2116 = vld [vmem:[%s2102 + $0x34] sm:$0xf]
        %v2117 = vld [vmem:[%s2102 + $0x38] sm:$0xf]
        %v2118 = vld [vmem:[%s2102 + $0x3c] sm:$0xf]
        %v2119 = vld [vmem:[%s394 + $0x4] sm:$0x1]
        %v2120 = vlaneseq
        %v2121 = vshrl.u32 %v2120, 7
        %v2122 = vsub.s32 0, %v2121
        %v2123 = vrot.slane %v2119, %v2122
        %v2140 = vunpack.c.l.b16 %v2103
        %v2141 = vunpack.c.l.b16 %v2104
        %v2142 = vunpack.c.l.b16 %v2105
        %v2143 = vunpack.c.l.b16 %v2106
        %v2144 = vunpack.c.l.b16 %v2107
        %v2145 = vunpack.c.l.b16 %v2108
        %v2146 = vunpack.c.l.b16 %v2109
        %v2147 = vunpack.c.l.b16 %v2110
        %v2148 = vunpack.c.l.b16 %v2111
        %v2149 = vunpack.c.l.b16 %v2112
        %v2150 = vunpack.c.l.b16 %v2113
        %v2151 = vunpack.c.l.b16 %v2114
        %v2152 = vunpack.c.l.b16 %v2115
        %v2153 = vunpack.c.l.b16 %v2116
        %v2154 = vunpack.c.l.b16 %v2117
        %v2155 = vunpack.c.l.b16 %v2118
        %v2156 = vpack.c.b16 %v2141, %v2140
        %v2157 = vpack.c.b16 %v2143, %v2142
        %v2158 = vpack.c.b16 %v2145, %v2144
        %v2159 = vpack.c.b16 %v2147, %v2146
        %v2160 = vpack.c.b16 %v2149, %v2148
        %v2161 = vpack.c.b16 %v2151, %v2150
        %v2162 = vpack.c.b16 %v2153, %v2152
        %v2163 = vpack.c.b16 %v2155, %v2154
        %2172 = vmatprep.subr.bf16.mxu0 0
        %2173 = vmatpush1.bf16.msra.mxu0 %v2156
        %2174 = vmatprep.subr.bf16.mxu0 0
        %2175 = vmatpush1.bf16.msra.mxu0 %v2157
        %2176 = vmatprep.subr.bf16.mxu0 0
        %2177 = vmatpush1.bf16.msra.mxu0 %v2158
        %2178 = vmatprep.subr.bf16.mxu0 0
        %2179 = vmatpush1.bf16.msra.mxu0 %v2159
        %2180 = vmatprep.subr.bf16.mxu0 0
        %2181 = vmatpush1.bf16.msra.mxu0 %v2160
        %2182 = vmatprep.subr.bf16.mxu0 0
        %2183 = vmatpush1.bf16.msra.mxu0 %v2161
        %2184 = vmatprep.subr.bf16.mxu0 0
        %2185 = vmatpush1.bf16.msra.mxu0 %v2162
        %2186 = vmatprep.subr.bf16.mxu0 0
        %2187 = vmatpush1.bf16.msra.mxu0 %v2163
        %2188 = vmatprep.subr.bf16.mxu0 0
        %2189 = vmatpush1.bf16.msra.mxu0 0
        %2190 = vmatprep.subr.bf16.mxu0 0
        %2191 = vmatpush1.bf16.msra.mxu0 0
        %2192 = vmatprep.subr.bf16.mxu0 0
        %2193 = vmatpush1.bf16.msra.mxu0 0
        %2194 = vmatprep.subr.bf16.mxu0 0
        %2195 = vmatpush1.bf16.msra.mxu0 0
        %2196 = vmatprep.subr.bf16.mxu0 0
        %2197 = vmatpush1.bf16.msra.mxu0 0
        %2198 = vmatprep.subr.bf16.mxu0 0
        %2199 = vmatpush1.bf16.msra.mxu0 0
        %2200 = vmatprep.subr.bf16.mxu0 0
        %2201 = vmatpush1.bf16.msra.mxu0 0
        %2202 = vmatprep.subr.bf16.mxu0 0
        %2203 = vmatpush1.bf16.msra.mxu0 0
        %2204 = vmatprep.mubr.bf16.mxu0 0
        %2205 = vmatmul.mubr.bf16.gmra.mrb[0].mxu0 %v2101
        %v2206 = vpop.f32.mrb[0].mxu0
        %v2207 = vadd.f32 %v2123, %v2206
        %v2208 = vpop.f32.mrb[0].mxu0
        %v2209 = vpop.f32.mrb[0].mxu0
        %v2210 = vpop.f32.mrb[0].mxu0
        %2211 = vdwg.mxu0
        %s2212 = scalar_lea.vmem %s385, 448 [#allocation11]
        %v2213 = vld [vmem:[%s2212] sm:$0xf]
        %v2214 = vld [vmem:[%s2212 + $0x4] sm:$0xf]
        %v2215 = vld [vmem:[%s2212 + $0x8] sm:$0xf]
        %v2216 = vld [vmem:[%s2212 + $0xc] sm:$0xf]
        %v2217 = vld [vmem:[%s2212 + $0x10] sm:$0xf]
        %v2218 = vld [vmem:[%s2212 + $0x14] sm:$0xf]
        %v2219 = vld [vmem:[%s2212 + $0x18] sm:$0xf]
        %v2220 = vld [vmem:[%s2212 + $0x1c] sm:$0xf]
        %v2221 = vld [vmem:[%s2212 + $0x20] sm:$0xf]
        %v2222 = vld [vmem:[%s2212 + $0x24] sm:$0xf]
        %v2223 = vld [vmem:[%s2212 + $0x28] sm:$0xf]
        %v2224 = vld [vmem:[%s2212 + $0x2c] sm:$0xf]
        %v2225 = vld [vmem:[%s2212 + $0x30] sm:$0xf]
        %v2226 = vld [vmem:[%s2212 + $0x34] sm:$0xf]
        %v2227 = vld [vmem:[%s2212 + $0x38] sm:$0xf]
        %v2228 = vld [vmem:[%s2212 + $0x3c] sm:$0xf]
        %v2229 = vld [vmem:[%s394 + $0x5] sm:$0x1]
        %v2230 = vlaneseq
        %v2231 = vshrl.u32 %v2230, 7
        %v2232 = vsub.s32 0, %v2231
        %v2233 = vrot.slane %v2229, %v2232
        %v2250 = vunpack.c.l.b16 %v2213
        %v2251 = vunpack.c.l.b16 %v2214
        %v2252 = vunpack.c.l.b16 %v2215
        %v2253 = vunpack.c.l.b16 %v2216
        %v2254 = vunpack.c.l.b16 %v2217
        %v2255 = vunpack.c.l.b16 %v2218
        %v2256 = vunpack.c.l.b16 %v2219
        %v2257 = vunpack.c.l.b16 %v2220
        %v2258 = vunpack.c.l.b16 %v2221
        %v2259 = vunpack.c.l.b16 %v2222
        %v2260 = vunpack.c.l.b16 %v2223
        %v2261 = vunpack.c.l.b16 %v2224
        %v2262 = vunpack.c.l.b16 %v2225
        %v2263 = vunpack.c.l.b16 %v2226
        %v2264 = vunpack.c.l.b16 %v2227
        %v2265 = vunpack.c.l.b16 %v2228
        %v2266 = vpack.c.b16 %v2251, %v2250
        %v2267 = vpack.c.b16 %v2253, %v2252
        %v2268 = vpack.c.b16 %v2255, %v2254
        %v2269 = vpack.c.b16 %v2257, %v2256
        %v2270 = vpack.c.b16 %v2259, %v2258
        %v2271 = vpack.c.b16 %v2261, %v2260
        %v2272 = vpack.c.b16 %v2263, %v2262
        %v2273 = vpack.c.b16 %v2265, %v2264
        %2282 = vmatprep.subr.bf16.mxu0 0
        %2283 = vmatpush1.bf16.msra.mxu0 %v2266
        %2284 = vmatprep.subr.bf16.mxu0 0
        %2285 = vmatpush1.bf16.msra.mxu0 %v2267
        %2286 = vmatprep.subr.bf16.mxu0 0
        %2287 = vmatpush1.bf16.msra.mxu0 %v2268
        %2288 = vmatprep.subr.bf16.mxu0 0
        %2289 = vmatpush1.bf16.msra.mxu0 %v2269
        %2290 = vmatprep.subr.bf16.mxu0 0
        %2291 = vmatpush1.bf16.msra.mxu0 %v2270
        %2292 = vmatprep.subr.bf16.mxu0 0
        %2293 = vmatpush1.bf16.msra.mxu0 %v2271
        %2294 = vmatprep.subr.bf16.mxu0 0
        %2295 = vmatpush1.bf16.msra.mxu0 %v2272
        %2296 = vmatprep.subr.bf16.mxu0 0
        %2297 = vmatpush1.bf16.msra.mxu0 %v2273
        %2298 = vmatprep.subr.bf16.mxu0 0
        %2299 = vmatpush1.bf16.msra.mxu0 0
        %2300 = vmatprep.subr.bf16.mxu0 0
        %2301 = vmatpush1.bf16.msra.mxu0 0
        %2302 = vmatprep.subr.bf16.mxu0 0
        %2303 = vmatpush1.bf16.msra.mxu0 0
        %2304 = vmatprep.subr.bf16.mxu0 0
        %2305 = vmatpush1.bf16.msra.mxu0 0
        %2306 = vmatprep.subr.bf16.mxu0 0
        %2307 = vmatpush1.bf16.msra.mxu0 0
        %2308 = vmatprep.subr.bf16.mxu0 0
        %2309 = vmatpush1.bf16.msra.mxu0 0
        %2310 = vmatprep.subr.bf16.mxu0 0
        %2311 = vmatpush1.bf16.msra.mxu0 0
        %2312 = vmatprep.subr.bf16.mxu0 0
        %2313 = vmatpush1.bf16.msra.mxu0 0
        %2314 = vmatprep.mubr.bf16.mxu0 0
        %2315 = vmatmul.mubr.bf16.gmra.mrb[0].mxu0 %v1963
        %v2316 = vpop.f32.mrb[0].mxu0
        %v2317 = vadd.f32 %v2233, %v2316
        %v2318 = vpop.f32.mrb[0].mxu0
        %v2319 = vpop.f32.mrb[0].mxu0
        %v2320 = vadd.f32 %v2233, %v2319
        %v2321 = vpop.f32.mrb[0].mxu0
        %2322 = vdwg.mxu0
        %v2325 = vunpack.c.l.s4 1966171168
        %v2326 = vunpack.c.0.s8 %v2325
        %v2327 = vlaneseq
        %v2328 = vshrl.u32 %v2327, 7
        %v2329 = vsub.s32 %v2326, %v2328
        %v2330 = vrot.slane %v2207, %v2329
        %v2331 = vcombine.high %v2330, %v2330
        %v2333 = vunpack.c.l.s4 1966171168
        %v2334 = vunpack.c.0.s8 %v2333
        %v2335 = vlaneseq
        %v2336 = vshrl.u32 %v2335, 7
        %v2337 = vsub.s32 %v2334, %v2336
        %v2338 = vrot.slane %v2330, %v2337
        %v2340 = vunpack.c.l.s4 1966171168
        %v2341 = vunpack.c.0.s8 %v2340
        %v2342 = vlaneseq
        %v2343 = vshrl.u32 %v2342, 7
        %v2344 = vsub.s32 %v2341, %v2343
        %v2345 = vrot.slane %v2331, %v2344
        %v2346 = vlaneseq
        %v2347 = vshrl.u32 %v2346, 7
        %v2348 = vsub.s32 0, %v2347
        %v2349 = vrot.slane %v2338, %v2348
        %v2350 = vlaneseq
        %v2351 = vshrl.u32 %v2350, 7
        %v2352 = vsub.s32 0, %v2351
        %v2353 = vrot.slane %v2345, %v2352
        %v2356 = vmul.f32 %v2349, %v2317
        %v2357 = vmul.f32 %v2353, %v2320
        %v2358 = vpack.c.bf16 %v2357, %v2356
        %s2359 = scalar_lea.vmem %s385, 512 [#allocation11]
        %v2360 = vld [vmem:[%s2359] sm:$0xf]
        %v2361 = vld [vmem:[%s2359 + $0x4] sm:$0xf]
        %v2362 = vld [vmem:[%s2359 + $0x8] sm:$0xf]
        %v2363 = vld [vmem:[%s2359 + $0xc] sm:$0xf]
        %v2364 = vld [vmem:[%s2359 + $0x10] sm:$0xf]
        %v2365 = vld [vmem:[%s2359 + $0x14] sm:$0xf]
        %v2366 = vld [vmem:[%s2359 + $0x18] sm:$0xf]
        %v2367 = vld [vmem:[%s2359 + $0x1c] sm:$0xf]
        %v2368 = vld [vmem:[%s2359 + $0x20] sm:$0xf]
        %v2369 = vld [vmem:[%s2359 + $0x24] sm:$0xf]
        %v2370 = vld [vmem:[%s2359 + $0x28] sm:$0xf]
        %v2371 = vld [vmem:[%s2359 + $0x2c] sm:$0xf]
        %v2372 = vld [vmem:[%s2359 + $0x30] sm:$0xf]
        %v2373 = vld [vmem:[%s2359 + $0x34] sm:$0xf]
        %v2374 = vld [vmem:[%s2359 + $0x38] sm:$0xf]
        %v2375 = vld [vmem:[%s2359 + $0x3c] sm:$0xf]
        %v2392 = vunpack.c.l.b16 %v2360
        %v2393 = vunpack.c.l.b16 %v2361
        %v2394 = vunpack.c.l.b16 %v2362
        %v2395 = vunpack.c.l.b16 %v2363
        %v2396 = vunpack.c.l.b16 %v2364
        %v2397 = vunpack.c.l.b16 %v2365
        %v2398 = vunpack.c.l.b16 %v2366
        %v2399 = vunpack.c.l.b16 %v2367
        %v2400 = vunpack.c.l.b16 %v2368
        %v2401 = vunpack.c.l.b16 %v2369
        %v2402 = vunpack.c.l.b16 %v2370
        %v2403 = vunpack.c.l.b16 %v2371
        %v2404 = vunpack.c.l.b16 %v2372
        %v2405 = vunpack.c.l.b16 %v2373
        %v2406 = vunpack.c.l.b16 %v2374
        %v2407 = vunpack.c.l.b16 %v2375
        %v2408 = vpack.c.b16 %v2393, %v2392
        %v2409 = vpack.c.b16 %v2395, %v2394
        %v2410 = vpack.c.b16 %v2397, %v2396
        %v2411 = vpack.c.b16 %v2399, %v2398
        %v2412 = vpack.c.b16 %v2401, %v2400
        %v2413 = vpack.c.b16 %v2403, %v2402
        %v2414 = vpack.c.b16 %v2405, %v2404
        %v2415 = vpack.c.b16 %v2407, %v2406
        %2424 = vmatprep.subr.bf16.mxu0 0
        %2425 = vmatpush1.bf16.msra.mxu0 %v2408
        %2426 = vmatprep.subr.bf16.mxu0 0
        %2427 = vmatpush1.bf16.msra.mxu0 %v2409
        %2428 = vmatprep.subr.bf16.mxu0 0
        %2429 = vmatpush1.bf16.msra.mxu0 %v2410
        %2430 = vmatprep.subr.bf16.mxu0 0
        %2431 = vmatpush1.bf16.msra.mxu0 %v2411
        %2432 = vmatprep.subr.bf16.mxu0 0
        %2433 = vmatpush1.bf16.msra.mxu0 %v2412
        %2434 = vmatprep.subr.bf16.mxu0 0
        %2435 = vmatpush1.bf16.msra.mxu0 %v2413
        %2436 = vmatprep.subr.bf16.mxu0 0
        %2437 = vmatpush1.bf16.msra.mxu0 %v2414
        %2438 = vmatprep.subr.bf16.mxu0 0
        %2439 = vmatpush1.bf16.msra.mxu0 %v2415
        %2440 = vmatprep.subr.bf16.mxu0 0
        %2441 = vmatpush1.bf16.msra.mxu0 0
        %2442 = vmatprep.subr.bf16.mxu0 0
        %2443 = vmatpush1.bf16.msra.mxu0 0
        %2444 = vmatprep.subr.bf16.mxu0 0
        %2445 = vmatpush1.bf16.msra.mxu0 0
        %2446 = vmatprep.subr.bf16.mxu0 0
        %2447 = vmatpush1.bf16.msra.mxu0 0
        %2448 = vmatprep.subr.bf16.mxu0 0
        %2449 = vmatpush1.bf16.msra.mxu0 0
        %2450 = vmatprep.subr.bf16.mxu0 0
        %2451 = vmatpush1.bf16.msra.mxu0 0
        %2452 = vmatprep.subr.bf16.mxu0 0
        %2453 = vmatpush1.bf16.msra.mxu0 0
        %2454 = vmatprep.subr.bf16.mxu0 0
        %2455 = vmatpush1.bf16.msra.mxu0 0
        %2456 = vmatprep.mubr.bf16.mxu0 0
        %2457 = vmatmul.mubr.bf16.gmra.mrb[0].mxu0 %v2358
        %v2458 = vpop.f32.mrb[0].mxu0
        %v2459 = vadd.f32 0.0, %v2458
        %v2460 = vpop.f32.mrb[0].mxu0
        %v2461 = vpop.f32.mrb[0].mxu0
        %v2462 = vadd.f32 0.0, %v2461
        %v2463 = vpop.f32.mrb[0].mxu0
        %2464 = vdwg.mxu0
        %vm2465 = vcmask 31744
        %v2466 = vsel %vm2465, %v2459, -inf
        %v2467 = vrot.slane %v2466, 4
        %v2468 = vmax.f32 %v2466, %v2467
        %v2469 = vrot.slane %v2468, 2
        %v2470 = vmax.f32 %v2468, %v2469
        %v2471 = vrot.slane %v2470, 1
        %v2472 = vmax.f32 %v2470, %v2471
        %v2473 = vsel %vm2465, %v2462, -inf
        %v2474 = vrot.slane %v2473, 4
        %v2475 = vmax.f32 %v2473, %v2474
        %v2476 = vrot.slane %v2475, 2
        %v2477 = vmax.f32 %v2475, %v2476
        %v2478 = vrot.slane %v2477, 1
        %v2479 = vmax.f32 %v2477, %v2478
        %v2480 = vsub.f32 %v2459, %v2472
        %v2481 = vsub.f32 %v2462, %v2479
        %v2482 = vmul.f32 %v2480, 1.442695
        %v2483 = vpow.pop %v2482
        %v2484 = vmul.f32 %v2481, 1.442695
        %v2485 = vpow.pop %v2484
        %v2486 = vsel %vm2465, %v2483, 0.0
        %v2487 = vrot.slane %v2486, 4
        %v2488 = vadd.f32 %v2486, %v2487
        %v2489 = vrot.slane %v2488, 2
        %v2490 = vadd.f32 %v2488, %v2489
        %v2491 = vrot.slane %v2490, 1
        %v2492 = vadd.f32 %v2490, %v2491
        %v2493 = vsel %vm2465, %v2485, 0.0
        %v2494 = vrot.slane %v2493, 4
        %v2495 = vadd.f32 %v2493, %v2494
        %v2496 = vrot.slane %v2495, 2
        %v2497 = vadd.f32 %v2495, %v2496
        %v2498 = vrot.slane %v2497, 1
        %v2499 = vadd.f32 %v2497, %v2498
        %v2500 = vrcp.pop %v2492
        %v2501 = vrcp.pop %v2499
        %v2502 = vmul.f32 %v2483, %v2500
        %v2503 = vmul.f32 %v2485, %v2501
        %2504 = vxpose.xlu0.b32.start [1/16] %v2502, 128
        %2505 = vxpose.xlu0.b32.cont [2/16] 0.0, 128
        %2506 = vxpose.xlu0.b32.cont [3/16] 0.0, 128
        %2507 = vxpose.xlu0.b32.cont [4/16] 0.0, 128
        %2508 = vxpose.xlu0.b32.cont [5/16] 0.0, 128
        %2509 = vxpose.xlu0.b32.cont [6/16] 0.0, 128
        %2510 = vxpose.xlu0.b32.cont [7/16] 0.0, 128
        %2511 = vxpose.xlu0.b32.cont [8/16] 0.0, 128
        %2512 = vxpose.xlu0.b32.cont [9/16] 0.0, 128
        %2513 = vxpose.xlu0.b32.cont [10/16] 0.0, 128
        %2514 = vxpose.xlu0.b32.cont [11/16] 0.0, 128
        %2515 = vxpose.xlu0.b32.cont [12/16] 0.0, 128
        %2516 = vxpose.xlu0.b32.cont [13/16] 0.0, 128
        %2517 = vxpose.xlu0.b32.cont [14/16] 0.0, 128
        %2518 = vxpose.xlu0.b32.cont [15/16] 0.0, 128
        %2519 = vxpose.xlu0.b32.end [16/16] 0.0, 128
        %v2520 = vpop.trf.xlu0
        %v2521 = vpop.trf.xlu0
        %v2522 = vpop.trf.xlu0
        %v2523 = vpop.trf.xlu0
        %v2524 = vpop.trf.xlu0
        %v2525 = vpop.trf.xlu0
        %v2526 = vpop.trf.xlu0
        %v2527 = vpop.trf.xlu0
        %v2528 = vpop.trf.xlu0
        %v2529 = vpop.trf.xlu0
        %v2530 = vpop.trf.xlu0
        %v2531 = vpop.trf.xlu0
        %v2532 = vpop.trf.xlu0
        %v2533 = vpop.trf.xlu0
        %v2534 = vpop.trf.xlu0
        %v2535 = vpop.trf.xlu0
        %2536 = vxpose.xlu0.b32.start [1/16] %v2503, 128
        %2537 = vxpose.xlu0.b32.cont [2/16] 0.0, 128
        %2538 = vxpose.xlu0.b32.cont [3/16] 0.0, 128
        %2539 = vxpose.xlu0.b32.cont [4/16] 0.0, 128
        %2540 = vxpose.xlu0.b32.cont [5/16] 0.0, 128
        %2541 = vxpose.xlu0.b32.cont [6/16] 0.0, 128
        %2542 = vxpose.xlu0.b32.cont [7/16] 0.0, 128
        %2543 = vxpose.xlu0.b32.cont [8/16] 0.0, 128
        %2544 = vxpose.xlu0.b32.cont [9/16] 0.0, 128
        %2545 = vxpose.xlu0.b32.cont [10/16] 0.0, 128
        %2546 = vxpose.xlu0.b32.cont [11/16] 0.0, 128
        %2547 = vxpose.xlu0.b32.cont [12/16] 0.0, 128
        %2548 = vxpose.xlu0.b32.cont [13/16] 0.0, 128
        %2549 = vxpose.xlu0.b32.cont [14/16] 0.0, 128
        %2550 = vxpose.xlu0.b32.cont [15/16] 0.0, 128
        %2551 = vxpose.xlu0.b32.end [16/16] 0.0, 128
        %v2552 = vpop.trf.xlu0
        %v2553 = vpop.trf.xlu0
        %v2554 = vpop.trf.xlu0
        %v2555 = vpop.trf.xlu0
        %v2556 = vpop.trf.xlu0
        %v2557 = vpop.trf.xlu0
        %v2558 = vpop.trf.xlu0
        %v2559 = vpop.trf.xlu0
        %v2560 = vpop.trf.xlu0
        %v2561 = vpop.trf.xlu0
        %v2562 = vpop.trf.xlu0
        %v2563 = vpop.trf.xlu0
        %v2564 = vpop.trf.xlu0
        %v2565 = vpop.trf.xlu0
        %v2566 = vpop.trf.xlu0
        %v2567 = vpop.trf.xlu0
        %v2568 = vpack.c.bf16 %v2520, %v2520
        %v2569 = vpack.c.bf16 %v2552, %v2552
        %vm2570 = vcmask 64512
        %v2572 = vsel %vm2570, %v2568, 0
        %vm2574 = vcmask 1043456
        %v2576 = vsel %vm2574, %v1964, 0
        %2578 = vmatprep.subr.bf16.mxu0 0
        %2579 = vmatpush1.bf16.msra.mxu0 %v2576
        %2580 = vmatprep.subr.bf16.mxu0 0
        %2581 = vmatpush1.bf16.msra.mxu0 0
        %2582 = vmatprep.subr.bf16.mxu0 0
        %2583 = vmatpush1.bf16.msra.mxu0 0
        %2584 = vmatprep.subr.bf16.mxu0 0
        %2585 = vmatpush1.bf16.msra.mxu0 0
        %2586 = vmatprep.subr.bf16.mxu0 0
        %2587 = vmatpush1.bf16.msra.mxu0 0
        %2588 = vmatprep.subr.bf16.mxu0 0
        %2589 = vmatpush1.bf16.msra.mxu0 0
        %2590 = vmatprep.subr.bf16.mxu0 0
        %2591 = vmatpush1.bf16.msra.mxu0 0
        %2592 = vmatprep.subr.bf16.mxu0 0
        %2593 = vmatpush1.bf16.msra.mxu0 0
        %2594 = vmatprep.subr.bf16.mxu0 0
        %2595 = vmatpush1.bf16.msra.mxu0 0
        %2596 = vmatprep.subr.bf16.mxu0 0
        %2597 = vmatpush1.bf16.msra.mxu0 0
        %2598 = vmatprep.subr.bf16.mxu0 0
        %2599 = vmatpush1.bf16.msra.mxu0 0
        %2600 = vmatprep.subr.bf16.mxu0 0
        %2601 = vmatpush1.bf16.msra.mxu0 0
        %2602 = vmatprep.subr.bf16.mxu0 0
        %2603 = vmatpush1.bf16.msra.mxu0 0
        %2604 = vmatprep.subr.bf16.mxu0 0
        %2605 = vmatpush1.bf16.msra.mxu0 0
        %2606 = vmatprep.subr.bf16.mxu0 0
        %2607 = vmatpush1.bf16.msra.mxu0 0
        %2608 = vmatprep.subr.bf16.mxu0 0
        %2609 = vmatpush1.bf16.msra.mxu0 0
        %2610 = vmatprep.mubr.bf16.mxu0 0
        %2611 = vmatmul.mubr.bf16.gmra.mrb[0].mxu0 %v2572
        %v2612 = vpop.f32.mrb[0].mxu0
        %v2613 = vadd.f32 0.0, %v2612
        %v2614 = vpop.f32.mrb[0].mxu0
        %v2615 = vpop.f32.mrb[0].mxu0
        %v2616 = vpop.f32.mrb[0].mxu0
        %2617 = vdwg.mxu0
        %v2619 = vsel %vm2570, %v2569, 0
        %v2622 = vsel %vm2574, %v1965, 0
        %2624 = vmatprep.subr.bf16.mxu0 0
        %2625 = vmatpush1.bf16.msra.mxu0 %v2622
        %2626 = vmatprep.subr.bf16.mxu0 0
        %2627 = vmatpush1.bf16.msra.mxu0 0
        %2628 = vmatprep.subr.bf16.mxu0 0
        %2629 = vmatpush1.bf16.msra.mxu0 0
        %2630 = vmatprep.subr.bf16.mxu0 0
        %2631 = vmatpush1.bf16.msra.mxu0 0
        %2632 = vmatprep.subr.bf16.mxu0 0
        %2633 = vmatpush1.bf16.msra.mxu0 0
        %2634 = vmatprep.subr.bf16.mxu0 0
        %2635 = vmatpush1.bf16.msra.mxu0 0
        %2636 = vmatprep.subr.bf16.mxu0 0
        %2637 = vmatpush1.bf16.msra.mxu0 0
        %2638 = vmatprep.subr.bf16.mxu0 0
        %2639 = vmatpush1.bf16.msra.mxu0 0
        %2640 = vmatprep.subr.bf16.mxu0 0
        %2641 = vmatpush1.bf16.msra.mxu0 0
        %2642 = vmatprep.subr.bf16.mxu0 0
        %2643 = vmatpush1.bf16.msra.mxu0 0
        %2644 = vmatprep.subr.bf16.mxu0 0
        %2645 = vmatpush1.bf16.msra.mxu0 0
        %2646 = vmatprep.subr.bf16.mxu0 0
        %2647 = vmatpush1.bf16.msra.mxu0 0
        %2648 = vmatprep.subr.bf16.mxu0 0
        %2649 = vmatpush1.bf16.msra.mxu0 0
        %2650 = vmatprep.subr.bf16.mxu0 0
        %2651 = vmatpush1.bf16.msra.mxu0 0
        %2652 = vmatprep.subr.bf16.mxu0 0
        %2653 = vmatpush1.bf16.msra.mxu0 0
        %2654 = vmatprep.subr.bf16.mxu0 0
        %2655 = vmatpush1.bf16.msra.mxu0 0
        %2656 = vmatprep.mubr.bf16.mxu0 0
        %2657 = vmatmul.mubr.bf16.gmra.mrb[0].mxu0 %v2619
        %v2658 = vpop.f32.mrb[0].mxu0
        %v2659 = vadd.f32 0.0, %v2658
        %v2660 = vpop.f32.mrb[0].mxu0
        %v2661 = vpop.f32.mrb[0].mxu0
        %v2662 = vpop.f32.mrb[0].mxu0
        %2663 = vdwg.mxu0
        %v2664 = vld [vmem:[%s394 + $0x6] sm:$0x1]
        %v2665 = vpack.c.bf16 %v2613, %v2613
        %v2666 = vpack.c.bf16 %v2659, %v2659
        %s2667 = scalar_lea.vmem %s385, 576 [#allocation11]
        %v2668 = vld [vmem:[%s2667] sm:$0xf]
        %v2669 = vld [vmem:[%s2667 + $0x4] sm:$0xf]
        %v2670 = vld [vmem:[%s2667 + $0x8] sm:$0xf]
        %v2671 = vld [vmem:[%s2667 + $0xc] sm:$0xf]
        %v2672 = vld [vmem:[%s2667 + $0x10] sm:$0xf]
        %v2673 = vld [vmem:[%s2667 + $0x14] sm:$0xf]
        %v2674 = vld [vmem:[%s2667 + $0x18] sm:$0xf]
        %v2675 = vld [vmem:[%s2667 + $0x1c] sm:$0xf]
        %v2676 = vld [vmem:[%s2667 + $0x20] sm:$0xf]
        %v2677 = vld [vmem:[%s2667 + $0x24] sm:$0xf]
        %v2678 = vld [vmem:[%s2667 + $0x28] sm:$0xf]
        %v2679 = vld [vmem:[%s2667 + $0x2c] sm:$0xf]
        %v2680 = vld [vmem:[%s2667 + $0x30] sm:$0xf]
        %v2681 = vld [vmem:[%s2667 + $0x34] sm:$0xf]
        %v2682 = vld [vmem:[%s2667 + $0x38] sm:$0xf]
        %v2683 = vld [vmem:[%s2667 + $0x3c] sm:$0xf]
        %v2686 = vunpack.c.l.b16 %v2665
        %v2687 = vunpack.c.l.b16 %v2666
        %v2688 = vrot.slane %v2687, 7
        %v2689 = vsel %vm2009, %v2688, %v2686
        %v2690 = vpack.c.b16 %v2689, %v2689
        %v2708 = vunpack.c.l.b16 %v2668
        %v2709 = vunpack.c.l.b16 %v2669
        %v2710 = vunpack.c.l.b16 %v2670
        %v2711 = vunpack.c.l.b16 %v2671
        %v2712 = vunpack.c.l.b16 %v2672
        %v2713 = vunpack.c.l.b16 %v2673
        %v2714 = vunpack.c.l.b16 %v2674
        %v2715 = vunpack.c.l.b16 %v2675
        %v2716 = vunpack.c.l.b16 %v2676
        %v2717 = vunpack.c.l.b16 %v2677
        %v2718 = vunpack.c.l.b16 %v2678
        %v2719 = vunpack.c.l.b16 %v2679
        %v2720 = vunpack.c.l.b16 %v2680
        %v2721 = vunpack.c.l.b16 %v2681
        %v2722 = vunpack.c.l.b16 %v2682
        %v2723 = vunpack.c.l.b16 %v2683
        %v2724 = vpack.c.b16 %v2709, %v2708
        %v2725 = vpack.c.b16 %v2711, %v2710
        %v2726 = vpack.c.b16 %v2713, %v2712
        %v2727 = vpack.c.b16 %v2715, %v2714
        %v2728 = vpack.c.b16 %v2717, %v2716
        %v2729 = vpack.c.b16 %v2719, %v2718
        %v2730 = vpack.c.b16 %v2721, %v2720
        %v2731 = vpack.c.b16 %v2723, %v2722
        %2740 = vmatprep.subr.bf16.mxu0 0
        %2741 = vmatpush1.bf16.msra.mxu0 %v2724
        %2742 = vmatprep.subr.bf16.mxu0 0
        %2743 = vmatpush1.bf16.msra.mxu0 %v2725
        %2744 = vmatprep.subr.bf16.mxu0 0
        %2745 = vmatpush1.bf16.msra.mxu0 %v2726
        %2746 = vmatprep.subr.bf16.mxu0 0
        %2747 = vmatpush1.bf16.msra.mxu0 %v2727
        %2748 = vmatprep.subr.bf16.mxu0 0
        %2749 = vmatpush1.bf16.msra.mxu0 %v2728
        %2750 = vmatprep.subr.bf16.mxu0 0
        %2751 = vmatpush1.bf16.msra.mxu0 %v2729
        %2752 = vmatprep.subr.bf16.mxu0 0
        %2753 = vmatpush1.bf16.msra.mxu0 %v2730
        %2754 = vmatprep.subr.bf16.mxu0 0
        %2755 = vmatpush1.bf16.msra.mxu0 %v2731
        %2756 = vmatprep.subr.bf16.mxu0 0
        %2757 = vmatpush1.bf16.msra.mxu0 0
        %2758 = vmatprep.subr.bf16.mxu0 0
        %2759 = vmatpush1.bf16.msra.mxu0 0
        %2760 = vmatprep.subr.bf16.mxu0 0
        %2761 = vmatpush1.bf16.msra.mxu0 0
        %2762 = vmatprep.subr.bf16.mxu0 0
        %2763 = vmatpush1.bf16.msra.mxu0 0
        %2764 = vmatprep.subr.bf16.mxu0 0
        %2765 = vmatpush1.bf16.msra.mxu0 0
        %2766 = vmatprep.subr.bf16.mxu0 0
        %2767 = vmatpush1.bf16.msra.mxu0 0
        %2768 = vmatprep.subr.bf16.mxu0 0
        %2769 = vmatpush1.bf16.msra.mxu0 0
        %2770 = vmatprep.subr.bf16.mxu0 0
        %2771 = vmatpush1.bf16.msra.mxu0 0
        %2772 = vmatprep.mubr.bf16.mxu0 0
        %2773 = vmatmul.mubr.bf16.gmra.mrb[0].mxu0 %v2690
        %v2774 = vpop.f32.mrb[0].mxu0
        %v2775 = vadd.f32 0.0, %v2774
        %v2776 = vpop.f32.mrb[0].mxu0
        %v2777 = vpop.f32.mrb[0].mxu0
        %v2778 = vpop.f32.mrb[0].mxu0
        %2779 = vdwg.mxu0
        %v2780 = vlaneseq
        %v2781 = vshrl.u32 %v2780, 7
        %v2782 = vsub.s32 0, %v2781
        %v2783 = vrot.slane %v2664, %v2782
        %v2784 = vadd.f32 %v2783, %v2775
        %s2785 = scalar_lea.vmem %s385, 640 [#allocation11]
        %v2786 = vld [vmem:[%s2785] sm:$0xf]
        %v2787 = vld [vmem:[%s2785 + $0x4] sm:$0xf]
        %v2788 = vld [vmem:[%s2785 + $0x8] sm:$0xf]
        %v2789 = vld [vmem:[%s2785 + $0xc] sm:$0xf]
        %v2790 = vld [vmem:[%s2785 + $0x10] sm:$0xf]
        %v2791 = vld [vmem:[%s2785 + $0x14] sm:$0xf]
        %v2792 = vld [vmem:[%s2785 + $0x18] sm:$0xf]
        %v2793 = vld [vmem:[%s2785 + $0x1c] sm:$0xf]
        %v2794 = vld [vmem:[%s2785 + $0x20] sm:$0xf]
        %v2795 = vld [vmem:[%s2785 + $0x24] sm:$0xf]
        %v2796 = vld [vmem:[%s2785 + $0x28] sm:$0xf]
        %v2797 = vld [vmem:[%s2785 + $0x2c] sm:$0xf]
        %v2798 = vld [vmem:[%s2785 + $0x30] sm:$0xf]
        %v2799 = vld [vmem:[%s2785 + $0x34] sm:$0xf]
        %v2800 = vld [vmem:[%s2785 + $0x38] sm:$0xf]
        %v2801 = vld [vmem:[%s2785 + $0x3c] sm:$0xf]
        %v2802 = vrot.slane %v2686, 1
        %v2803 = vsel %vm2009, %v2687, %v2802
        %v2804 = vpack.c.b16 %v2803, %v2803
        %v2822 = vunpack.c.l.b16 %v2786
        %v2823 = vunpack.c.l.b16 %v2787
        %v2824 = vunpack.c.l.b16 %v2788
        %v2825 = vunpack.c.l.b16 %v2789
        %v2826 = vunpack.c.l.b16 %v2790
        %v2827 = vunpack.c.l.b16 %v2791
        %v2828 = vunpack.c.l.b16 %v2792
        %v2829 = vunpack.c.l.b16 %v2793
        %v2830 = vunpack.c.l.b16 %v2794
        %v2831 = vunpack.c.l.b16 %v2795
        %v2832 = vunpack.c.l.b16 %v2796
        %v2833 = vunpack.c.l.b16 %v2797
        %v2834 = vunpack.c.l.b16 %v2798
        %v2835 = vunpack.c.l.b16 %v2799
        %v2836 = vunpack.c.l.b16 %v2800
        %v2837 = vunpack.c.l.b16 %v2801
        %v2838 = vpack.c.b16 %v2823, %v2822
        %v2839 = vpack.c.b16 %v2825, %v2824
        %v2840 = vpack.c.b16 %v2827, %v2826
        %v2841 = vpack.c.b16 %v2829, %v2828
        %v2842 = vpack.c.b16 %v2831, %v2830
        %v2843 = vpack.c.b16 %v2833, %v2832
        %v2844 = vpack.c.b16 %v2835, %v2834
        %v2845 = vpack.c.b16 %v2837, %v2836
        %2854 = vmatprep.subr.bf16.mxu0 0
        %2855 = vmatpush1.bf16.msra.mxu0 %v2838
        %2856 = vmatprep.subr.bf16.mxu0 0
        %2857 = vmatpush1.bf16.msra.mxu0 %v2839
        %2858 = vmatprep.subr.bf16.mxu0 0
        %2859 = vmatpush1.bf16.msra.mxu0 %v2840
        %2860 = vmatprep.subr.bf16.mxu0 0
        %2861 = vmatpush1.bf16.msra.mxu0 %v2841
        %2862 = vmatprep.subr.bf16.mxu0 0
        %2863 = vmatpush1.bf16.msra.mxu0 %v2842
        %2864 = vmatprep.subr.bf16.mxu0 0
        %2865 = vmatpush1.bf16.msra.mxu0 %v2843
        %2866 = vmatprep.subr.bf16.mxu0 0
        %2867 = vmatpush1.bf16.msra.mxu0 %v2844
        %2868 = vmatprep.subr.bf16.mxu0 0
        %2869 = vmatpush1.bf16.msra.mxu0 %v2845
        %2870 = vmatprep.subr.bf16.mxu0 0
        %2871 = vmatpush1.bf16.msra.mxu0 0
        %2872 = vmatprep.subr.bf16.mxu0 0
        %2873 = vmatpush1.bf16.msra.mxu0 0
        %2874 = vmatprep.subr.bf16.mxu0 0
        %2875 = vmatpush1.bf16.msra.mxu0 0
        %2876 = vmatprep.subr.bf16.mxu0 0
        %2877 = vmatpush1.bf16.msra.mxu0 0
        %2878 = vmatprep.subr.bf16.mxu0 0
        %2879 = vmatpush1.bf16.msra.mxu0 0
        %2880 = vmatprep.subr.bf16.mxu0 0
        %2881 = vmatpush1.bf16.msra.mxu0 0
        %2882 = vmatprep.subr.bf16.mxu0 0
        %2883 = vmatpush1.bf16.msra.mxu0 0
        %2884 = vmatprep.subr.bf16.mxu0 0
        %2885 = vmatpush1.bf16.msra.mxu0 0
        %2886 = vmatprep.mubr.bf16.mxu0 0
        %2887 = vmatmul.mubr.bf16.gmra.mrb[0].mxu0 %v2804
        %v2888 = vpop.f32.mrb[0].mxu0
        %v2889 = vadd.f32 0.0, %v2888
        %v2890 = vpop.f32.mrb[0].mxu0
        %v2891 = vpop.f32.mrb[0].mxu0
        %v2892 = vpop.f32.mrb[0].mxu0
        %2893 = vdwg.mxu0
        %v2894 = vadd.f32 %v2784, %v2889
        %s2895 = scalar_lea.vmem %s385, 704 [#allocation11]
        %v2896 = vld [vmem:[%s2895] sm:$0xf]
        %v2897 = vld [vmem:[%s2895 + $0x4] sm:$0xf]
        %v2898 = vld [vmem:[%s2895 + $0x8] sm:$0xf]
        %v2899 = vld [vmem:[%s2895 + $0xc] sm:$0xf]
        %v2900 = vld [vmem:[%s2895 + $0x10] sm:$0xf]
        %v2901 = vld [vmem:[%s2895 + $0x14] sm:$0xf]
        %v2902 = vld [vmem:[%s2895 + $0x18] sm:$0xf]
        %v2903 = vld [vmem:[%s2895 + $0x1c] sm:$0xf]
        %v2904 = vld [vmem:[%s2895 + $0x20] sm:$0xf]
        %v2905 = vld [vmem:[%s2895 + $0x24] sm:$0xf]
        %v2906 = vld [vmem:[%s2895 + $0x28] sm:$0xf]
        %v2907 = vld [vmem:[%s2895 + $0x2c] sm:$0xf]
        %v2908 = vld [vmem:[%s2895 + $0x30] sm:$0xf]
        %v2909 = vld [vmem:[%s2895 + $0x34] sm:$0xf]
        %v2910 = vld [vmem:[%s2895 + $0x38] sm:$0xf]
        %v2911 = vld [vmem:[%s2895 + $0x3c] sm:$0xf]
        %v2912 = vrot.slane %v2686, 2
        %v2913 = vrot.slane %v2687, 1
        %v2914 = vsel %vm2009, %v2913, %v2912
        %v2915 = vpack.c.b16 %v2914, %v2914
        %v2933 = vunpack.c.l.b16 %v2896
        %v2934 = vunpack.c.l.b16 %v2897
        %v2935 = vunpack.c.l.b16 %v2898
        %v2936 = vunpack.c.l.b16 %v2899
        %v2937 = vunpack.c.l.b16 %v2900
        %v2938 = vunpack.c.l.b16 %v2901
        %v2939 = vunpack.c.l.b16 %v2902
        %v2940 = vunpack.c.l.b16 %v2903
        %v2941 = vunpack.c.l.b16 %v2904
        %v2942 = vunpack.c.l.b16 %v2905
        %v2943 = vunpack.c.l.b16 %v2906
        %v2944 = vunpack.c.l.b16 %v2907
        %v2945 = vunpack.c.l.b16 %v2908
        %v2946 = vunpack.c.l.b16 %v2909
        %v2947 = vunpack.c.l.b16 %v2910
        %v2948 = vunpack.c.l.b16 %v2911
        %v2949 = vpack.c.b16 %v2934, %v2933
        %v2950 = vpack.c.b16 %v2936, %v2935
        %v2951 = vpack.c.b16 %v2938, %v2937
        %v2952 = vpack.c.b16 %v2940, %v2939
        %v2953 = vpack.c.b16 %v2942, %v2941
        %v2954 = vpack.c.b16 %v2944, %v2943
        %v2955 = vpack.c.b16 %v2946, %v2945
        %v2956 = vpack.c.b16 %v2948, %v2947
        %2965 = vmatprep.subr.bf16.mxu0 0
        %2966 = vmatpush1.bf16.msra.mxu0 %v2949
        %2967 = vmatprep.subr.bf16.mxu0 0
        %2968 = vmatpush1.bf16.msra.mxu0 %v2950
        %2969 = vmatprep.subr.bf16.mxu0 0
        %2970 = vmatpush1.bf16.msra.mxu0 %v2951
        %2971 = vmatprep.subr.bf16.mxu0 0
        %2972 = vmatpush1.bf16.msra.mxu0 %v2952
        %2973 = vmatprep.subr.bf16.mxu0 0
        %2974 = vmatpush1.bf16.msra.mxu0 %v2953
        %2975 = vmatprep.subr.bf16.mxu0 0
        %2976 = vmatpush1.bf16.msra.mxu0 %v2954
        %2977 = vmatprep.subr.bf16.mxu0 0
        %2978 = vmatpush1.bf16.msra.mxu0 %v2955
        %2979 = vmatprep.subr.bf16.mxu0 0
        %2980 = vmatpush1.bf16.msra.mxu0 %v2956
        %2981 = vmatprep.subr.bf16.mxu0 0
        %2982 = vmatpush1.bf16.msra.mxu0 0
        %2983 = vmatprep.subr.bf16.mxu0 0
        %2984 = vmatpush1.bf16.msra.mxu0 0
        %2985 = vmatprep.subr.bf16.mxu0 0
        %2986 = vmatpush1.bf16.msra.mxu0 0
        %2987 = vmatprep.subr.bf16.mxu0 0
        %2988 = vmatpush1.bf16.msra.mxu0 0
        %2989 = vmatprep.subr.bf16.mxu0 0
        %2990 = vmatpush1.bf16.msra.mxu0 0
        %2991 = vmatprep.subr.bf16.mxu0 0
        %2992 = vmatpush1.bf16.msra.mxu0 0
        %2993 = vmatprep.subr.bf16.mxu0 0
        %2994 = vmatpush1.bf16.msra.mxu0 0
        %2995 = vmatprep.subr.bf16.mxu0 0
        %2996 = vmatpush1.bf16.msra.mxu0 0
        %2997 = vmatprep.mubr.bf16.mxu0 0
        %2998 = vmatmul.mubr.bf16.gmra.mrb[0].mxu0 %v2915
        %v2999 = vpop.f32.mrb[0].mxu0
        %v3000 = vadd.f32 0.0, %v2999
        %v3001 = vpop.f32.mrb[0].mxu0
        %v3002 = vpop.f32.mrb[0].mxu0
        %v3003 = vpop.f32.mrb[0].mxu0
        %3004 = vdwg.mxu0
        %v3005 = vadd.f32 %v2894, %v3000
        %s3006 = scalar_lea.vmem %s385, 768 [#allocation11]
        %v3007 = vld [vmem:[%s3006] sm:$0xf]
        %v3008 = vld [vmem:[%s3006 + $0x4] sm:$0xf]
        %v3009 = vld [vmem:[%s3006 + $0x8] sm:$0xf]
        %v3010 = vld [vmem:[%s3006 + $0xc] sm:$0xf]
        %v3011 = vld [vmem:[%s3006 + $0x10] sm:$0xf]
        %v3012 = vld [vmem:[%s3006 + $0x14] sm:$0xf]
        %v3013 = vld [vmem:[%s3006 + $0x18] sm:$0xf]
        %v3014 = vld [vmem:[%s3006 + $0x1c] sm:$0xf]
        %v3015 = vld [vmem:[%s3006 + $0x20] sm:$0xf]
        %v3016 = vld [vmem:[%s3006 + $0x24] sm:$0xf]
        %v3017 = vld [vmem:[%s3006 + $0x28] sm:$0xf]
        %v3018 = vld [vmem:[%s3006 + $0x2c] sm:$0xf]
        %v3019 = vld [vmem:[%s3006 + $0x30] sm:$0xf]
        %v3020 = vld [vmem:[%s3006 + $0x34] sm:$0xf]
        %v3021 = vld [vmem:[%s3006 + $0x38] sm:$0xf]
        %v3022 = vld [vmem:[%s3006 + $0x3c] sm:$0xf]
        %v3023 = vrot.slane %v2686, 3
        %v3024 = vrot.slane %v2687, 2
        %v3025 = vsel %vm2009, %v3024, %v3023
        %v3026 = vpack.c.b16 %v3025, %v3025
        %v3044 = vunpack.c.l.b16 %v3007
        %v3045 = vunpack.c.l.b16 %v3008
        %v3046 = vunpack.c.l.b16 %v3009
        %v3047 = vunpack.c.l.b16 %v3010
        %v3048 = vunpack.c.l.b16 %v3011
        %v3049 = vunpack.c.l.b16 %v3012
        %v3050 = vunpack.c.l.b16 %v3013
        %v3051 = vunpack.c.l.b16 %v3014
        %v3052 = vunpack.c.l.b16 %v3015
        %v3053 = vunpack.c.l.b16 %v3016
        %v3054 = vunpack.c.l.b16 %v3017
        %v3055 = vunpack.c.l.b16 %v3018
        %v3056 = vunpack.c.l.b16 %v3019
        %v3057 = vunpack.c.l.b16 %v3020
        %v3058 = vunpack.c.l.b16 %v3021
        %v3059 = vunpack.c.l.b16 %v3022
        %v3060 = vpack.c.b16 %v3045, %v3044
        %v3061 = vpack.c.b16 %v3047, %v3046
        %v3062 = vpack.c.b16 %v3049, %v3048
        %v3063 = vpack.c.b16 %v3051, %v3050
        %v3064 = vpack.c.b16 %v3053, %v3052
        %v3065 = vpack.c.b16 %v3055, %v3054
        %v3066 = vpack.c.b16 %v3057, %v3056
        %v3067 = vpack.c.b16 %v3059, %v3058
        %3076 = vmatprep.subr.bf16.mxu0 0
        %3077 = vmatpush1.bf16.msra.mxu0 %v3060
        %3078 = vmatprep.subr.bf16.mxu0 0
        %3079 = vmatpush1.bf16.msra.mxu0 %v3061
        %3080 = vmatprep.subr.bf16.mxu0 0
        %3081 = vmatpush1.bf16.msra.mxu0 %v3062
        %3082 = vmatprep.subr.bf16.mxu0 0
        %3083 = vmatpush1.bf16.msra.mxu0 %v3063
        %3084 = vmatprep.subr.bf16.mxu0 0
        %3085 = vmatpush1.bf16.msra.mxu0 %v3064
        %3086 = vmatprep.subr.bf16.mxu0 0
        %3087 = vmatpush1.bf16.msra.mxu0 %v3065
        %3088 = vmatprep.subr.bf16.mxu0 0
        %3089 = vmatpush1.bf16.msra.mxu0 %v3066
        %3090 = vmatprep.subr.bf16.mxu0 0
        %3091 = vmatpush1.bf16.msra.mxu0 %v3067
        %3092 = vmatprep.subr.bf16.mxu0 0
        %3093 = vmatpush1.bf16.msra.mxu0 0
        %3094 = vmatprep.subr.bf16.mxu0 0
        %3095 = vmatpush1.bf16.msra.mxu0 0
        %3096 = vmatprep.subr.bf16.mxu0 0
        %3097 = vmatpush1.bf16.msra.mxu0 0
        %3098 = vmatprep.subr.bf16.mxu0 0
        %3099 = vmatpush1.bf16.msra.mxu0 0
        %3100 = vmatprep.subr.bf16.mxu0 0
        %3101 = vmatpush1.bf16.msra.mxu0 0
        %3102 = vmatprep.subr.bf16.mxu0 0
        %3103 = vmatpush1.bf16.msra.mxu0 0
        %3104 = vmatprep.subr.bf16.mxu0 0
        %3105 = vmatpush1.bf16.msra.mxu0 0
        %3106 = vmatprep.subr.bf16.mxu0 0
        %3107 = vmatpush1.bf16.msra.mxu0 0
        %3108 = vmatprep.mubr.bf16.mxu0 0
        %3109 = vmatmul.mubr.bf16.gmra.mrb[0].mxu0 %v3026
        %v3110 = vpop.f32.mrb[0].mxu0
        %v3111 = vadd.f32 0.0, %v3110
        %v3112 = vpop.f32.mrb[0].mxu0
        %v3113 = vpop.f32.mrb[0].mxu0
        %v3114 = vpop.f32.mrb[0].mxu0
        %3115 = vdwg.mxu0
        %v3116 = vadd.f32 %v3005, %v3111
        %v3117 = vmax.f32 %v3116, 0.0
        %v3118 = vpack.c.bf16 %v3117, %v3117
        %s3119 = scalar_lea.vmem %s385, 832 [#allocation11]
        %v3120 = vld [vmem:[%s3119] sm:$0xf]
        %v3121 = vld [vmem:[%s3119 + $0x4] sm:$0xf]
        %v3122 = vld [vmem:[%s3119 + $0x8] sm:$0xf]
        %v3123 = vld [vmem:[%s3119 + $0xc] sm:$0xf]
        %v3124 = vld [vmem:[%s3119 + $0x10] sm:$0xf]
        %v3125 = vld [vmem:[%s3119 + $0x14] sm:$0xf]
        %v3126 = vld [vmem:[%s3119 + $0x18] sm:$0xf]
        %v3127 = vld [vmem:[%s3119 + $0x1c] sm:$0xf]
        %v3128 = vld [vmem:[%s3119 + $0x20] sm:$0xf]
        %v3129 = vld [vmem:[%s3119 + $0x24] sm:$0xf]
        %v3130 = vld [vmem:[%s3119 + $0x28] sm:$0xf]
        %v3131 = vld [vmem:[%s3119 + $0x2c] sm:$0xf]
        %v3132 = vld [vmem:[%s3119 + $0x30] sm:$0xf]
        %v3133 = vld [vmem:[%s3119 + $0x34] sm:$0xf]
        %v3134 = vld [vmem:[%s3119 + $0x38] sm:$0xf]
        %v3135 = vld [vmem:[%s3119 + $0x3c] sm:$0xf]
        %v3136 = vld [vmem:[%s394 + $0x7] sm:$0x1]
        %v3137 = vlaneseq
        %v3138 = vshrl.u32 %v3137, 7
        %v3139 = vsub.s32 0, %v3138
        %v3140 = vrot.slane %v3136, %v3139
        %v3157 = vunpack.c.l.b16 %v3120
        %v3158 = vunpack.c.l.b16 %v3121
        %v3159 = vunpack.c.l.b16 %v3122
        %v3160 = vunpack.c.l.b16 %v3123
        %v3161 = vunpack.c.l.b16 %v3124
        %v3162 = vunpack.c.l.b16 %v3125
        %v3163 = vunpack.c.l.b16 %v3126
        %v3164 = vunpack.c.l.b16 %v3127
        %v3165 = vunpack.c.l.b16 %v3128
        %v3166 = vunpack.c.l.b16 %v3129
        %v3167 = vunpack.c.l.b16 %v3130
        %v3168 = vunpack.c.l.b16 %v3131
        %v3169 = vunpack.c.l.b16 %v3132
        %v3170 = vunpack.c.l.b16 %v3133
        %v3171 = vunpack.c.l.b16 %v3134
        %v3172 = vunpack.c.l.b16 %v3135
        %v3173 = vpack.c.b16 %v3158, %v3157
        %v3174 = vpack.c.b16 %v3160, %v3159
        %v3175 = vpack.c.b16 %v3162, %v3161
        %v3176 = vpack.c.b16 %v3164, %v3163
        %v3177 = vpack.c.b16 %v3166, %v3165
        %v3178 = vpack.c.b16 %v3168, %v3167
        %v3179 = vpack.c.b16 %v3170, %v3169
        %v3180 = vpack.c.b16 %v3172, %v3171
        %3189 = vmatprep.subr.bf16.mxu0 0
        %3190 = vmatpush1.bf16.msra.mxu0 %v3173
        %3191 = vmatprep.subr.bf16.mxu0 0
        %3192 = vmatpush1.bf16.msra.mxu0 %v3174
        %3193 = vmatprep.subr.bf16.mxu0 0
        %3194 = vmatpush1.bf16.msra.mxu0 %v3175
        %3195 = vmatprep.subr.bf16.mxu0 0
        %3196 = vmatpush1.bf16.msra.mxu0 %v3176
        %3197 = vmatprep.subr.bf16.mxu0 0
        %3198 = vmatpush1.bf16.msra.mxu0 %v3177
        %3199 = vmatprep.subr.bf16.mxu0 0
        %3200 = vmatpush1.bf16.msra.mxu0 %v3178
        %3201 = vmatprep.subr.bf16.mxu0 0
        %3202 = vmatpush1.bf16.msra.mxu0 %v3179
        %3203 = vmatprep.subr.bf16.mxu0 0
        %3204 = vmatpush1.bf16.msra.mxu0 %v3180
        %3205 = vmatprep.subr.bf16.mxu0 0
        %3206 = vmatpush1.bf16.msra.mxu0 0
        %3207 = vmatprep.subr.bf16.mxu0 0
        %3208 = vmatpush1.bf16.msra.mxu0 0
        %3209 = vmatprep.subr.bf16.mxu0 0
        %3210 = vmatpush1.bf16.msra.mxu0 0
        %3211 = vmatprep.subr.bf16.mxu0 0
        %3212 = vmatpush1.bf16.msra.mxu0 0
        %3213 = vmatprep.subr.bf16.mxu0 0
        %3214 = vmatpush1.bf16.msra.mxu0 0
        %3215 = vmatprep.subr.bf16.mxu0 0
        %3216 = vmatpush1.bf16.msra.mxu0 0
        %3217 = vmatprep.subr.bf16.mxu0 0
        %3218 = vmatpush1.bf16.msra.mxu0 0
        %3219 = vmatprep.subr.bf16.mxu0 0
        %3220 = vmatpush1.bf16.msra.mxu0 0
        %3221 = vmatprep.mubr.bf16.mxu0 0
        %3222 = vmatmul.mubr.bf16.gmra.mrb[0].mxu0 %v3118
        %v3223 = vpop.f32.mrb[0].mxu0
        %v3224 = vadd.f32 %v3140, %v3223
        %v3225 = vpop.f32.mrb[0].mxu0
        %v3226 = vpop.f32.mrb[0].mxu0
        %v3227 = vpop.f32.mrb[0].mxu0
        %3228 = vdwg.mxu0
        %v3229 = vmax.f32 %v3224, 0.0
        %vm3230 = vcmask 1041408
        %v3231 = vsel %vm3230, %v3229, 0.0
        %3232 = vadd.xlane.f32.xlu0 %v3231
        %v3233 = vpop.xlane.xlu0 %3232
        %v3234 = vrcp.pop 128.0
        %v3235 = vmul.f32 %v3233, %v3234
        %v3236 = vsub.f32 %v3229, %v3235
        %v3237 = vmul.f32 %v3236, %v3236
        %v3238 = vsel %vm3230, %v3237, 0.0
        %3239 = vadd.xlane.f32.xlu0 %v3238
        %v3240 = vpop.xlane.xlu0 %3239
        %v3241 = vmul.f32 %v3240, %v3234
        %v3242 = vadd.f32 %v3241, 1e-05
        %v3243 = vrsqrt.pop %v3242
        %v3244 = vmul.f32 %v3236, %v3243
        %v3245 = vld [vmem:[%s394 + $0x8] sm:$0x1]
        %v3246 = vlaneseq
        %v3247 = vshrl.u32 %v3246, 7
        %v3248 = vsub.s32 0, %v3247
        %v3249 = vrot.slane %v3245, %v3248
        %v3250 = vmul.f32 %v3244, %v3249
        %v3251 = vld [vmem:[%s394 + $0x9] sm:$0x1]
        %v3252 = vlaneseq
        %v3253 = vshrl.u32 %v3252, 7
        %v3254 = vsub.s32 0, %v3253
        %v3255 = vrot.slane %v3251, %v3254
        %v3256 = vadd.f32 %v3250, %v3255
        %v3257 = vpack.c.bf16 %v3256, %v3256
        %s3258 = scalar_lea.vmem %s385, 896 [#allocation11]
        %v3259 = vld [vmem:[%s3258] sm:$0xf]
        %v3260 = vld [vmem:[%s3258 + $0x4] sm:$0xf]
        %v3261 = vld [vmem:[%s3258 + $0x8] sm:$0xf]
        %v3262 = vld [vmem:[%s3258 + $0xc] sm:$0xf]
        %v3263 = vld [vmem:[%s3258 + $0x10] sm:$0xf]
        %v3264 = vld [vmem:[%s3258 + $0x14] sm:$0xf]
        %v3265 = vld [vmem:[%s3258 + $0x18] sm:$0xf]
        %v3266 = vld [vmem:[%s3258 + $0x1c] sm:$0xf]
        %v3267 = vld [vmem:[%s3258 + $0x20] sm:$0xf]
        %v3268 = vld [vmem:[%s3258 + $0x24] sm:$0xf]
        %v3269 = vld [vmem:[%s3258 + $0x28] sm:$0xf]
        %v3270 = vld [vmem:[%s3258 + $0x2c] sm:$0xf]
        %v3271 = vld [vmem:[%s3258 + $0x30] sm:$0xf]
        %v3272 = vld [vmem:[%s3258 + $0x34] sm:$0xf]
        %v3273 = vld [vmem:[%s3258 + $0x38] sm:$0xf]
        %v3274 = vld [vmem:[%s3258 + $0x3c] sm:$0xf]
        %v3275 = vld [vmem:[%s394 + $0xa] sm:$0x1]
        %v3276 = vlaneseq
        %v3277 = vshrl.u32 %v3276, 7
        %v3278 = vsub.s32 0, %v3277
        %v3279 = vrot.slane %v3275, %v3278
        %v3296 = vunpack.c.l.b16 %v3259
        %v3297 = vunpack.c.l.b16 %v3260
        %v3298 = vunpack.c.l.b16 %v3261
        %v3299 = vunpack.c.l.b16 %v3262
        %v3300 = vunpack.c.l.b16 %v3263
        %v3301 = vunpack.c.l.b16 %v3264
        %v3302 = vunpack.c.l.b16 %v3265
        %v3303 = vunpack.c.l.b16 %v3266
        %v3304 = vunpack.c.l.b16 %v3267
        %v3305 = vunpack.c.l.b16 %v3268
        %v3306 = vunpack.c.l.b16 %v3269
        %v3307 = vunpack.c.l.b16 %v3270
        %v3308 = vunpack.c.l.b16 %v3271
        %v3309 = vunpack.c.l.b16 %v3272
        %v3310 = vunpack.c.l.b16 %v3273
        %v3311 = vunpack.c.l.b16 %v3274
        %v3312 = vpack.c.b16 %v3297, %v3296
        %v3313 = vpack.c.b16 %v3299, %v3298
        %v3314 = vpack.c.b16 %v3301, %v3300
        %v3315 = vpack.c.b16 %v3303, %v3302
        %v3316 = vpack.c.b16 %v3305, %v3304
        %v3317 = vpack.c.b16 %v3307, %v3306
        %v3318 = vpack.c.b16 %v3309, %v3308
        %v3319 = vpack.c.b16 %v3311, %v3310
        %3328 = vmatprep.subr.bf16.mxu0 0
        %3329 = vmatpush1.bf16.msra.mxu0 %v3312
        %3330 = vmatprep.subr.bf16.mxu0 0
        %3331 = vmatpush1.bf16.msra.mxu0 %v3313
        %3332 = vmatprep.subr.bf16.mxu0 0
        %3333 = vmatpush1.bf16.msra.mxu0 %v3314
        %3334 = vmatprep.subr.bf16.mxu0 0
        %3335 = vmatpush1.bf16.msra.mxu0 %v3315
        %3336 = vmatprep.subr.bf16.mxu0 0
        %3337 = vmatpush1.bf16.msra.mxu0 %v3316
        %3338 = vmatprep.subr.bf16.mxu0 0
        %3339 = vmatpush1.bf16.msra.mxu0 %v3317
        %3340 = vmatprep.subr.bf16.mxu0 0
        %3341 = vmatpush1.bf16.msra.mxu0 %v3318
        %3342 = vmatprep.subr.bf16.mxu0 0
        %3343 = vmatpush1.bf16.msra.mxu0 %v3319
        %3344 = vmatprep.subr.bf16.mxu0 0
        %3345 = vmatpush1.bf16.msra.mxu0 0
        %3346 = vmatprep.subr.bf16.mxu0 0
        %3347 = vmatpush1.bf16.msra.mxu0 0
        %3348 = vmatprep.subr.bf16.mxu0 0
        %3349 = vmatpush1.bf16.msra.mxu0 0
        %3350 = vmatprep.subr.bf16.mxu0 0
        %3351 = vmatpush1.bf16.msra.mxu0 0
        %3352 = vmatprep.subr.bf16.mxu0 0
        %3353 = vmatpush1.bf16.msra.mxu0 0
        %3354 = vmatprep.subr.bf16.mxu0 0
        %3355 = vmatpush1.bf16.msra.mxu0 0
        %3356 = vmatprep.subr.bf16.mxu0 0
        %3357 = vmatpush1.bf16.msra.mxu0 0
        %3358 = vmatprep.subr.bf16.mxu0 0
        %3359 = vmatpush1.bf16.msra.mxu0 0
        %3360 = vmatprep.mubr.bf16.mxu0 0
        %3361 = vmatmul.mubr.bf16.gmra.mrb[0].mxu0 %v3257
        %v3362 = vpop.f32.mrb[0].mxu0
        %v3363 = vadd.f32 %v3279, %v3362
        %v3364 = vpop.f32.mrb[0].mxu0
        %v3365 = vpop.f32.mrb[0].mxu0
        %v3366 = vpop.f32.mrb[0].mxu0
        %3367 = vdwg.mxu0
        %v3368 = vmax.f32 %v3363, 0.0
        %v3369 = vpack.c.bf16 %v3368, %v3368
        %s3370 = scalar_lea.vmem %s385, 960 [#allocation11]
        %v3371 = vld [vmem:[%s3370] sm:$0xf]
        %v3372 = vld [vmem:[%s3370 + $0x4] sm:$0xf]
        %v3373 = vld [vmem:[%s3370 + $0x8] sm:$0xf]
        %v3374 = vld [vmem:[%s3370 + $0xc] sm:$0xf]
        %v3375 = vld [vmem:[%s3370 + $0x10] sm:$0xf]
        %v3376 = vld [vmem:[%s3370 + $0x14] sm:$0xf]
        %v3377 = vld [vmem:[%s3370 + $0x18] sm:$0xf]
        %v3378 = vld [vmem:[%s3370 + $0x1c] sm:$0xf]
        %v3379 = vld [vmem:[%s3370 + $0x20] sm:$0xf]
        %v3380 = vld [vmem:[%s3370 + $0x24] sm:$0xf]
        %v3381 = vld [vmem:[%s3370 + $0x28] sm:$0xf]
        %v3382 = vld [vmem:[%s3370 + $0x2c] sm:$0xf]
        %v3383 = vld [vmem:[%s3370 + $0x30] sm:$0xf]
        %v3384 = vld [vmem:[%s3370 + $0x34] sm:$0xf]
        %v3385 = vld [vmem:[%s3370 + $0x38] sm:$0xf]
        %v3386 = vld [vmem:[%s3370 + $0x3c] sm:$0xf]
        %v3387 = vld [vmem:[%s394 + $0xb] sm:$0x1]
        %v3388 = vlaneseq
        %v3389 = vshrl.u32 %v3388, 7
        %v3390 = vsub.s32 0, %v3389
        %v3391 = vrot.slane %v3387, %v3390
        %v3408 = vunpack.c.l.b16 %v3371
        %v3409 = vunpack.c.l.b16 %v3372
        %v3410 = vunpack.c.l.b16 %v3373
        %v3411 = vunpack.c.l.b16 %v3374
        %v3412 = vunpack.c.l.b16 %v3375
        %v3413 = vunpack.c.l.b16 %v3376
        %v3414 = vunpack.c.l.b16 %v3377
        %v3415 = vunpack.c.l.b16 %v3378
        %v3416 = vunpack.c.l.b16 %v3379
        %v3417 = vunpack.c.l.b16 %v3380
        %v3418 = vunpack.c.l.b16 %v3381
        %v3419 = vunpack.c.l.b16 %v3382
        %v3420 = vunpack.c.l.b16 %v3383
        %v3421 = vunpack.c.l.b16 %v3384
        %v3422 = vunpack.c.l.b16 %v3385
        %v3423 = vunpack.c.l.b16 %v3386
        %v3424 = vpack.c.b16 %v3409, %v3408
        %v3425 = vpack.c.b16 %v3411, %v3410
        %v3426 = vpack.c.b16 %v3413, %v3412
        %v3427 = vpack.c.b16 %v3415, %v3414
        %v3428 = vpack.c.b16 %v3417, %v3416
        %v3429 = vpack.c.b16 %v3419, %v3418
        %v3430 = vpack.c.b16 %v3421, %v3420
        %v3431 = vpack.c.b16 %v3423, %v3422
        %3440 = vmatprep.subr.bf16.mxu0 0
        %3441 = vmatpush1.bf16.msra.mxu0 %v3424
        %3442 = vmatprep.subr.bf16.mxu0 0
        %3443 = vmatpush1.bf16.msra.mxu0 %v3425
        %3444 = vmatprep.subr.bf16.mxu0 0
        %3445 = vmatpush1.bf16.msra.mxu0 %v3426
        %3446 = vmatprep.subr.bf16.mxu0 0
        %3447 = vmatpush1.bf16.msra.mxu0 %v3427
        %3448 = vmatprep.subr.bf16.mxu0 0
        %3449 = vmatpush1.bf16.msra.mxu0 %v3428
        %3450 = vmatprep.subr.bf16.mxu0 0
        %3451 = vmatpush1.bf16.msra.mxu0 %v3429
        %3452 = vmatprep.subr.bf16.mxu0 0
        %3453 = vmatpush1.bf16.msra.mxu0 %v3430
        %3454 = vmatprep.subr.bf16.mxu0 0
        %3455 = vmatpush1.bf16.msra.mxu0 %v3431
        %3456 = vmatprep.subr.bf16.mxu0 0
        %3457 = vmatpush1.bf16.msra.mxu0 0
        %3458 = vmatprep.subr.bf16.mxu0 0
        %3459 = vmatpush1.bf16.msra.mxu0 0
        %3460 = vmatprep.subr.bf16.mxu0 0
        %3461 = vmatpush1.bf16.msra.mxu0 0
        %3462 = vmatprep.subr.bf16.mxu0 0
        %3463 = vmatpush1.bf16.msra.mxu0 0
        %3464 = vmatprep.subr.bf16.mxu0 0
        %3465 = vmatpush1.bf16.msra.mxu0 0
        %3466 = vmatprep.subr.bf16.mxu0 0
        %3467 = vmatpush1.bf16.msra.mxu0 0
        %3468 = vmatprep.subr.bf16.mxu0 0
        %3469 = vmatpush1.bf16.msra.mxu0 0
        %3470 = vmatprep.subr.bf16.mxu0 0
        %3471 = vmatpush1.bf16.msra.mxu0 0
        %3472 = vmatprep.mubr.bf16.mxu0 0
        %3473 = vmatmul.mubr.bf16.gmra.mrb[0].mxu0 %v3369
        %v3474 = vpop.f32.mrb[0].mxu0
        %v3475 = vadd.f32 %v3391, %v3474
        %v3476 = vpop.f32.mrb[0].mxu0
        %v3477 = vpop.f32.mrb[0].mxu0
        %v3478 = vpop.f32.mrb[0].mxu0
        %3479 = vdwg.mxu0
        %v3480 = vmax.f32 %v3475, 0.0
        %v3481 = vpack.c.bf16 %v3480, %v3480
        %s3482 = scalar_lea.vmem %s385, 1024 [#allocation11]
        %v3483 = vld [vmem:[%s3482] sm:$0xf]
        %v3484 = vld [vmem:[%s3482 + $0x4] sm:$0xf]
        %v3485 = vld [vmem:[%s3482 + $0x8] sm:$0xf]
        %v3486 = vld [vmem:[%s3482 + $0xc] sm:$0xf]
        %v3487 = vld [vmem:[%s3482 + $0x10] sm:$0xf]
        %v3488 = vld [vmem:[%s3482 + $0x14] sm:$0xf]
        %v3489 = vld [vmem:[%s3482 + $0x18] sm:$0xf]
        %v3490 = vld [vmem:[%s3482 + $0x1c] sm:$0xf]
        %v3491 = vld [vmem:[%s3482 + $0x20] sm:$0xf]
        %v3492 = vld [vmem:[%s3482 + $0x24] sm:$0xf]
        %v3493 = vld [vmem:[%s3482 + $0x28] sm:$0xf]
        %v3494 = vld [vmem:[%s3482 + $0x2c] sm:$0xf]
        %v3495 = vld [vmem:[%s3482 + $0x30] sm:$0xf]
        %v3496 = vld [vmem:[%s3482 + $0x34] sm:$0xf]
        %v3497 = vld [vmem:[%s3482 + $0x38] sm:$0xf]
        %v3498 = vld [vmem:[%s3482 + $0x3c] sm:$0xf]
        %v3499 = vld [vmem:[%s394 + $0xc] sm:$0x1]
        %v3500 = vlaneseq
        %v3501 = vshrl.u32 %v3500, 7
        %v3502 = vsub.s32 0, %v3501
        %v3503 = vrot.slane %v3499, %v3502
        %v3520 = vunpack.c.l.b16 %v3483
        %v3521 = vunpack.c.l.b16 %v3484
        %v3522 = vunpack.c.l.b16 %v3485
        %v3523 = vunpack.c.l.b16 %v3486
        %v3524 = vunpack.c.l.b16 %v3487
        %v3525 = vunpack.c.l.b16 %v3488
        %v3526 = vunpack.c.l.b16 %v3489
        %v3527 = vunpack.c.l.b16 %v3490
        %v3528 = vunpack.c.l.b16 %v3491
        %v3529 = vunpack.c.l.b16 %v3492
        %v3530 = vunpack.c.l.b16 %v3493
        %v3531 = vunpack.c.l.b16 %v3494
        %v3532 = vunpack.c.l.b16 %v3495
        %v3533 = vunpack.c.l.b16 %v3496
        %v3534 = vunpack.c.l.b16 %v3497
        %v3535 = vunpack.c.l.b16 %v3498
        %v3536 = vpack.c.b16 %v3521, %v3520
        %v3537 = vpack.c.b16 %v3523, %v3522
        %v3538 = vpack.c.b16 %v3525, %v3524
        %v3539 = vpack.c.b16 %v3527, %v3526
        %v3540 = vpack.c.b16 %v3529, %v3528
        %v3541 = vpack.c.b16 %v3531, %v3530
        %v3542 = vpack.c.b16 %v3533, %v3532
        %v3543 = vpack.c.b16 %v3535, %v3534
        %3552 = vmatprep.subr.bf16.mxu0 0
        %3553 = vmatpush1.bf16.msra.mxu0 %v3536
        %3554 = vmatprep.subr.bf16.mxu0 0
        %3555 = vmatpush1.bf16.msra.mxu0 %v3537
        %3556 = vmatprep.subr.bf16.mxu0 0
        %3557 = vmatpush1.bf16.msra.mxu0 %v3538
        %3558 = vmatprep.subr.bf16.mxu0 0
        %3559 = vmatpush1.bf16.msra.mxu0 %v3539
        %3560 = vmatprep.subr.bf16.mxu0 0
        %3561 = vmatpush1.bf16.msra.mxu0 %v3540
        %3562 = vmatprep.subr.bf16.mxu0 0
        %3563 = vmatpush1.bf16.msra.mxu0 %v3541
        %3564 = vmatprep.subr.bf16.mxu0 0
        %3565 = vmatpush1.bf16.msra.mxu0 %v3542
        %3566 = vmatprep.subr.bf16.mxu0 0
        %3567 = vmatpush1.bf16.msra.mxu0 %v3543
        %3568 = vmatprep.subr.bf16.mxu0 0
        %3569 = vmatpush1.bf16.msra.mxu0 0
        %3570 = vmatprep.subr.bf16.mxu0 0
        %3571 = vmatpush1.bf16.msra.mxu0 0
        %3572 = vmatprep.subr.bf16.mxu0 0
        %3573 = vmatpush1.bf16.msra.mxu0 0
        %3574 = vmatprep.subr.bf16.mxu0 0
        %3575 = vmatpush1.bf16.msra.mxu0 0
        %3576 = vmatprep.subr.bf16.mxu0 0
        %3577 = vmatpush1.bf16.msra.mxu0 0
        %3578 = vmatprep.subr.bf16.mxu0 0
        %3579 = vmatpush1.bf16.msra.mxu0 0
        %3580 = vmatprep.subr.bf16.mxu0 0
        %3581 = vmatpush1.bf16.msra.mxu0 0
        %3582 = vmatprep.subr.bf16.mxu0 0
        %3583 = vmatpush1.bf16.msra.mxu0 0
        %3584 = vmatprep.mubr.bf16.mxu0 0
        %3585 = vmatmul.mubr.bf16.gmra.mrb[0].mxu0 %v3481
        %v3586 = vpop.f32.mrb[0].mxu0
        %v3587 = vadd.f32 %v3503, %v3586
        %v3588 = vpop.f32.mrb[0].mxu0
        %v3589 = vpop.f32.mrb[0].mxu0
        %v3590 = vpop.f32.mrb[0].mxu0
        %3591 = vdwg.mxu0
        %v3592 = vsel %vm3230, %v3587, -inf
        %3593 = vmax.xlane.f32.xlu0 %v3592
        %v3594 = vpop.xlane.xlu0 %3593
        %v3595 = vsub.f32 %v3587, %v3594
        %v3596 = vmul.f32 %v3595, 1.442695
        %v3597 = vpow.pop %v3596
        %v3598 = vsel %vm3230, %v3597, 0.0
        %3599 = vadd.xlane.f32.xlu0 %v3598
        %v3600 = vpop.xlane.xlu0 %3599
        %v3601 = vlog2.pop %v3600
        %v3602 = vmul.f32 %v3601, 0.6931472
        %v3603 = vadd.f32 %v3602, %v3594
        %v3604 = vsub.f32 %v3587, %v3603
        %3605 = vst [vmem:[%s431] sm:$0x3] %v3604
        %s3606 = sand.u32 %s214, 1
        %s3607 = scalar_lea.sflag [#allocation4], %s3606
        %s3608 = sand.u32 %s214, 1
        %s3609 = smul.addr %s3608, 2
        %s3610 = scalar_lea.vmem [#allocation14], %s3609
        // Predicated region
        $region81: #{tpu_custom_call.1} parent=51 // pred_check
          %p3611 = pneg %p224
        $region82: #{tpu_custom_call.1} parent=51 // pred_check_branch
          %3613 = sbr.rel (%p3611) target = $region84
        $region83: #{tpu_custom_call.1} parent=51 // pred_region
          %s3615 = ssub.s32 32, 32
          %3616 = vsyncadd %s3607, %s3615
          %s3617 = smul.addr %s28, 32
          %s3618 = scalar_lea.hbm %s8, %s3617
          %s3620 = sshll.u32 %s3610, 4
          %s3621 = int_to_ptr.vmem [resolvable:$true] %s3620
          %3623 = dma.vmem_to_hbm [thread:$0]  %s3621, 32, %s3618, %s3607
        $region84: #{tpu_custom_call.1} parent=51 // pred_fallthru
          _
      $region52: #{tpu_custom_call.1} parent=5 // pred_fallthru
        _
      %p3624 = scmp.le.s32.totalorder 2, %s23
      // Predicated region
      $region85: #{tpu_custom_call.1} parent=5 // pred_check
        %p3625 = pneg %p3624
      $region86: #{tpu_custom_call.1} parent=5 // pred_check_branch
        %3627 = sbr.rel (%p3625) target = $region88
      $region87: #{tpu_custom_call.1} parent=5 // pred_region
        %s3628 = ssub.s32 %s23, 2
        // Predicated region
        $region89: #{tpu_custom_call.1} parent=87 // pred_check
          %p3629 = pneg %p230
        $region90: #{tpu_custom_call.1} parent=87 // pred_check_branch
          %3631 = sbr.rel (%p3629) target = $region92
        $region91: #{tpu_custom_call.1} parent=87 // pred_region
          %s3632 = sand.u32 %s215, 1
          %s3633 = scalar_lea.sflag [#allocation4], %s3632
          %s3634 = sand.u32 %s215, 1
          %s3635 = smul.addr %s3634, 2
          %s3636 = scalar_lea.vmem [#allocation14], %s3635
          %3637 = dma.done %s3633, 32
        $region92: #{tpu_custom_call.1} parent=87 // pred_fallthru
          _
      $region88: #{tpu_custom_call.1} parent=5 // pred_fallthru
        _
    $region6: #{tpu_custom_call.1} parent=1 // loop_footer
      %s27 = sadd.s32 1, %s23
    $region7: #{tpu_custom_call.1} parent=1 // loop_footer_branch
      %22 = sbr.rel target = $region3
    $region8: #{tpu_custom_call.1} parent=1 // loop_exit
      _
    %3638 = vsyncpa [#allocation3], 1
    %s3639 = scalar_lea.sflag [#allocation3], 1
    %3640 = vsyncpa %s3639, 1
    %3641 = vsyncpa [#allocation6], 1
    %3642 = vsyncpa [#allocation9], 1
    %3643 = vsyncpa [#allocation12], 1
    %s3644 = scalar_lea.sflag [#allocation12], 1
    %3645 = vsyncpa %s3644, 1
    %3646 = vsyncpa [#allocation4], 1
    %s3647 = scalar_lea.sflag [#allocation4], 1
    %3648 = vsyncpa %s3647, 1

</llo_original>
